<compile_context>
chip_gen: v7x
topology: tpu7x:2x2x1
jax: 0.10.0
libtpu: 0.0.40
codegen_flags: <defaults>
</compile_context>

<pallas_src>
import functools
import math

import jax
import jax.numpy as jnp
from jax.experimental import pallas as pl
from jax.experimental.pallas import tpu as pltpu


# ----------------------------------------------------------------------------
# Fused kernel (one batch tile per grid step):
#   2-layer LSTM (torch gate order i,f,g,o; zero init state), wavefronted
#   + fused GMM head + masked partial sum of log-probs.
# ----------------------------------------------------------------------------
def _policy_kernel(*refs, num_layers, T, Bt, batch, H, K, A, KA_pad, min_std):
    f32 = jnp.float32
    bf16 = jnp.bfloat16
    KA = K * A
    Nt = T * Bt
    j = pl.program_id(0)

    # refs layout:
    #   inputs : x(Nt,D) bf16, a(Nt,A) f32,
    #            per layer (wih(Din,4H) bf16, whh(H,4H) bf16, b(1,4H) f32),
    #            w_head(H,2*KAp+Kp) bf16, b_head(1,2*KAp+Kp) f32,
    #            seg(KA,K) f32, rep(A,KA) f32
    #   outputs: out(8,128) f32 (per-tile partial sum, broadcast over the block)
    #   scratch: gx(Nt,4H) f32, hseq(Nt,H) f32
    x_ref, a_ref = refs[0], refs[1]
    layer_refs = [refs[2 + 3 * l: 5 + 3 * l] for l in range(num_layers)]
    base = 2 + 3 * num_layers
    whead_ref, bhead_ref, seg_ref, rep_ref = refs[base:base + 4]
    out_ref = refs[base + 4]
    gx_scr, hseq_scr = refs[base + 5], refs[base + 6]

    # ---- Layer-0 input projection hoisted out of the recurrence: one GEMM for all T.
    wih0_ref, whh0_ref, b0_ref = layer_refs[0]
    gx_scr[...] = (
        jnp.dot(x_ref[...], wih0_ref[...], preferred_element_type=f32) + b0_ref[...]
    )

    def lstm_cell(gates, c_prev):
        i_g = jax.nn.sigmoid(gates[:, 0 * H:1 * H])
        f_g = jax.nn.sigmoid(gates[:, 1 * H:2 * H])
        g_g = jnp.tanh(gates[:, 2 * H:3 * H])
        o_g = jax.nn.sigmoid(gates[:, 3 * H:4 * H])
        c_new = f_g * c_prev + i_g * g_g
        h_new = o_g * jnp.tanh(c_new)
        return h_new, c_new

    zero = jnp.zeros((Bt, H), f32)
    h = [zero] * num_layers
    c = [zero] * num_layers
    pending = [None] * num_layers      # pending[l] = layer l-1 output awaiting layer l

    # Wavefront over (layer, time): at wave step s, layer l processes t = s - l.
    # Layer l consumes the PREVIOUS wave step's layer-(l-1) output, so the matmuls
    # issued within one wave step are mutually independent and can overlap in the
    # MXU pipeline. h/c live in vregs (loop-carried values), not VMEM.
    # TODO(synk): for long horizons (T >~ 32) switch the steady-state portion of this
    # fully-unrolled wavefront to a partially-unrolled fori_loop to bound code size.
    for s in range(T + num_layers - 1):
        nxt = list(pending)
        for l in range(num_layers):
            t = s - l
            if t < 0 or t >= T:
                continue
            if l == 0:
                gates = gx_scr[pl.ds(t * Bt, Bt), :] + jnp.dot(
                    h[0].astype(bf16), whh0_ref[...], preferred_element_type=f32)
            else:
                wih_l, whh_l, b_l = layer_refs[l]
                gates = (
                    jnp.dot(pending[l].astype(bf16), wih_l[...],
                            preferred_element_type=f32)
                    + jnp.dot(h[l].astype(bf16), whh_l[...],
                              preferred_element_type=f32)
                    + b_l[...]
                )
            h_new, c_new = lstm_cell(gates, c[l])
            h[l], c[l] = h_new, c_new
            if l + 1 < num_layers:
                nxt[l + 1] = h_new
            else:
                hseq_scr[pl.ds(t * Bt, Bt), :] = h_new
        pending = nxt

    # ---------------- GMM head (fused, lane-padded per sub-head) -----------------
    hs = hseq_scr[...].astype(bf16)                                       # (Nt, H)
    heads = (jnp.dot(hs, whead_ref[...], preferred_element_type=f32)
             + bhead_ref[...])                                            # (Nt, 2*KAp+Kp)
    means = jnp.tanh(heads[:, 0:KA])
    s_raw = heads[:, KA_pad:KA_pad + KA]
    # stable softplus + min_std (std_activation="softplus", training path)
    scales = (jnp.maximum(s_raw, 0.0)
              + jnp.log(1.0 + jnp.exp(-jnp.abs(s_raw)))
              + min_std)                                                  # (Nt, KA)
    logits = heads[:, 2 * KA_pad:2 * KA_pad + K]                          # (Nt, K)

    # log_softmax over modes
    lmax = jnp.max(logits, axis=-1, keepdims=True)
    log_mix = logits - (lmax + jnp.log(
        jnp.sum(jnp.exp(logits - lmax), axis=-1, keepdims=True)))

    # Replicate the (Nt, A) actions across the K modes with an exact 0/1 matmul
    # (MXU side) instead of DMA'ing a K-times tiled copy from HBM.
    a_rep = jnp.dot(a_ref[...], rep_ref[...], preferred_element_type=f32)  # (Nt, KA)
    z = (a_rep - means) / scales
    elem = -0.5 * z * z - jnp.log(scales)                                  # (Nt, KA)
    comp = (jnp.dot(elem, seg_ref[...], preferred_element_type=f32)
            - 0.5 * A * math.log(2.0 * math.pi))                           # (Nt, K)
    mode_lp = comp + log_mix

    # logsumexp over modes
    mmax = jnp.max(mode_lp, axis=-1, keepdims=True)
    lp = mmax + jnp.log(jnp.sum(jnp.exp(mode_lp - mmax), axis=-1, keepdims=True))

    # Padding mask computed in-kernel: rows are (t, b_local) ordered,
    # b_local = row & (Bt-1) since Bt is a power of two.
    rid = jax.lax.broadcasted_iota(jnp.int32, (Nt, 1), 0)
    b_global = jnp.bitwise_and(rid, Bt - 1) + j * Bt
    mask = (b_global < batch).astype(f32)

    total = jnp.sum(lp * mask, axis=0, keepdims=True)                      # (1, 1)
    out_ref[...] = jnp.broadcast_to(total, (8, 128))


# ----------------------------------------------------------------------------
# Wrapper: PolicyModel.forward (training): obs/actions -> -mean(log_prob)
# ----------------------------------------------------------------------------
def policy_forward(obs, actions, params, *, obs_keys, num_modes, min_std):
    # ObservationEncoder for low-dim keys = flatten + concat on the feature axis
    # (obs normalization stats are None -> identity; process_obs is identity).
    feats = jnp.concatenate(
        [obs[k].reshape(obs[k].shape[0], obs[k].shape[1], -1) for k in obs_keys],
        axis=-1,
    ).astype(jnp.float32)                                        # (B, T, D)
    B, T, D = feats.shape
    A = actions.shape[-1]
    K = num_modes
    H = params["lstm"][0]["w_hh"].shape[1]
    num_layers = len(params["lstm"])
    KA = K * A

    # Batch tile: power of two, multiple of 8, capped at 64 rows per tile.
    Bt = 8
    while Bt < min(B, 64):
        Bt *= 2
    assert Bt & (Bt - 1) == 0
    G = -(-B // Bt)                 # number of batch tiles (grid size)
    Bp = G * Bt
    pad = Bp - B

    x = jnp.transpose(feats, (1, 0, 2))                          # (T, B, D) time-major
    a = jnp.transpose(actions.astype(jnp.float32), (1, 0, 2))    # (T, B, A)
    if pad:
        x = jnp.pad(x, ((0, 0), (0, pad), (0, 0)))
        a = jnp.pad(a, ((0, 0), (0, pad), (0, 0)))
    Nt = T * Bt
    # Per-tile contiguous (t, b_local)-ordered row blocks; bf16 only where the
    # rows feed a GEMM (obs features); actions stay f32 for the elementwise math.
    x_tiles = (x.reshape(T, G, Bt, D).transpose(1, 0, 2, 3)
               .reshape(G, Nt, D).astype(jnp.bfloat16))
    a_tiles = (a.reshape(T, G, Bt, A).transpose(1, 0, 2, 3)
               .reshape(G, Nt, A))

    # LSTM weights: (in, 4H) layout, bf16 operands, fused f32 bias.
    lstm_weights = []
    for layer in params["lstm"]:
        lstm_weights.append((
            jnp.transpose(layer["w_ih"]).astype(jnp.bfloat16),   # (D_in, 4H)
            jnp.transpose(layer["w_hh"]).astype(jnp.bfloat16),   # (H, 4H)
            (layer["b_ih"] + layer["b_hh"]).reshape(1, 4 * H).astype(jnp.float32),
        ))

    # Fused GMM head, lane-padded so each sub-head starts on a 128-lane boundary.
    def rup(v, m):
        return ((v + m - 1) // m) * m
    KAp = rup(KA, 128)
    Kp = rup(K, 128)

    def padw(w, width):
        return jnp.pad(w, ((0, 0), (0, width - w.shape[1])))

    def padb(b, width):
        return jnp.pad(b, ((0, width - b.shape[0]),))

    w_head = jnp.concatenate(
        [padw(params["w_mean"], KAp), padw(params["w_scale"], KAp),
         padw(params["w_logit"], Kp)], axis=1).astype(jnp.bfloat16)        # (H, 2KAp+Kp)
    b_head = jnp.concatenate(
        [padb(params["b_mean"], KAp), padb(params["b_scale"], KAp),
         padb(params["b_logit"], Kp)]).reshape(1, 2 * KAp + Kp).astype(jnp.float32)
    # Block-diagonal ones for the per-mode segmented sum, and the 0/1 action
    # replication matrix (both tiny, exact f32).
    seg = jnp.repeat(jnp.eye(K, dtype=jnp.float32), A, axis=0)             # (KA, K)
    rep = jnp.concatenate([jnp.eye(A, dtype=jnp.float32)] * K, axis=1)     # (A, KA)

    kernel = functools.partial(
        _policy_kernel, num_layers=num_layers, T=T, Bt=Bt, batch=B,
        H=H, K=K, A=A, KA_pad=KAp, min_std=float(min_std))

    in_specs = [
        pl.BlockSpec((None, Nt, D), lambda j: (j, 0, 0)),
        pl.BlockSpec((None, Nt, A), lambda j: (j, 0, 0)),
    ]
    inputs = [x_tiles, a_tiles]
    for (wih, whh, b) in lstm_weights:
        in_specs.extend([
            pl.BlockSpec(tuple(wih.shape), lambda j: (0, 0)),
            pl.BlockSpec(tuple(whh.shape), lambda j: (0, 0)),
            pl.BlockSpec(tuple(b.shape), lambda j: (0, 0)),
        ])
        inputs.extend([wih, whh, b])
    in_specs.extend([
        pl.BlockSpec(tuple(w_head.shape), lambda j: (0, 0)),
        pl.BlockSpec(tuple(b_head.shape), lambda j: (0, 0)),
        pl.BlockSpec(tuple(seg.shape), lambda j: (0, 0)),
        pl.BlockSpec(tuple(rep.shape), lambda j: (0, 0)),
    ])
    inputs.extend([w_head, b_head, seg, rep])

    out = pl.pallas_call(
        kernel,
        grid=(G,),
        in_specs=in_specs,
        out_specs=pl.BlockSpec((8, 128), lambda j: (j, 0)),
        out_shape=jax.ShapeDtypeStruct((G * 8, 128), jnp.float32),
        scratch_shapes=[
            pltpu.VMEM((Nt, 4 * H), jnp.float32),   # hoisted layer-0 gate pre-acts
            pltpu.VMEM((Nt, H), jnp.float32),       # last layer hidden sequence
        ],
        compiler_params=pltpu.CompilerParams(
            dimension_semantics=("parallel",),      # megacore: tiles split across TCs
            vmem_limit_bytes=48 * 1024 * 1024,
        ),
    )(*inputs)

    # Per-tile partial sums (each (8,128) block is the same scalar broadcast).
    partials = out.reshape(G, 8, 128)[:, 0, 0]
    return -jnp.sum(partials) / (T * B)


# ----------------------------------------------------------------------------
# Pure-JAX f32 reference (numerical sanity check)
# ----------------------------------------------------------------------------
def policy_forward_ref(obs, actions, params, *, obs_keys, num_modes, min_std):
    feats = jnp.concatenate(
        [obs[k].reshape(obs[k].shape[0], obs[k].shape[1], -1) for k in obs_keys],
        axis=-1,
    ).astype(jnp.float32)
    x = jnp.transpose(feats, (1, 0, 2))
    for layer in params["lstm"]:
        _, B, _ = x.shape
        H = layer["w_hh"].shape[1]
        wih = layer["w_ih"].T
        whh = layer["w_hh"].T
        b = layer["b_ih"] + layer["b_hh"]

        def step(carry, x_t, wih=wih, whh=whh, b=b, H=H):
            h, c = carry
            gates = x_t @ wih + h @ whh + b
            i = jax.nn.sigmoid(gates[:, :H])
            f = jax.nn.sigmoid(gates[:, H:2 * H])
            g = jnp.tanh(gates[:, 2 * H:3 * H])
            o = jax.nn.sigmoid(gates[:, 3 * H:])
            c = f * c + i * g
            h = o * jnp.tanh(c)
            return (h, c), h

        (_, _), hs = jax.lax.scan(step, (jnp.zeros((B, H)), jnp.zeros((B, H))), x)
        x = hs
    T, B, H = x.shape
    A = actions.shape[-1]
    K = num_modes
    hf = x.reshape(T * B, H)
    af = jnp.transpose(actions.astype(jnp.float32), (1, 0, 2)).reshape(T * B, A)
    means = jnp.tanh(hf @ params["w_mean"] + params["b_mean"]).reshape(-1, K, A)
    sraw = (hf @ params["w_scale"] + params["b_scale"]).reshape(-1, K, A)
    scales = jnp.maximum(sraw, 0.0) + jnp.log(1.0 + jnp.exp(-jnp.abs(sraw))) + min_std
    logits = hf @ params["w_logit"] + params["b_logit"]
    z = (af[:, None, :] - means) / scales
    comp = jnp.sum(-0.5 * z * z - jnp.log(scales) - 0.5 * math.log(2 * math.pi), axis=-1)
    lp = jax.scipy.special.logsumexp(comp + jax.nn.log_softmax(logits, axis=-1), axis=-1)
    return -jnp.mean(lp)


# ----------------------------------------------------------------------------
# Deterministic parameter init (shapes follow torch.nn.LSTM + Linear heads)
# ----------------------------------------------------------------------------
def init_params(key, obs_dim, hidden, num_layers, num_modes, ac_dim):
    bound = 1.0 / math.sqrt(hidden)
    lstm = []
    for layer_idx in range(num_layers):
        d_in = obs_dim if layer_idx == 0 else hidden
        key, k1, k2, k3, k4 = jax.random.split(key, 5)
        lstm.append({
            "w_ih": jax.random.uniform(k1, (4 * hidden, d_in), jnp.float32, -bound, bound),
            "w_hh": jax.random.uniform(k2, (4 * hidden, hidden), jnp.float32, -bound, bound),
            "b_ih": jax.random.uniform(k3, (4 * hidden,), jnp.float32, -bound, bound),
            "b_hh": jax.random.uniform(k4, (4 * hidden,), jnp.float32, -bound, bound),
        })
    KA = num_modes * ac_dim
    key, km, kbm, ks, kbs, kl, kbl = jax.random.split(key, 7)
    return {
        "lstm": lstm,
        "w_mean": jax.random.uniform(km, (hidden, KA), jnp.float32, -bound, bound),
        "b_mean": jax.random.uniform(kbm, (KA,), jnp.float32, -bound, bound),
        "w_scale": jax.random.uniform(ks, (hidden, KA), jnp.float32, -bound, bound),
        "b_scale": jax.random.uniform(kbs, (KA,), jnp.float32, -bound, bound),
        "w_logit": jax.random.uniform(kl, (hidden, num_modes), jnp.float32, -bound, bound),
        "b_logit": jax.random.uniform(kbl, (num_modes,), jnp.float32, -bound, bound),
    }


if __name__ == "__main__":
    # Small, module-consistent shapes: low-dim obs keys, seq len 8, batch 2.
    B, T = 2, 8
    obs_keys = ("robot0_eef_pos", "object")
    obs_key_shape = {"robot0_eef_pos": (3,), "object": (10,)}
    obs_dim = sum(int(v[0]) for v in obs_key_shape.values())      # 13
    ac_dim = 7
    hidden = 32          # algo_config_rnn.hidden_dim
    num_layers = 2       # algo_config_rnn.num_layers
    num_modes = 5        # algo_config_gmm.num_modes
    min_std = 1e-4       # algo_config_gmm.min_std

    key = jax.random.PRNGKey(0)
    k_o1, k_o2, k_act, k_par = jax.random.split(key, 4)
    obs = {
        "robot0_eef_pos": jax.random.normal(k_o1, (B, T, 3), jnp.float32),
        "object": jax.random.normal(k_o2, (B, T, 10), jnp.float32),
    }
    actions = jnp.tanh(jax.random.normal(k_act, (B, T, ac_dim), jnp.float32))
    params = init_params(k_par, obs_dim, hidden, num_layers, num_modes, ac_dim)

    loss = policy_forward(obs, actions, params,
                          obs_keys=obs_keys, num_modes=num_modes, min_std=min_std)
    loss = jax.block_until_ready(loss)

    loss_ref = policy_forward_ref(obs, actions, params,
                                  obs_keys=obs_keys, num_modes=num_modes, min_std=min_std)
    loss_ref = jax.block_until_ready(loss_ref)

    # bf16 MXU operands vs. the pure-f32 reference: allow ~3% relative slack.
    assert abs(float(loss) - float(loss_ref)) < 3e-2 * max(1.0, abs(float(loss_ref))), \
        (float(loss), float(loss_ref))
    print("KERNEL_OK")
</pallas_src>

<mosaic_0001>
module attributes {stable_mosaic.version = 11 : i64} {
  func.func @_policy_kernel(%arg0: i32, %arg1: memref<1x64x13xbf16, #tpu.memory_space<vmem>>, %arg2: memref<1x64x7xf32, #tpu.memory_space<vmem>>, %arg3: memref<13x128xbf16, #tpu.memory_space<vmem>>, %arg4: memref<32x128xbf16, #tpu.memory_space<vmem>>, %arg5: memref<1x128xf32, #tpu.memory_space<vmem>>, %arg6: memref<32x128xbf16, #tpu.memory_space<vmem>>, %arg7: memref<32x128xbf16, #tpu.memory_space<vmem>>, %arg8: memref<1x128xf32, #tpu.memory_space<vmem>>, %arg9: memref<32x384xbf16, #tpu.memory_space<vmem>>, %arg10: memref<1x384xf32, #tpu.memory_space<vmem>>, %arg11: memref<35x5xf32, #tpu.memory_space<vmem>>, %arg12: memref<7x35xf32, #tpu.memory_space<vmem>>, %arg13: memref<8x128xf32, #tpu.memory_space<vmem>>, %arg14: memref<64x128xf32, #tpu.memory_space<vmem>>, %arg15: memref<64x32xf32, #tpu.memory_space<vmem>>) attributes {dimension_semantics = [#tpu.dimension_semantics<parallel>], iteration_bounds = array<i64: 1>, scalar_prefetch = 0 : i64, scratch_operands = 2 : i64, tpu.core_type = #tpu.core_type<tc>, window_params = [{transform_indices = @transform_0, window_bounds = array<i64: 1, 64, 13>}, {transform_indices = @transform_1, window_bounds = array<i64: 1, 64, 7>}, {pipeline_mode = #tpu.pipeline_mode<synchronous>, transform_indices = @transform_2, window_bounds = array<i64: 13, 128>}, {pipeline_mode = #tpu.pipeline_mode<synchronous>, transform_indices = @transform_3, window_bounds = array<i64: 32, 128>}, {pipeline_mode = #tpu.pipeline_mode<synchronous>, transform_indices = @transform_4, window_bounds = array<i64: 1, 128>}, {pipeline_mode = #tpu.pipeline_mode<synchronous>, transform_indices = @transform_5, window_bounds = array<i64: 32, 128>}, {pipeline_mode = #tpu.pipeline_mode<synchronous>, transform_indices = @transform_6, window_bounds = array<i64: 32, 128>}, {pipeline_mode = #tpu.pipeline_mode<synchronous>, transform_indices = @transform_7, window_bounds = array<i64: 1, 128>}, {pipeline_mode = #tpu.pipeline_mode<synchronous>, transform_indices = @transform_8, window_bounds = array<i64: 32, 384>}, {pipeline_mode = #tpu.pipeline_mode<synchronous>, transform_indices = @transform_9, window_bounds = array<i64: 1, 384>}, {pipeline_mode = #tpu.pipeline_mode<synchronous>, transform_indices = @transform_10, window_bounds = array<i64: 35, 5>}, {pipeline_mode = #tpu.pipeline_mode<synchronous>, transform_indices = @transform_11, window_bounds = array<i64: 7, 35>}, {transform_indices = @transform_12, window_bounds = array<i64: 8, 128>}]} {
    %c0 = arith.constant 0 : index
    %c0_0 = arith.constant 0 : index
    %c0_1 = arith.constant 0 : index
    %0 = vector.load %arg1[%c0, %c0_0, %c0_1] : memref<1x64x13xbf16, #tpu.memory_space<vmem>>, vector<1x64x13xbf16>
    %1 = vector.shape_cast %0 : vector<1x64x13xbf16> to vector<64x13xbf16>
    %c0_2 = arith.constant 0 : index
    %c0_3 = arith.constant 0 : index
    %2 = vector.load %arg3[%c0_2, %c0_3] : memref<13x128xbf16, #tpu.memory_space<vmem>>, vector<13x128xbf16>
    %cst = arith.constant dense<0.000000e+00> : vector<64x128xf32>
    %3 = tpu.matmul %1, %2, %cst {dimension_numbers = #tpu.dot_dimension_numbers<[1], [0], [0], [1], [0, 0, 1, 1], [], []>} : vector<64x13xbf16>, vector<13x128xbf16>, vector<64x128xf32> -> vector<64x128xf32>
    %c0_4 = arith.constant 0 : index
    %c0_5 = arith.constant 0 : index
    %4 = vector.load %arg5[%c0_4, %c0_5] : memref<1x128xf32, #tpu.memory_space<vmem>>, vector<1x128xf32>
    %5 = vector.broadcast %4 : vector<1x128xf32> to vector<64x128xf32>
    %6 = arith.addf %3, %5 : vector<64x128xf32>
    %c0_6 = arith.constant 0 : index
    %c0_7 = arith.constant 0 : index
    %7 = vector.load %arg14[%c0_6, %c0_7] : memref<64x128xf32, #tpu.memory_space<vmem>>, vector<64x128xf32>
    tpu.vector_store %arg14[%c0_6, %c0_7], %6 {strides = array<i32>} : memref<64x128xf32, #tpu.memory_space<vmem>>, vector<64x128xf32>,
    %cst_8 = arith.constant 0.000000e+00 : f32
    %8 = vector.broadcast %cst_8 : f32 to vector<8x32xf32>
    %c0_9 = arith.constant 0 : index
    %c0_10 = arith.constant 0 : index
    %9 = vector.load %arg14[%c0_9, %c0_10] : memref<64x128xf32, #tpu.memory_space<vmem>>, vector<8x128xf32>
    %10 = arith.truncf %8 : vector<8x32xf32> to vector<8x32xbf16>
    %c0_11 = arith.constant 0 : index
    %c0_12 = arith.constant 0 : index
    %11 = vector.load %arg4[%c0_11, %c0_12] : memref<32x128xbf16, #tpu.memory_space<vmem>>, vector<32x128xbf16>
    %cst_13 = arith.constant dense<0.000000e+00> : vector<8x128xf32>
    %12 = tpu.matmul %10, %11, %cst_13 {dimension_numbers = #tpu.dot_dimension_numbers<[1], [0], [0], [1], [0, 0, 1, 1], [], []>} : vector<8x32xbf16>, vector<32x128xbf16>, vector<8x128xf32> -> vector<8x128xf32>
    %13 = arith.addf %9, %12 : vector<8x128xf32>
    %14 = vector.extract_strided_slice %13 {offsets = [0, 0], sizes = [8, 32], strides = [1, 1]} : vector<8x128xf32> to vector<8x32xf32>
    %15 = arith.negf %14 : vector<8x32xf32>
    %16 = math.exp %15 : vector<8x32xf32>
    %cst_14 = arith.constant 1.000000e+00 : f32
    %17 = vector.broadcast %cst_14 : f32 to vector<8x32xf32>
    %18 = arith.addf %17, %16 : vector<8x32xf32>
    %19 = arith.divf %17, %18 : vector<8x32xf32>
    %20 = vector.extract_strided_slice %13 {offsets = [0, 32], sizes = [8, 32], strides = [1, 1]} : vector<8x128xf32> to vector<8x32xf32>
    %21 = arith.negf %20 : vector<8x32xf32>
    %22 = math.exp %21 : vector<8x32xf32>
    %cst_15 = arith.constant 1.000000e+00 : f32
    %23 = vector.broadcast %cst_15 : f32 to vector<8x32xf32>
    %24 = arith.addf %23, %22 : vector<8x32xf32>
    %25 = arith.divf %23, %24 : vector<8x32xf32>
    %26 = vector.extract_strided_slice %13 {offsets = [0, 64], sizes = [8, 32], strides = [1, 1]} : vector<8x128xf32> to vector<8x32xf32>
    %27 = math.tanh %26 : vector<8x32xf32>
    %28 = vector.extract_strided_slice %13 {offsets = [0, 96], sizes = [8, 32], strides = [1, 1]} : vector<8x128xf32> to vector<8x32xf32>
    %29 = arith.negf %28 : vector<8x32xf32>
    %30 = math.exp %29 : vector<8x32xf32>
    %cst_16 = arith.constant 1.000000e+00 : f32
    %31 = vector.broadcast %cst_16 : f32 to vector<8x32xf32>
    %32 = arith.addf %31, %30 : vector<8x32xf32>
    %33 = arith.divf %31, %32 : vector<8x32xf32>
    %34 = arith.mulf %25, %8 : vector<8x32xf32>
    %35 = arith.mulf %19, %27 : vector<8x32xf32>
    %36 = arith.addf %34, %35 : vector<8x32xf32>
    %37 = math.tanh %36 : vector<8x32xf32>
    %38 = arith.mulf %33, %37 : vector<8x32xf32>
    %c8 = arith.constant 8 : index
    %c0_17 = arith.constant 0 : index
    %39 = vector.load %arg14[%c8, %c0_17] : memref<64x128xf32, #tpu.memory_space<vmem>>, vector<8x128xf32>
    %40 = arith.truncf %38 : vector<8x32xf32> to vector<8x32xbf16>
    %c0_18 = arith.constant 0 : index
    %c0_19 = arith.constant 0 : index
    %41 = vector.load %arg4[%c0_18, %c0_19] : memref<32x128xbf16, #tpu.memory_space<vmem>>, vector<32x128xbf16>
    %cst_20 = arith.constant dense<0.000000e+00> : vector<8x128xf32>
    %42 = tpu.matmul %40, %41, %cst_20 {dimension_numbers = #tpu.dot_dimension_numbers<[1], [0], [0], [1], [0, 0, 1, 1], [], []>} : vector<8x32xbf16>, vector<32x128xbf16>, vector<8x128xf32> -> vector<8x128xf32>
    %43 = arith.addf %39, %42 : vector<8x128xf32>
    %44 = vector.extract_strided_slice %43 {offsets = [0, 0], sizes = [8, 32], strides = [1, 1]} : vector<8x128xf32> to vector<8x32xf32>
    %45 = arith.negf %44 : vector<8x32xf32>
    %46 = math.exp %45 : vector<8x32xf32>
    %cst_21 = arith.constant 1.000000e+00 : f32
    %47 = vector.broadcast %cst_21 : f32 to vector<8x32xf32>
    %48 = arith.addf %47, %46 : vector<8x32xf32>
    %49 = arith.divf %47, %48 : vector<8x32xf32>
    %50 = vector.extract_strided_slice %43 {offsets = [0, 32], sizes = [8, 32], strides = [1, 1]} : vector<8x128xf32> to vector<8x32xf32>
    %51 = arith.negf %50 : vector<8x32xf32>
    %52 = math.exp %51 : vector<8x32xf32>
    %cst_22 = arith.constant 1.000000e+00 : f32
    %53 = vector.broadcast %cst_22 : f32 to vector<8x32xf32>
    %54 = arith.addf %53, %52 : vector<8x32xf32>
    %55 = arith.divf %53, %54 : vector<8x32xf32>
    %56 = vector.extract_strided_slice %43 {offsets = [0, 64], sizes = [8, 32], strides = [1, 1]} : vector<8x128xf32> to vector<8x32xf32>
    %57 = math.tanh %56 : vector<8x32xf32>
    %58 = vector.extract_strided_slice %43 {offsets = [0, 96], sizes = [8, 32], strides = [1, 1]} : vector<8x128xf32> to vector<8x32xf32>
    %59 = arith.negf %58 : vector<8x32xf32>
    %60 = math.exp %59 : vector<8x32xf32>
    %cst_23 = arith.constant 1.000000e+00 : f32
    %61 = vector.broadcast %cst_23 : f32 to vector<8x32xf32>
    %62 = arith.addf %61, %60 : vector<8x32xf32>
    %63 = arith.divf %61, %62 : vector<8x32xf32>
    %64 = arith.mulf %55, %36 : vector<8x32xf32>
    %65 = arith.mulf %49, %57 : vector<8x32xf32>
    %66 = arith.addf %64, %65 : vector<8x32xf32>
    %67 = math.tanh %66 : vector<8x32xf32>
    %68 = arith.mulf %63, %67 : vector<8x32xf32>
    %69 = arith.truncf %38 : vector<8x32xf32> to vector<8x32xbf16>
    %c0_24 = arith.constant 0 : index
    %c0_25 = arith.constant 0 : index
    %70 = vector.load %arg6[%c0_24, %c0_25] : memref<32x128xbf16, #tpu.memory_space<vmem>>, vector<32x128xbf16>
    %cst_26 = arith.constant dense<0.000000e+00> : vector<8x128xf32>
    %71 = tpu.matmul %69, %70, %cst_26 {dimension_numbers = #tpu.dot_dimension_numbers<[1], [0], [0], [1], [0, 0, 1, 1], [], []>} : vector<8x32xbf16>, vector<32x128xbf16>, vector<8x128xf32> -> vector<8x128xf32>
    %72 = arith.truncf %8 : vector<8x32xf32> to vector<8x32xbf16>
    %c0_27 = arith.constant 0 : index
    %c0_28 = arith.constant 0 : index
    %73 = vector.load %arg7[%c0_27, %c0_28] : memref<32x128xbf16, #tpu.memory_space<vmem>>, vector<32x128xbf16>
    %cst_29 = arith.constant dense<0.000000e+00> : vector<8x128xf32>
    %74 = tpu.matmul %72, %73, %cst_29 {dimension_numbers = #tpu.dot_dimension_numbers<[1], [0], [0], [1], [0, 0, 1, 1], [], []>} : vector<8x32xbf16>, vector<32x128xbf16>, vector<8x128xf32> -> vector<8x128xf32>
    %75 = arith.addf %71, %74 : vector<8x128xf32>
    %c0_30 = arith.constant 0 : index
    %c0_31 = arith.constant 0 : index
    %76 = vector.load %arg8[%c0_30, %c0_31] : memref<1x128xf32, #tpu.memory_space<vmem>>, vector<1x128xf32>
    %77 = vector.broadcast %76 : vector<1x128xf32> to vector<8x128xf32>
    %78 = arith.addf %75, %77 : vector<8x128xf32>
    %79 = vector.extract_strided_slice %78 {offsets = [0, 0], sizes = [8, 32], strides = [1, 1]} : vector<8x128xf32> to vector<8x32xf32>
    %80 = arith.negf %79 : vector<8x32xf32>
    %81 = math.exp %80 : vector<8x32xf32>
    %cst_32 = arith.constant 1.000000e+00 : f32
    %82 = vector.broadcast %cst_32 : f32 to vector<8x32xf32>
    %83 = arith.addf %82, %81 : vector<8x32xf32>
    %84 = arith.divf %82, %83 : vector<8x32xf32>
    %85 = vector.extract_strided_slice %78 {offsets = [0, 32], sizes = [8, 32], strides = [1, 1]} : vector<8x128xf32> to vector<8x32xf32>
    %86 = arith.negf %85 : vector<8x32xf32>
    %87 = math.exp %86 : vector<8x32xf32>
    %cst_33 = arith.constant 1.000000e+00 : f32
    %88 = vector.broadcast %cst_33 : f32 to vector<8x32xf32>
    %89 = arith.addf %88, %87 : vector<8x32xf32>
    %90 = arith.divf %88, %89 : vector<8x32xf32>
    %91 = vector.extract_strided_slice %78 {offsets = [0, 64], sizes = [8, 32], strides = [1, 1]} : vector<8x128xf32> to vector<8x32xf32>
    %92 = math.tanh %91 : vector<8x32xf32>
    %93 = vector.extract_strided_slice %78 {offsets = [0, 96], sizes = [8, 32], strides = [1, 1]} : vector<8x128xf32> to vector<8x32xf32>
    %94 = arith.negf %93 : vector<8x32xf32>
    %95 = math.exp %94 : vector<8x32xf32>
    %cst_34 = arith.constant 1.000000e+00 : f32
    %96 = vector.broadcast %cst_34 : f32 to vector<8x32xf32>
    %97 = arith.addf %96, %95 : vector<8x32xf32>
    %98 = arith.divf %96, %97 : vector<8x32xf32>
    %99 = arith.mulf %90, %8 : vector<8x32xf32>
    %100 = arith.mulf %84, %92 : vector<8x32xf32>
    %101 = arith.addf %99, %100 : vector<8x32xf32>
    %102 = math.tanh %101 : vector<8x32xf32>
    %103 = arith.mulf %98, %102 : vector<8x32xf32>
    %c0_35 = arith.constant 0 : index
    %c0_36 = arith.constant 0 : index
    %104 = vector.load %arg15[%c0_35, %c0_36] : memref<64x32xf32, #tpu.memory_space<vmem>>, vector<8x32xf32>
    tpu.vector_store %arg15[%c0_35, %c0_36], %103 {strides = array<i32>} : memref<64x32xf32, #tpu.memory_space<vmem>>, vector<8x32xf32>,
    %c16 = arith.constant 16 : index
    %c0_37 = arith.constant 0 : index
    %105 = vector.load %arg14[%c16, %c0_37] : memref<64x128xf32, #tpu.memory_space<vmem>>, vector<8x128xf32>
    %106 = arith.truncf %68 : vector<8x32xf32> to vector<8x32xbf16>
    %c0_38 = arith.constant 0 : index
    %c0_39 = arith.constant 0 : index
    %107 = vector.load %arg4[%c0_38, %c0_39] : memref<32x128xbf16, #tpu.memory_space<vmem>>, vector<32x128xbf16>
    %cst_40 = arith.constant dense<0.000000e+00> : vector<8x128xf32>
    %108 = tpu.matmul %106, %107, %cst_40 {dimension_numbers = #tpu.dot_dimension_numbers<[1], [0], [0], [1], [0, 0, 1, 1], [], []>} : vector<8x32xbf16>, vector<32x128xbf16>, vector<8x128xf32> -> vector<8x128xf32>
    %109 = arith.addf %105, %108 : vector<8x128xf32>
    %110 = vector.extract_strided_slice %109 {offsets = [0, 0], sizes = [8, 32], strides = [1, 1]} : vector<8x128xf32> to vector<8x32xf32>
    %111 = arith.negf %110 : vector<8x32xf32>
    %112 = math.exp %111 : vector<8x32xf32>
    %cst_41 = arith.constant 1.000000e+00 : f32
    %113 = vector.broadcast %cst_41 : f32 to vector<8x32xf32>
    %114 = arith.addf %113, %112 : vector<8x32xf32>
    %115 = arith.divf %113, %114 : vector<8x32xf32>
    %116 = vector.extract_strided_slice %109 {offsets = [0, 32], sizes = [8, 32], strides = [1, 1]} : vector<8x128xf32> to vector<8x32xf32>
    %117 = arith.negf %116 : vector<8x32xf32>
    %118 = math.exp %117 : vector<8x32xf32>
    %cst_42 = arith.constant 1.000000e+00 : f32
    %119 = vector.broadcast %cst_42 : f32 to vector<8x32xf32>
    %120 = arith.addf %119, %118 : vector<8x32xf32>
    %121 = arith.divf %119, %120 : vector<8x32xf32>
    %122 = vector.extract_strided_slice %109 {offsets = [0, 64], sizes = [8, 32], strides = [1, 1]} : vector<8x128xf32> to vector<8x32xf32>
    %123 = math.tanh %122 : vector<8x32xf32>
    %124 = vector.extract_strided_slice %109 {offsets = [0, 96], sizes = [8, 32], strides = [1, 1]} : vector<8x128xf32> to vector<8x32xf32>
    %125 = arith.negf %124 : vector<8x32xf32>
    %126 = math.exp %125 : vector<8x32xf32>
    %cst_43 = arith.constant 1.000000e+00 : f32
    %127 = vector.broadcast %cst_43 : f32 to vector<8x32xf32>
    %128 = arith.addf %127, %126 : vector<8x32xf32>
    %129 = arith.divf %127, %128 : vector<8x32xf32>
    %130 = arith.mulf %121, %66 : vector<8x32xf32>
    %131 = arith.mulf %115, %123 : vector<8x32xf32>
    %132 = arith.addf %130, %131 : vector<8x32xf32>
    %133 = math.tanh %132 : vector<8x32xf32>
    %134 = arith.mulf %129, %133 : vector<8x32xf32>
    %135 = arith.truncf %68 : vector<8x32xf32> to vector<8x32xbf16>
    %c0_44 = arith.constant 0 : index
    %c0_45 = arith.constant 0 : index
    %136 = vector.load %arg6[%c0_44, %c0_45] : memref<32x128xbf16, #tpu.memory_space<vmem>>, vector<32x128xbf16>
    %cst_46 = arith.constant dense<0.000000e+00> : vector<8x128xf32>
    %137 = tpu.matmul %135, %136, %cst_46 {dimension_numbers = #tpu.dot_dimension_numbers<[1], [0], [0], [1], [0, 0, 1, 1], [], []>} : vector<8x32xbf16>, vector<32x128xbf16>, vector<8x128xf32> -> vector<8x128xf32>
    %138 = arith.truncf %103 : vector<8x32xf32> to vector<8x32xbf16>
    %c0_47 = arith.constant 0 : index
    %c0_48 = arith.constant 0 : index
    %139 = vector.load %arg7[%c0_47, %c0_48] : memref<32x128xbf16, #tpu.memory_space<vmem>>, vector<32x128xbf16>
    %cst_49 = arith.constant dense<0.000000e+00> : vector<8x128xf32>
    %140 = tpu.matmul %138, %139, %cst_49 {dimension_numbers = #tpu.dot_dimension_numbers<[1], [0], [0], [1], [0, 0, 1, 1], [], []>} : vector<8x32xbf16>, vector<32x128xbf16>, vector<8x128xf32> -> vector<8x128xf32>
    %141 = arith.addf %137, %140 : vector<8x128xf32>
    %c0_50 = arith.constant 0 : index
    %c0_51 = arith.constant 0 : index
    %142 = vector.load %arg8[%c0_50, %c0_51] : memref<1x128xf32, #tpu.memory_space<vmem>>, vector<1x128xf32>
    %143 = vector.broadcast %142 : vector<1x128xf32> to vector<8x128xf32>
    %144 = arith.addf %141, %143 : vector<8x128xf32>
    %145 = vector.extract_strided_slice %144 {offsets = [0, 0], sizes = [8, 32], strides = [1, 1]} : vector<8x128xf32> to vector<8x32xf32>
    %146 = arith.negf %145 : vector<8x32xf32>
    %147 = math.exp %146 : vector<8x32xf32>
    %cst_52 = arith.constant 1.000000e+00 : f32
    %148 = vector.broadcast %cst_52 : f32 to vector<8x32xf32>
    %149 = arith.addf %148, %147 : vector<8x32xf32>
    %150 = arith.divf %148, %149 : vector<8x32xf32>
    %151 = vector.extract_strided_slice %144 {offsets = [0, 32], sizes = [8, 32], strides = [1, 1]} : vector<8x128xf32> to vector<8x32xf32>
    %152 = arith.negf %151 : vector<8x32xf32>
    %153 = math.exp %152 : vector<8x32xf32>
    %cst_53 = arith.constant 1.000000e+00 : f32
    %154 = vector.broadcast %cst_53 : f32 to vector<8x32xf32>
    %155 = arith.addf %154, %153 : vector<8x32xf32>
    %156 = arith.divf %154, %155 : vector<8x32xf32>
    %157 = vector.extract_strided_slice %144 {offsets = [0, 64], sizes = [8, 32], strides = [1, 1]} : vector<8x128xf32> to vector<8x32xf32>
    %158 = math.tanh %157 : vector<8x32xf32>
    %159 = vector.extract_strided_slice %144 {offsets = [0, 96], sizes = [8, 32], strides = [1, 1]} : vector<8x128xf32> to vector<8x32xf32>
    %160 = arith.negf %159 : vector<8x32xf32>
    %161 = math.exp %160 : vector<8x32xf32>
    %cst_54 = arith.constant 1.000000e+00 : f32
    %162 = vector.broadcast %cst_54 : f32 to vector<8x32xf32>
    %163 = arith.addf %162, %161 : vector<8x32xf32>
    %164 = arith.divf %162, %163 : vector<8x32xf32>
    %165 = arith.mulf %156, %101 : vector<8x32xf32>
    %166 = arith.mulf %150, %158 : vector<8x32xf32>
    %167 = arith.addf %165, %166 : vector<8x32xf32>
    %168 = math.tanh %167 : vector<8x32xf32>
    %169 = arith.mulf %164, %168 : vector<8x32xf32>
    %c8_55 = arith.constant 8 : index
    %c0_56 = arith.constant 0 : index
    %170 = vector.load %arg15[%c8_55, %c0_56] : memref<64x32xf32, #tpu.memory_space<vmem>>, vector<8x32xf32>
    tpu.vector_store %arg15[%c8_55, %c0_56], %169 {strides = array<i32>} : memref<64x32xf32, #tpu.memory_space<vmem>>, vector<8x32xf32>,
    %c24 = arith.constant 24 : index
    %c0_57 = arith.constant 0 : index
    %171 = vector.load %arg14[%c24, %c0_57] : memref<64x128xf32, #tpu.memory_space<vmem>>, vector<8x128xf32>
    %172 = arith.truncf %134 : vector<8x32xf32> to vector<8x32xbf16>
    %c0_58 = arith.constant 0 : index
    %c0_59 = arith.constant 0 : index
    %173 = vector.load %arg4[%c0_58, %c0_59] : memref<32x128xbf16, #tpu.memory_space<vmem>>, vector<32x128xbf16>
    %cst_60 = arith.constant dense<0.000000e+00> : vector<8x128xf32>
    %174 = tpu.matmul %172, %173, %cst_60 {dimension_numbers = #tpu.dot_dimension_numbers<[1], [0], [0], [1], [0, 0, 1, 1], [], []>} : vector<8x32xbf16>, vector<32x128xbf16>, vector<8x128xf32> -> vector<8x128xf32>
    %175 = arith.addf %171, %174 : vector<8x128xf32>
    %176 = vector.extract_strided_slice %175 {offsets = [0, 0], sizes = [8, 32], strides = [1, 1]} : vector<8x128xf32> to vector<8x32xf32>
    %177 = arith.negf %176 : vector<8x32xf32>
    %178 = math.exp %177 : vector<8x32xf32>
    %cst_61 = arith.constant 1.000000e+00 : f32
    %179 = vector.broadcast %cst_61 : f32 to vector<8x32xf32>
    %180 = arith.addf %179, %178 : vector<8x32xf32>
    %181 = arith.divf %179, %180 : vector<8x32xf32>
    %182 = vector.extract_strided_slice %175 {offsets = [0, 32], sizes = [8, 32], strides = [1, 1]} : vector<8x128xf32> to vector<8x32xf32>
    %183 = arith.negf %182 : vector<8x32xf32>
    %184 = math.exp %183 : vector<8x32xf32>
    %cst_62 = arith.constant 1.000000e+00 : f32
    %185 = vector.broadcast %cst_62 : f32 to vector<8x32xf32>
    %186 = arith.addf %185, %184 : vector<8x32xf32>
    %187 = arith.divf %185, %186 : vector<8x32xf32>
    %188 = vector.extract_strided_slice %175 {offsets = [0, 64], sizes = [8, 32], strides = [1, 1]} : vector<8x128xf32> to vector<8x32xf32>
    %189 = math.tanh %188 : vector<8x32xf32>
    %190 = vector.extract_strided_slice %175 {offsets = [0, 96], sizes = [8, 32], strides = [1, 1]} : vector<8x128xf32> to vector<8x32xf32>
    %191 = arith.negf %190 : vector<8x32xf32>
    %192 = math.exp %191 : vector<8x32xf32>
    %cst_63 = arith.constant 1.000000e+00 : f32
    %193 = vector.broadcast %cst_63 : f32 to vector<8x32xf32>
    %194 = arith.addf %193, %192 : vector<8x32xf32>
    %195 = arith.divf %193, %194 : vector<8x32xf32>
    %196 = arith.mulf %187, %132 : vector<8x32xf32>
    %197 = arith.mulf %181, %189 : vector<8x32xf32>
    %198 = arith.addf %196, %197 : vector<8x32xf32>
    %199 = math.tanh %198 : vector<8x32xf32>
    %200 = arith.mulf %195, %199 : vector<8x32xf32>
    %201 = arith.truncf %134 : vector<8x32xf32> to vector<8x32xbf16>
    %c0_64 = arith.constant 0 : index
    %c0_65 = arith.constant 0 : index
    %202 = vector.load %arg6[%c0_64, %c0_65] : memref<32x128xbf16, #tpu.memory_space<vmem>>, vector<32x128xbf16>
    %cst_66 = arith.constant dense<0.000000e+00> : vector<8x128xf32>
    %203 = tpu.matmul %201, %202, %cst_66 {dimension_numbers = #tpu.dot_dimension_numbers<[1], [0], [0], [1], [0, 0, 1, 1], [], []>} : vector<8x32xbf16>, vector<32x128xbf16>, vector<8x128xf32> -> vector<8x128xf32>
    %204 = arith.truncf %169 : vector<8x32xf32> to vector<8x32xbf16>
    %c0_67 = arith.constant 0 : index
    %c0_68 = arith.constant 0 : index
    %205 = vector.load %arg7[%c0_67, %c0_68] : memref<32x128xbf16, #tpu.memory_space<vmem>>, vector<32x128xbf16>
    %cst_69 = arith.constant dense<0.000000e+00> : vector<8x128xf32>
    %206 = tpu.matmul %204, %205, %cst_69 {dimension_numbers = #tpu.dot_dimension_numbers<[1], [0], [0], [1], [0, 0, 1, 1], [], []>} : vector<8x32xbf16>, vector<32x128xbf16>, vector<8x128xf32> -> vector<8x128xf32>
    %207 = arith.addf %203, %206 : vector<8x128xf32>
    %c0_70 = arith.constant 0 : index
    %c0_71 = arith.constant 0 : index
    %208 = vector.load %arg8[%c0_70, %c0_71] : memref<1x128xf32, #tpu.memory_space<vmem>>, vector<1x128xf32>
    %209 = vector.broadcast %208 : vector<1x128xf32> to vector<8x128xf32>
    %210 = arith.addf %207, %209 : vector<8x128xf32>
    %211 = vector.extract_strided_slice %210 {offsets = [0, 0], sizes = [8, 32], strides = [1, 1]} : vector<8x128xf32> to vector<8x32xf32>
    %212 = arith.negf %211 : vector<8x32xf32>
    %213 = math.exp %212 : vector<8x32xf32>
    %cst_72 = arith.constant 1.000000e+00 : f32
    %214 = vector.broadcast %cst_72 : f32 to vector<8x32xf32>
    %215 = arith.addf %214, %213 : vector<8x32xf32>
    %216 = arith.divf %214, %215 : vector<8x32xf32>
    %217 = vector.extract_strided_slice %210 {offsets = [0, 32], sizes = [8, 32], strides = [1, 1]} : vector<8x128xf32> to vector<8x32xf32>
    %218 = arith.negf %217 : vector<8x32xf32>
    %219 = math.exp %218 : vector<8x32xf32>
    %cst_73 = arith.constant 1.000000e+00 : f32
    %220 = vector.broadcast %cst_73 : f32 to vector<8x32xf32>
    %221 = arith.addf %220, %219 : vector<8x32xf32>
    %222 = arith.divf %220, %221 : vector<8x32xf32>
    %223 = vector.extract_strided_slice %210 {offsets = [0, 64], sizes = [8, 32], strides = [1, 1]} : vector<8x128xf32> to vector<8x32xf32>
    %224 = math.tanh %223 : vector<8x32xf32>
    %225 = vector.extract_strided_slice %210 {offsets = [0, 96], sizes = [8, 32], strides = [1, 1]} : vector<8x128xf32> to vector<8x32xf32>
    %226 = arith.negf %225 : vector<8x32xf32>
    %227 = math.exp %226 : vector<8x32xf32>
    %cst_74 = arith.constant 1.000000e+00 : f32
    %228 = vector.broadcast %cst_74 : f32 to vector<8x32xf32>
    %229 = arith.addf %228, %227 : vector<8x32xf32>
    %230 = arith.divf %228, %229 : vector<8x32xf32>
    %231 = arith.mulf %222, %167 : vector<8x32xf32>
    %232 = arith.mulf %216, %224 : vector<8x32xf32>
    %233 = arith.addf %231, %232 : vector<8x32xf32>
    %234 = math.tanh %233 : vector<8x32xf32>
    %235 = arith.mulf %230, %234 : vector<8x32xf32>
    %c16_75 = arith.constant 16 : index
    %c0_76 = arith.constant 0 : index
    %236 = vector.load %arg15[%c16_75, %c0_76] : memref<64x32xf32, #tpu.memory_space<vmem>>, vector<8x32xf32>
    tpu.vector_store %arg15[%c16_75, %c0_76], %235 {strides = array<i32>} : memref<64x32xf32, #tpu.memory_space<vmem>>, vector<8x32xf32>,
    %c32 = arith.constant 32 : index
    %c0_77 = arith.constant 0 : index
    %237 = vector.load %arg14[%c32, %c0_77] : memref<64x128xf32, #tpu.memory_space<vmem>>, vector<8x128xf32>
    %238 = arith.truncf %200 : vector<8x32xf32> to vector<8x32xbf16>
    %c0_78 = arith.constant 0 : index
    %c0_79 = arith.constant 0 : index
    %239 = vector.load %arg4[%c0_78, %c0_79] : memref<32x128xbf16, #tpu.memory_space<vmem>>, vector<32x128xbf16>
    %cst_80 = arith.constant dense<0.000000e+00> : vector<8x128xf32>
    %240 = tpu.matmul %238, %239, %cst_80 {dimension_numbers = #tpu.dot_dimension_numbers<[1], [0], [0], [1], [0, 0, 1, 1], [], []>} : vector<8x32xbf16>, vector<32x128xbf16>, vector<8x128xf32> -> vector<8x128xf32>
    %241 = arith.addf %237, %240 : vector<8x128xf32>
    %242 = vector.extract_strided_slice %241 {offsets = [0, 0], sizes = [8, 32], strides = [1, 1]} : vector<8x128xf32> to vector<8x32xf32>
    %243 = arith.negf %242 : vector<8x32xf32>
    %244 = math.exp %243 : vector<8x32xf32>
    %cst_81 = arith.constant 1.000000e+00 : f32
    %245 = vector.broadcast %cst_81 : f32 to vector<8x32xf32>
    %246 = arith.addf %245, %244 : vector<8x32xf32>
    %247 = arith.divf %245, %246 : vector<8x32xf32>
    %248 = vector.extract_strided_slice %241 {offsets = [0, 32], sizes = [8, 32], strides = [1, 1]} : vector<8x128xf32> to vector<8x32xf32>
    %249 = arith.negf %248 : vector<8x32xf32>
    %250 = math.exp %249 : vector<8x32xf32>
    %cst_82 = arith.constant 1.000000e+00 : f32
    %251 = vector.broadcast %cst_82 : f32 to vector<8x32xf32>
    %252 = arith.addf %251, %250 : vector<8x32xf32>
    %253 = arith.divf %251, %252 : vector<8x32xf32>
    %254 = vector.extract_strided_slice %241 {offsets = [0, 64], sizes = [8, 32], strides = [1, 1]} : vector<8x128xf32> to vector<8x32xf32>
    %255 = math.tanh %254 : vector<8x32xf32>
    %256 = vector.extract_strided_slice %241 {offsets = [0, 96], sizes = [8, 32], strides = [1, 1]} : vector<8x128xf32> to vector<8x32xf32>
    %257 = arith.negf %256 : vector<8x32xf32>
    %258 = math.exp %257 : vector<8x32xf32>
    %cst_83 = arith.constant 1.000000e+00 : f32
    %259 = vector.broadcast %cst_83 : f32 to vector<8x32xf32>
    %260 = arith.addf %259, %258 : vector<8x32xf32>
    %261 = arith.divf %259, %260 : vector<8x32xf32>
    %262 = arith.mulf %253, %198 : vector<8x32xf32>
    %263 = arith.mulf %247, %255 : vector<8x32xf32>
    %264 = arith.addf %262, %263 : vector<8x32xf32>
    %265 = math.tanh %264 : vector<8x32xf32>
    %266 = arith.mulf %261, %265 : vector<8x32xf32>
    %267 = arith.truncf %200 : vector<8x32xf32> to vector<8x32xbf16>
    %c0_84 = arith.constant 0 : index
    %c0_85 = arith.constant 0 : index
    %268 = vector.load %arg6[%c0_84, %c0_85] : memref<32x128xbf16, #tpu.memory_space<vmem>>, vector<32x128xbf16>
    %cst_86 = arith.constant dense<0.000000e+00> : vector<8x128xf32>
    %269 = tpu.matmul %267, %268, %cst_86 {dimension_numbers = #tpu.dot_dimension_numbers<[1], [0], [0], [1], [0, 0, 1, 1], [], []>} : vector<8x32xbf16>, vector<32x128xbf16>, vector<8x128xf32> -> vector<8x128xf32>
    %270 = arith.truncf %235 : vector<8x32xf32> to vector<8x32xbf16>
    %c0_87 = arith.constant 0 : index
    %c0_88 = arith.constant 0 : index
    %271 = vector.load %arg7[%c0_87, %c0_88] : memref<32x128xbf16, #tpu.memory_space<vmem>>, vector<32x128xbf16>
    %cst_89 = arith.constant dense<0.000000e+00> : vector<8x128xf32>
    %272 = tpu.matmul %270, %271, %cst_89 {dimension_numbers = #tpu.dot_dimension_numbers<[1], [0], [0], [1], [0, 0, 1, 1], [], []>} : vector<8x32xbf16>, vector<32x128xbf16>, vector<8x128xf32> -> vector<8x128xf32>
    %273 = arith.addf %269, %272 : vector<8x128xf32>
    %c0_90 = arith.constant 0 : index
    %c0_91 = arith.constant 0 : index
    %274 = vector.load %arg8[%c0_90, %c0_91] : memref<1x128xf32, #tpu.memory_space<vmem>>, vector<1x128xf32>
    %275 = vector.broadcast %274 : vector<1x128xf32> to vector<8x128xf32>
    %276 = arith.addf %273, %275 : vector<8x128xf32>
    %277 = vector.extract_strided_slice %276 {offsets = [0, 0], sizes = [8, 32], strides = [1, 1]} : vector<8x128xf32> to vector<8x32xf32>
    %278 = arith.negf %277 : vector<8x32xf32>
    %279 = math.exp %278 : vector<8x32xf32>
    %cst_92 = arith.constant 1.000000e+00 : f32
    %280 = vector.broadcast %cst_92 : f32 to vector<8x32xf32>
    %281 = arith.addf %280, %279 : vector<8x32xf32>
    %282 = arith.divf %280, %281 : vector<8x32xf32>
    %283 = vector.extract_strided_slice %276 {offsets = [0, 32], sizes = [8, 32], strides = [1, 1]} : vector<8x128xf32> to vector<8x32xf32>
    %284 = arith.negf %283 : vector<8x32xf32>
    %285 = math.exp %284 : vector<8x32xf32>
    %cst_93 = arith.constant 1.000000e+00 : f32
    %286 = vector.broadcast %cst_93 : f32 to vector<8x32xf32>
    %287 = arith.addf %286, %285 : vector<8x32xf32>
    %288 = arith.divf %286, %287 : vector<8x32xf32>
    %289 = vector.extract_strided_slice %276 {offsets = [0, 64], sizes = [8, 32], strides = [1, 1]} : vector<8x128xf32> to vector<8x32xf32>
    %290 = math.tanh %289 : vector<8x32xf32>
    %291 = vector.extract_strided_slice %276 {offsets = [0, 96], sizes = [8, 32], strides = [1, 1]} : vector<8x128xf32> to vector<8x32xf32>
    %292 = arith.negf %291 : vector<8x32xf32>
    %293 = math.exp %292 : vector<8x32xf32>
    %cst_94 = arith.constant 1.000000e+00 : f32
    %294 = vector.broadcast %cst_94 : f32 to vector<8x32xf32>
    %295 = arith.addf %294, %293 : vector<8x32xf32>
    %296 = arith.divf %294, %295 : vector<8x32xf32>
    %297 = arith.mulf %288, %233 : vector<8x32xf32>
    %298 = arith.mulf %282, %290 : vector<8x32xf32>
    %299 = arith.addf %297, %298 : vector<8x32xf32>
    %300 = math.tanh %299 : vector<8x32xf32>
    %301 = arith.mulf %296, %300 : vector<8x32xf32>
    %c24_95 = arith.constant 24 : index
    %c0_96 = arith.constant 0 : index
    %302 = vector.load %arg15[%c24_95, %c0_96] : memref<64x32xf32, #tpu.memory_space<vmem>>, vector<8x32xf32>
    tpu.vector_store %arg15[%c24_95, %c0_96], %301 {strides = array<i32>} : memref<64x32xf32, #tpu.memory_space<vmem>>, vector<8x32xf32>,
    %c40 = arith.constant 40 : index
    %c0_97 = arith.constant 0 : index
    %303 = vector.load %arg14[%c40, %c0_97] : memref<64x128xf32, #tpu.memory_space<vmem>>, vector<8x128xf32>
    %304 = arith.truncf %266 : vector<8x32xf32> to vector<8x32xbf16>
    %c0_98 = arith.constant 0 : index
    %c0_99 = arith.constant 0 : index
    %305 = vector.load %arg4[%c0_98, %c0_99] : memref<32x128xbf16, #tpu.memory_space<vmem>>, vector<32x128xbf16>
    %cst_100 = arith.constant dense<0.000000e+00> : vector<8x128xf32>
    %306 = tpu.matmul %304, %305, %cst_100 {dimension_numbers = #tpu.dot_dimension_numbers<[1], [0], [0], [1], [0, 0, 1, 1], [], []>} : vector<8x32xbf16>, vector<32x128xbf16>, vector<8x128xf32> -> vector<8x128xf32>
    %307 = arith.addf %303, %306 : vector<8x128xf32>
    %308 = vector.extract_strided_slice %307 {offsets = [0, 0], sizes = [8, 32], strides = [1, 1]} : vector<8x128xf32> to vector<8x32xf32>
    %309 = arith.negf %308 : vector<8x32xf32>
    %310 = math.exp %309 : vector<8x32xf32>
    %cst_101 = arith.constant 1.000000e+00 : f32
    %311 = vector.broadcast %cst_101 : f32 to vector<8x32xf32>
    %312 = arith.addf %311, %310 : vector<8x32xf32>
    %313 = arith.divf %311, %312 : vector<8x32xf32>
    %314 = vector.extract_strided_slice %307 {offsets = [0, 32], sizes = [8, 32], strides = [1, 1]} : vector<8x128xf32> to vector<8x32xf32>
    %315 = arith.negf %314 : vector<8x32xf32>
    %316 = math.exp %315 : vector<8x32xf32>
    %cst_102 = arith.constant 1.000000e+00 : f32
    %317 = vector.broadcast %cst_102 : f32 to vector<8x32xf32>
    %318 = arith.addf %317, %316 : vector<8x32xf32>
    %319 = arith.divf %317, %318 : vector<8x32xf32>
    %320 = vector.extract_strided_slice %307 {offsets = [0, 64], sizes = [8, 32], strides = [1, 1]} : vector<8x128xf32> to vector<8x32xf32>
    %321 = math.tanh %320 : vector<8x32xf32>
    %322 = vector.extract_strided_slice %307 {offsets = [0, 96], sizes = [8, 32], strides = [1, 1]} : vector<8x128xf32> to vector<8x32xf32>
    %323 = arith.negf %322 : vector<8x32xf32>
    %324 = math.exp %323 : vector<8x32xf32>
    %cst_103 = arith.constant 1.000000e+00 : f32
    %325 = vector.broadcast %cst_103 : f32 to vector<8x32xf32>
    %326 = arith.addf %325, %324 : vector<8x32xf32>
    %327 = arith.divf %325, %326 : vector<8x32xf32>
    %328 = arith.mulf %319, %264 : vector<8x32xf32>
    %329 = arith.mulf %313, %321 : vector<8x32xf32>
    %330 = arith.addf %328, %329 : vector<8x32xf32>
    %331 = math.tanh %330 : vector<8x32xf32>
    %332 = arith.mulf %327, %331 : vector<8x32xf32>
    %333 = arith.truncf %266 : vector<8x32xf32> to vector<8x32xbf16>
    %c0_104 = arith.constant 0 : index
    %c0_105 = arith.constant 0 : index
    %334 = vector.load %arg6[%c0_104, %c0_105] : memref<32x128xbf16, #tpu.memory_space<vmem>>, vector<32x128xbf16>
    %cst_106 = arith.constant dense<0.000000e+00> : vector<8x128xf32>
    %335 = tpu.matmul %333, %334, %cst_106 {dimension_numbers = #tpu.dot_dimension_numbers<[1], [0], [0], [1], [0, 0, 1, 1], [], []>} : vector<8x32xbf16>, vector<32x128xbf16>, vector<8x128xf32> -> vector<8x128xf32>
    %336 = arith.truncf %301 : vector<8x32xf32> to vector<8x32xbf16>
    %c0_107 = arith.constant 0 : index
    %c0_108 = arith.constant 0 : index
    %337 = vector.load %arg7[%c0_107, %c0_108] : memref<32x128xbf16, #tpu.memory_space<vmem>>, vector<32x128xbf16>
    %cst_109 = arith.constant dense<0.000000e+00> : vector<8x128xf32>
    %338 = tpu.matmul %336, %337, %cst_109 {dimension_numbers = #tpu.dot_dimension_numbers<[1], [0], [0], [1], [0, 0, 1, 1], [], []>} : vector<8x32xbf16>, vector<32x128xbf16>, vector<8x128xf32> -> vector<8x128xf32>
    %339 = arith.addf %335, %338 : vector<8x128xf32>
    %c0_110 = arith.constant 0 : index
    %c0_111 = arith.constant 0 : index
    %340 = vector.load %arg8[%c0_110, %c0_111] : memref<1x128xf32, #tpu.memory_space<vmem>>, vector<1x128xf32>
    %341 = vector.broadcast %340 : vector<1x128xf32> to vector<8x128xf32>
    %342 = arith.addf %339, %341 : vector<8x128xf32>
    %343 = vector.extract_strided_slice %342 {offsets = [0, 0], sizes = [8, 32], strides = [1, 1]} : vector<8x128xf32> to vector<8x32xf32>
    %344 = arith.negf %343 : vector<8x32xf32>
    %345 = math.exp %344 : vector<8x32xf32>
    %cst_112 = arith.constant 1.000000e+00 : f32
    %346 = vector.broadcast %cst_112 : f32 to vector<8x32xf32>
    %347 = arith.addf %346, %345 : vector<8x32xf32>
    %348 = arith.divf %346, %347 : vector<8x32xf32>
    %349 = vector.extract_strided_slice %342 {offsets = [0, 32], sizes = [8, 32], strides = [1, 1]} : vector<8x128xf32> to vector<8x32xf32>
    %350 = arith.negf %349 : vector<8x32xf32>
    %351 = math.exp %350 : vector<8x32xf32>
    %cst_113 = arith.constant 1.000000e+00 : f32
    %352 = vector.broadcast %cst_113 : f32 to vector<8x32xf32>
    %353 = arith.addf %352, %351 : vector<8x32xf32>
    %354 = arith.divf %352, %353 : vector<8x32xf32>
    %355 = vector.extract_strided_slice %342 {offsets = [0, 64], sizes = [8, 32], strides = [1, 1]} : vector<8x128xf32> to vector<8x32xf32>
    %356 = math.tanh %355 : vector<8x32xf32>
    %357 = vector.extract_strided_slice %342 {offsets = [0, 96], sizes = [8, 32], strides = [1, 1]} : vector<8x128xf32> to vector<8x32xf32>
    %358 = arith.negf %357 : vector<8x32xf32>
    %359 = math.exp %358 : vector<8x32xf32>
    %cst_114 = arith.constant 1.000000e+00 : f32
    %360 = vector.broadcast %cst_114 : f32 to vector<8x32xf32>
    %361 = arith.addf %360, %359 : vector<8x32xf32>
    %362 = arith.divf %360, %361 : vector<8x32xf32>
    %363 = arith.mulf %354, %299 : vector<8x32xf32>
    %364 = arith.mulf %348, %356 : vector<8x32xf32>
    %365 = arith.addf %363, %364 : vector<8x32xf32>
    %366 = math.tanh %365 : vector<8x32xf32>
    %367 = arith.mulf %362, %366 : vector<8x32xf32>
    %c32_115 = arith.constant 32 : index
    %c0_116 = arith.constant 0 : index
    %368 = vector.load %arg15[%c32_115, %c0_116] : memref<64x32xf32, #tpu.memory_space<vmem>>, vector<8x32xf32>
    tpu.vector_store %arg15[%c32_115, %c0_116], %367 {strides = array<i32>} : memref<64x32xf32, #tpu.memory_space<vmem>>, vector<8x32xf32>,
    %c48 = arith.constant 48 : index
    %c0_117 = arith.constant 0 : index
    %369 = vector.load %arg14[%c48, %c0_117] : memref<64x128xf32, #tpu.memory_space<vmem>>, vector<8x128xf32>
    %370 = arith.truncf %332 : vector<8x32xf32> to vector<8x32xbf16>
    %c0_118 = arith.constant 0 : index
    %c0_119 = arith.constant 0 : index
    %371 = vector.load %arg4[%c0_118, %c0_119] : memref<32x128xbf16, #tpu.memory_space<vmem>>, vector<32x128xbf16>
    %cst_120 = arith.constant dense<0.000000e+00> : vector<8x128xf32>
    %372 = tpu.matmul %370, %371, %cst_120 {dimension_numbers = #tpu.dot_dimension_numbers<[1], [0], [0], [1], [0, 0, 1, 1], [], []>} : vector<8x32xbf16>, vector<32x128xbf16>, vector<8x128xf32> -> vector<8x128xf32>
    %373 = arith.addf %369, %372 : vector<8x128xf32>
    %374 = vector.extract_strided_slice %373 {offsets = [0, 0], sizes = [8, 32], strides = [1, 1]} : vector<8x128xf32> to vector<8x32xf32>
    %375 = arith.negf %374 : vector<8x32xf32>
    %376 = math.exp %375 : vector<8x32xf32>
    %cst_121 = arith.constant 1.000000e+00 : f32
    %377 = vector.broadcast %cst_121 : f32 to vector<8x32xf32>
    %378 = arith.addf %377, %376 : vector<8x32xf32>
    %379 = arith.divf %377, %378 : vector<8x32xf32>
    %380 = vector.extract_strided_slice %373 {offsets = [0, 32], sizes = [8, 32], strides = [1, 1]} : vector<8x128xf32> to vector<8x32xf32>
    %381 = arith.negf %380 : vector<8x32xf32>
    %382 = math.exp %381 : vector<8x32xf32>
    %cst_122 = arith.constant 1.000000e+00 : f32
    %383 = vector.broadcast %cst_122 : f32 to vector<8x32xf32>
    %384 = arith.addf %383, %382 : vector<8x32xf32>
    %385 = arith.divf %383, %384 : vector<8x32xf32>
    %386 = vector.extract_strided_slice %373 {offsets = [0, 64], sizes = [8, 32], strides = [1, 1]} : vector<8x128xf32> to vector<8x32xf32>
    %387 = math.tanh %386 : vector<8x32xf32>
    %388 = vector.extract_strided_slice %373 {offsets = [0, 96], sizes = [8, 32], strides = [1, 1]} : vector<8x128xf32> to vector<8x32xf32>
    %389 = arith.negf %388 : vector<8x32xf32>
    %390 = math.exp %389 : vector<8x32xf32>
    %cst_123 = arith.constant 1.000000e+00 : f32
    %391 = vector.broadcast %cst_123 : f32 to vector<8x32xf32>
    %392 = arith.addf %391, %390 : vector<8x32xf32>
    %393 = arith.divf %391, %392 : vector<8x32xf32>
    %394 = arith.mulf %385, %330 : vector<8x32xf32>
    %395 = arith.mulf %379, %387 : vector<8x32xf32>
    %396 = arith.addf %394, %395 : vector<8x32xf32>
    %397 = math.tanh %396 : vector<8x32xf32>
    %398 = arith.mulf %393, %397 : vector<8x32xf32>
    %399 = arith.truncf %332 : vector<8x32xf32> to vector<8x32xbf16>
    %c0_124 = arith.constant 0 : index
    %c0_125 = arith.constant 0 : index
    %400 = vector.load %arg6[%c0_124, %c0_125] : memref<32x128xbf16, #tpu.memory_space<vmem>>, vector<32x128xbf16>
    %cst_126 = arith.constant dense<0.000000e+00> : vector<8x128xf32>
    %401 = tpu.matmul %399, %400, %cst_126 {dimension_numbers = #tpu.dot_dimension_numbers<[1], [0], [0], [1], [0, 0, 1, 1], [], []>} : vector<8x32xbf16>, vector<32x128xbf16>, vector<8x128xf32> -> vector<8x128xf32>
    %402 = arith.truncf %367 : vector<8x32xf32> to vector<8x32xbf16>
    %c0_127 = arith.constant 0 : index
    %c0_128 = arith.constant 0 : index
    %403 = vector.load %arg7[%c0_127, %c0_128] : memref<32x128xbf16, #tpu.memory_space<vmem>>, vector<32x128xbf16>
    %cst_129 = arith.constant dense<0.000000e+00> : vector<8x128xf32>
    %404 = tpu.matmul %402, %403, %cst_129 {dimension_numbers = #tpu.dot_dimension_numbers<[1], [0], [0], [1], [0, 0, 1, 1], [], []>} : vector<8x32xbf16>, vector<32x128xbf16>, vector<8x128xf32> -> vector<8x128xf32>
    %405 = arith.addf %401, %404 : vector<8x128xf32>
    %c0_130 = arith.constant 0 : index
    %c0_131 = arith.constant 0 : index
    %406 = vector.load %arg8[%c0_130, %c0_131] : memref<1x128xf32, #tpu.memory_space<vmem>>, vector<1x128xf32>
    %407 = vector.broadcast %406 : vector<1x128xf32> to vector<8x128xf32>
    %408 = arith.addf %405, %407 : vector<8x128xf32>
    %409 = vector.extract_strided_slice %408 {offsets = [0, 0], sizes = [8, 32], strides = [1, 1]} : vector<8x128xf32> to vector<8x32xf32>
    %410 = arith.negf %409 : vector<8x32xf32>
    %411 = math.exp %410 : vector<8x32xf32>
    %cst_132 = arith.constant 1.000000e+00 : f32
    %412 = vector.broadcast %cst_132 : f32 to vector<8x32xf32>
    %413 = arith.addf %412, %411 : vector<8x32xf32>
    %414 = arith.divf %412, %413 : vector<8x32xf32>
    %415 = vector.extract_strided_slice %408 {offsets = [0, 32], sizes = [8, 32], strides = [1, 1]} : vector<8x128xf32> to vector<8x32xf32>
    %416 = arith.negf %415 : vector<8x32xf32>
    %417 = math.exp %416 : vector<8x32xf32>
    %cst_133 = arith.constant 1.000000e+00 : f32
    %418 = vector.broadcast %cst_133 : f32 to vector<8x32xf32>
    %419 = arith.addf %418, %417 : vector<8x32xf32>
    %420 = arith.divf %418, %419 : vector<8x32xf32>
    %421 = vector.extract_strided_slice %408 {offsets = [0, 64], sizes = [8, 32], strides = [1, 1]} : vector<8x128xf32> to vector<8x32xf32>
    %422 = math.tanh %421 : vector<8x32xf32>
    %423 = vector.extract_strided_slice %408 {offsets = [0, 96], sizes = [8, 32], strides = [1, 1]} : vector<8x128xf32> to vector<8x32xf32>
    %424 = arith.negf %423 : vector<8x32xf32>
    %425 = math.exp %424 : vector<8x32xf32>
    %cst_134 = arith.constant 1.000000e+00 : f32
    %426 = vector.broadcast %cst_134 : f32 to vector<8x32xf32>
    %427 = arith.addf %426, %425 : vector<8x32xf32>
    %428 = arith.divf %426, %427 : vector<8x32xf32>
    %429 = arith.mulf %420, %365 : vector<8x32xf32>
    %430 = arith.mulf %414, %422 : vector<8x32xf32>
    %431 = arith.addf %429, %430 : vector<8x32xf32>
    %432 = math.tanh %431 : vector<8x32xf32>
    %433 = arith.mulf %428, %432 : vector<8x32xf32>
    %c40_135 = arith.constant 40 : index
    %c0_136 = arith.constant 0 : index
    %434 = vector.load %arg15[%c40_135, %c0_136] : memref<64x32xf32, #tpu.memory_space<vmem>>, vector<8x32xf32>
    tpu.vector_store %arg15[%c40_135, %c0_136], %433 {strides = array<i32>} : memref<64x32xf32, #tpu.memory_space<vmem>>, vector<8x32xf32>,
    %c56 = arith.constant 56 : index
    %c0_137 = arith.constant 0 : index
    %435 = vector.load %arg14[%c56, %c0_137] : memref<64x128xf32, #tpu.memory_space<vmem>>, vector<8x128xf32>
    %436 = arith.truncf %398 : vector<8x32xf32> to vector<8x32xbf16>
    %c0_138 = arith.constant 0 : index
    %c0_139 = arith.constant 0 : index
    %437 = vector.load %arg4[%c0_138, %c0_139] : memref<32x128xbf16, #tpu.memory_space<vmem>>, vector<32x128xbf16>
    %cst_140 = arith.constant dense<0.000000e+00> : vector<8x128xf32>
    %438 = tpu.matmul %436, %437, %cst_140 {dimension_numbers = #tpu.dot_dimension_numbers<[1], [0], [0], [1], [0, 0, 1, 1], [], []>} : vector<8x32xbf16>, vector<32x128xbf16>, vector<8x128xf32> -> vector<8x128xf32>
    %439 = arith.addf %435, %438 : vector<8x128xf32>
    %440 = vector.extract_strided_slice %439 {offsets = [0, 0], sizes = [8, 32], strides = [1, 1]} : vector<8x128xf32> to vector<8x32xf32>
    %441 = arith.negf %440 : vector<8x32xf32>
    %442 = math.exp %441 : vector<8x32xf32>
    %cst_141 = arith.constant 1.000000e+00 : f32
    %443 = vector.broadcast %cst_141 : f32 to vector<8x32xf32>
    %444 = arith.addf %443, %442 : vector<8x32xf32>
    %445 = arith.divf %443, %444 : vector<8x32xf32>
    %446 = vector.extract_strided_slice %439 {offsets = [0, 32], sizes = [8, 32], strides = [1, 1]} : vector<8x128xf32> to vector<8x32xf32>
    %447 = arith.negf %446 : vector<8x32xf32>
    %448 = math.exp %447 : vector<8x32xf32>
    %cst_142 = arith.constant 1.000000e+00 : f32
    %449 = vector.broadcast %cst_142 : f32 to vector<8x32xf32>
    %450 = arith.addf %449, %448 : vector<8x32xf32>
    %451 = arith.divf %449, %450 : vector<8x32xf32>
    %452 = vector.extract_strided_slice %439 {offsets = [0, 64], sizes = [8, 32], strides = [1, 1]} : vector<8x128xf32> to vector<8x32xf32>
    %453 = math.tanh %452 : vector<8x32xf32>
    %454 = vector.extract_strided_slice %439 {offsets = [0, 96], sizes = [8, 32], strides = [1, 1]} : vector<8x128xf32> to vector<8x32xf32>
    %455 = arith.negf %454 : vector<8x32xf32>
    %456 = math.exp %455 : vector<8x32xf32>
    %cst_143 = arith.constant 1.000000e+00 : f32
    %457 = vector.broadcast %cst_143 : f32 to vector<8x32xf32>
    %458 = arith.addf %457, %456 : vector<8x32xf32>
    %459 = arith.divf %457, %458 : vector<8x32xf32>
    %460 = arith.mulf %451, %396 : vector<8x32xf32>
    %461 = arith.mulf %445, %453 : vector<8x32xf32>
    %462 = arith.addf %460, %461 : vector<8x32xf32>
    %463 = math.tanh %462 : vector<8x32xf32>
    %464 = arith.mulf %459, %463 : vector<8x32xf32>
    %465 = arith.truncf %398 : vector<8x32xf32> to vector<8x32xbf16>
    %c0_144 = arith.constant 0 : index
    %c0_145 = arith.constant 0 : index
    %466 = vector.load %arg6[%c0_144, %c0_145] : memref<32x128xbf16, #tpu.memory_space<vmem>>, vector<32x128xbf16>
    %cst_146 = arith.constant dense<0.000000e+00> : vector<8x128xf32>
    %467 = tpu.matmul %465, %466, %cst_146 {dimension_numbers = #tpu.dot_dimension_numbers<[1], [0], [0], [1], [0, 0, 1, 1], [], []>} : vector<8x32xbf16>, vector<32x128xbf16>, vector<8x128xf32> -> vector<8x128xf32>
    %468 = arith.truncf %433 : vector<8x32xf32> to vector<8x32xbf16>
    %c0_147 = arith.constant 0 : index
    %c0_148 = arith.constant 0 : index
    %469 = vector.load %arg7[%c0_147, %c0_148] : memref<32x128xbf16, #tpu.memory_space<vmem>>, vector<32x128xbf16>
    %cst_149 = arith.constant dense<0.000000e+00> : vector<8x128xf32>
    %470 = tpu.matmul %468, %469, %cst_149 {dimension_numbers = #tpu.dot_dimension_numbers<[1], [0], [0], [1], [0, 0, 1, 1], [], []>} : vector<8x32xbf16>, vector<32x128xbf16>, vector<8x128xf32> -> vector<8x128xf32>
    %471 = arith.addf %467, %470 : vector<8x128xf32>
    %c0_150 = arith.constant 0 : index
    %c0_151 = arith.constant 0 : index
    %472 = vector.load %arg8[%c0_150, %c0_151] : memref<1x128xf32, #tpu.memory_space<vmem>>, vector<1x128xf32>
    %473 = vector.broadcast %472 : vector<1x128xf32> to vector<8x128xf32>
    %474 = arith.addf %471, %473 : vector<8x128xf32>
    %475 = vector.extract_strided_slice %474 {offsets = [0, 0], sizes = [8, 32], strides = [1, 1]} : vector<8x128xf32> to vector<8x32xf32>
    %476 = arith.negf %475 : vector<8x32xf32>
    %477 = math.exp %476 : vector<8x32xf32>
    %cst_152 = arith.constant 1.000000e+00 : f32
    %478 = vector.broadcast %cst_152 : f32 to vector<8x32xf32>
    %479 = arith.addf %478, %477 : vector<8x32xf32>
    %480 = arith.divf %478, %479 : vector<8x32xf32>
    %481 = vector.extract_strided_slice %474 {offsets = [0, 32], sizes = [8, 32], strides = [1, 1]} : vector<8x128xf32> to vector<8x32xf32>
    %482 = arith.negf %481 : vector<8x32xf32>
    %483 = math.exp %482 : vector<8x32xf32>
    %cst_153 = arith.constant 1.000000e+00 : f32
    %484 = vector.broadcast %cst_153 : f32 to vector<8x32xf32>
    %485 = arith.addf %484, %483 : vector<8x32xf32>
    %486 = arith.divf %484, %485 : vector<8x32xf32>
    %487 = vector.extract_strided_slice %474 {offsets = [0, 64], sizes = [8, 32], strides = [1, 1]} : vector<8x128xf32> to vector<8x32xf32>
    %488 = math.tanh %487 : vector<8x32xf32>
    %489 = vector.extract_strided_slice %474 {offsets = [0, 96], sizes = [8, 32], strides = [1, 1]} : vector<8x128xf32> to vector<8x32xf32>
    %490 = arith.negf %489 : vector<8x32xf32>
    %491 = math.exp %490 : vector<8x32xf32>
    %cst_154 = arith.constant 1.000000e+00 : f32
    %492 = vector.broadcast %cst_154 : f32 to vector<8x32xf32>
    %493 = arith.addf %492, %491 : vector<8x32xf32>
    %494 = arith.divf %492, %493 : vector<8x32xf32>
    %495 = arith.mulf %486, %431 : vector<8x32xf32>
    %496 = arith.mulf %480, %488 : vector<8x32xf32>
    %497 = arith.addf %495, %496 : vector<8x32xf32>
    %498 = math.tanh %497 : vector<8x32xf32>
    %499 = arith.mulf %494, %498 : vector<8x32xf32>
    %c48_155 = arith.constant 48 : index
    %c0_156 = arith.constant 0 : index
    %500 = vector.load %arg15[%c48_155, %c0_156] : memref<64x32xf32, #tpu.memory_space<vmem>>, vector<8x32xf32>
    tpu.vector_store %arg15[%c48_155, %c0_156], %499 {strides = array<i32>} : memref<64x32xf32, #tpu.memory_space<vmem>>, vector<8x32xf32>,
    %501 = arith.truncf %464 : vector<8x32xf32> to vector<8x32xbf16>
    %c0_157 = arith.constant 0 : index
    %c0_158 = arith.constant 0 : index
    %502 = vector.load %arg6[%c0_157, %c0_158] : memref<32x128xbf16, #tpu.memory_space<vmem>>, vector<32x128xbf16>
    %cst_159 = arith.constant dense<0.000000e+00> : vector<8x128xf32>
    %503 = tpu.matmul %501, %502, %cst_159 {dimension_numbers = #tpu.dot_dimension_numbers<[1], [0], [0], [1], [0, 0, 1, 1], [], []>} : vector<8x32xbf16>, vector<32x128xbf16>, vector<8x128xf32> -> vector<8x128xf32>
    %504 = arith.truncf %499 : vector<8x32xf32> to vector<8x32xbf16>
    %c0_160 = arith.constant 0 : index
    %c0_161 = arith.constant 0 : index
    %505 = vector.load %arg7[%c0_160, %c0_161] : memref<32x128xbf16, #tpu.memory_space<vmem>>, vector<32x128xbf16>
    %cst_162 = arith.constant dense<0.000000e+00> : vector<8x128xf32>
    %506 = tpu.matmul %504, %505, %cst_162 {dimension_numbers = #tpu.dot_dimension_numbers<[1], [0], [0], [1], [0, 0, 1, 1], [], []>} : vector<8x32xbf16>, vector<32x128xbf16>, vector<8x128xf32> -> vector<8x128xf32>
    %507 = arith.addf %503, %506 : vector<8x128xf32>
    %c0_163 = arith.constant 0 : index
    %c0_164 = arith.constant 0 : index
    %508 = vector.load %arg8[%c0_163, %c0_164] : memref<1x128xf32, #tpu.memory_space<vmem>>, vector<1x128xf32>
    %509 = vector.broadcast %508 : vector<1x128xf32> to vector<8x128xf32>
    %510 = arith.addf %507, %509 : vector<8x128xf32>
    %511 = vector.extract_strided_slice %510 {offsets = [0, 0], sizes = [8, 32], strides = [1, 1]} : vector<8x128xf32> to vector<8x32xf32>
    %512 = arith.negf %511 : vector<8x32xf32>
    %513 = math.exp %512 : vector<8x32xf32>
    %cst_165 = arith.constant 1.000000e+00 : f32
    %514 = vector.broadcast %cst_165 : f32 to vector<8x32xf32>
    %515 = arith.addf %514, %513 : vector<8x32xf32>
    %516 = arith.divf %514, %515 : vector<8x32xf32>
    %517 = vector.extract_strided_slice %510 {offsets = [0, 32], sizes = [8, 32], strides = [1, 1]} : vector<8x128xf32> to vector<8x32xf32>
    %518 = arith.negf %517 : vector<8x32xf32>
    %519 = math.exp %518 : vector<8x32xf32>
    %cst_166 = arith.constant 1.000000e+00 : f32
    %520 = vector.broadcast %cst_166 : f32 to vector<8x32xf32>
    %521 = arith.addf %520, %519 : vector<8x32xf32>
    %522 = arith.divf %520, %521 : vector<8x32xf32>
    %523 = vector.extract_strided_slice %510 {offsets = [0, 64], sizes = [8, 32], strides = [1, 1]} : vector<8x128xf32> to vector<8x32xf32>
    %524 = math.tanh %523 : vector<8x32xf32>
    %525 = vector.extract_strided_slice %510 {offsets = [0, 96], sizes = [8, 32], strides = [1, 1]} : vector<8x128xf32> to vector<8x32xf32>
    %526 = arith.negf %525 : vector<8x32xf32>
    %527 = math.exp %526 : vector<8x32xf32>
    %cst_167 = arith.constant 1.000000e+00 : f32
    %528 = vector.broadcast %cst_167 : f32 to vector<8x32xf32>
    %529 = arith.addf %528, %527 : vector<8x32xf32>
    %530 = arith.divf %528, %529 : vector<8x32xf32>
    %531 = arith.mulf %522, %497 : vector<8x32xf32>
    %532 = arith.mulf %516, %524 : vector<8x32xf32>
    %533 = arith.addf %531, %532 : vector<8x32xf32>
    %534 = math.tanh %533 : vector<8x32xf32>
    %535 = arith.mulf %530, %534 : vector<8x32xf32>
    %c56_168 = arith.constant 56 : index
    %c0_169 = arith.constant 0 : index
    %536 = vector.load %arg15[%c56_168, %c0_169] : memref<64x32xf32, #tpu.memory_space<vmem>>, vector<8x32xf32>
    tpu.vector_store %arg15[%c56_168, %c0_169], %535 {strides = array<i32>} : memref<64x32xf32, #tpu.memory_space<vmem>>, vector<8x32xf32>,
    %c0_170 = arith.constant 0 : index
    %c0_171 = arith.constant 0 : index
    %537 = vector.load %arg15[%c0_170, %c0_171] : memref<64x32xf32, #tpu.memory_space<vmem>>, vector<64x32xf32>
    %538 = arith.truncf %537 : vector<64x32xf32> to vector<64x32xbf16>
    %c0_172 = arith.constant 0 : index
    %c0_173 = arith.constant 0 : index
    %539 = vector.load %arg9[%c0_172, %c0_173] : memref<32x384xbf16, #tpu.memory_space<vmem>>, vector<32x384xbf16>
    %cst_174 = arith.constant dense<0.000000e+00> : vector<64x384xf32>
    %540 = tpu.matmul %538, %539, %cst_174 {dimension_numbers = #tpu.dot_dimension_numbers<[1], [0], [0], [1], [0, 0, 1, 1], [], []>} : vector<64x32xbf16>, vector<32x384xbf16>, vector<64x384xf32> -> vector<64x384xf32>
    %c0_175 = arith.constant 0 : index
    %c0_176 = arith.constant 0 : index
    %541 = vector.load %arg10[%c0_175, %c0_176] : memref<1x384xf32, #tpu.memory_space<vmem>>, vector<1x384xf32>
    %542 = vector.broadcast %541 : vector<1x384xf32> to vector<64x384xf32>
    %543 = arith.addf %540, %542 : vector<64x384xf32>
    %544 = vector.extract_strided_slice %543 {offsets = [0, 0], sizes = [64, 35], strides = [1, 1]} : vector<64x384xf32> to vector<64x35xf32>
    %545 = math.tanh %544 : vector<64x35xf32>
    %546 = vector.extract_strided_slice %543 {offsets = [0, 128], sizes = [64, 35], strides = [1, 1]} : vector<64x384xf32> to vector<64x35xf32>
    %cst_177 = arith.constant 0.000000e+00 : f32
    %547 = vector.broadcast %cst_177 : f32 to vector<64x35xf32>
    %548 = arith.maximumf %546, %547 : vector<64x35xf32>
    %549 = math.absf %546 : vector<64x35xf32>
    %cst_178 = arith.constant 0.000000e+00 : f32
    %550 = vector.broadcast %cst_178 : f32 to vector<64x35xf32>
    %551 = arith.subf %550, %549 : vector<64x35xf32>
    %552 = math.exp %551 : vector<64x35xf32>
    %cst_179 = arith.constant 1.000000e+00 : f32
    %553 = vector.broadcast %cst_179 : f32 to vector<64x35xf32>
    %554 = arith.addf %553, %552 : vector<64x35xf32>
    %555 = math.log %554 : vector<64x35xf32>
    %556 = arith.addf %548, %555 : vector<64x35xf32>
    %cst_180 = arith.constant 9.99999974E-5 : f32
    %557 = vector.broadcast %cst_180 : f32 to vector<64x35xf32>
    %558 = arith.addf %556, %557 : vector<64x35xf32>
    %559 = vector.extract_strided_slice %543 {offsets = [0, 256], sizes = [64, 5], strides = [1, 1]} : vector<64x384xf32> to vector<64x5xf32>
    %cst_181 = arith.constant dense<0xFF800000> : vector<64xf32>
    %560 = vector.multi_reduction <maximumf>, %559, %cst_181 [1] : vector<64x5xf32> to vector<64xf32>
    %561 = vector.shape_cast %560 : vector<64xf32> to vector<64x1xf32>
    %562 = vector.broadcast %561 : vector<64x1xf32> to vector<64x5xf32>
    %563 = arith.subf %559, %562 : vector<64x5xf32>
    %564 = math.exp %563 : vector<64x5xf32>
    %cst_182 = arith.constant dense<0.000000e+00> : vector<64xf32>
    %565 = vector.multi_reduction <add>, %564, %cst_182 [1] : vector<64x5xf32> to vector<64xf32>
    %566 = vector.shape_cast %565 : vector<64xf32> to vector<64x1xf32>
    %567 = math.log %566 : vector<64x1xf32>
    %568 = arith.addf %561, %567 : vector<64x1xf32>
    %569 = vector.broadcast %568 : vector<64x1xf32> to vector<64x5xf32>
    %570 = arith.subf %559, %569 : vector<64x5xf32>
    %c0_183 = arith.constant 0 : index
    %c0_184 = arith.constant 0 : index
    %c0_185 = arith.constant 0 : index
    %571 = vector.load %arg2[%c0_183, %c0_184, %c0_185] : memref<1x64x7xf32, #tpu.memory_space<vmem>>, vector<1x64x7xf32>
    %572 = vector.shape_cast %571 : vector<1x64x7xf32> to vector<64x7xf32>
    %c0_186 = arith.constant 0 : index
    %c0_187 = arith.constant 0 : index
    %573 = vector.load %arg12[%c0_186, %c0_187] : memref<7x35xf32, #tpu.memory_space<vmem>>, vector<7x35xf32>
    %cst_188 = arith.constant dense<0.000000e+00> : vector<64x35xf32>
    %574 = tpu.matmul %572, %573, %cst_188 {dimension_numbers = #tpu.dot_dimension_numbers<[1], [0], [0], [1], [0, 0, 1, 1], [], []>} : vector<64x7xf32>, vector<7x35xf32>, vector<64x35xf32> -> vector<64x35xf32>
    %575 = arith.subf %574, %545 : vector<64x35xf32>
    %576 = arith.divf %575, %558 : vector<64x35xf32>
    %cst_189 = arith.constant -5.000000e-01 : f32
    %577 = vector.broadcast %cst_189 : f32 to vector<64x35xf32>
    %578 = arith.mulf %577, %576 : vector<64x35xf32>
    %579 = arith.mulf %578, %576 : vector<64x35xf32>
    %580 = math.log %558 : vector<64x35xf32>
    %581 = arith.subf %579, %580 : vector<64x35xf32>
    %c0_190 = arith.constant 0 : index
    %c0_191 = arith.constant 0 : index
    %582 = vector.load %arg11[%c0_190, %c0_191] : memref<35x5xf32, #tpu.memory_space<vmem>>, vector<35x5xf32>
    %cst_192 = arith.constant dense<0.000000e+00> : vector<64x5xf32>
    %583 = tpu.matmul %581, %582, %cst_192 {dimension_numbers = #tpu.dot_dimension_numbers<[1], [0], [0], [1], [0, 0, 1, 1], [], []>} : vector<64x35xf32>, vector<35x5xf32>, vector<64x5xf32> -> vector<64x5xf32>
    %cst_193 = arith.constant 6.4325695 : f32
    %584 = vector.broadcast %cst_193 : f32 to vector<64x5xf32>
    %585 = arith.subf %583, %584 : vector<64x5xf32>
    %586 = arith.addf %585, %570 : vector<64x5xf32>
    %cst_194 = arith.constant dense<0xFF800000> : vector<64xf32>
    %587 = vector.multi_reduction <maximumf>, %586, %cst_194 [1] : vector<64x5xf32> to vector<64xf32>
    %588 = vector.shape_cast %587 : vector<64xf32> to vector<64x1xf32>
    %589 = vector.broadcast %588 : vector<64x1xf32> to vector<64x5xf32>
    %590 = arith.subf %586, %589 : vector<64x5xf32>
    %591 = math.exp %590 : vector<64x5xf32>
    %cst_195 = arith.constant dense<0.000000e+00> : vector<64xf32>
    %592 = vector.multi_reduction <add>, %591, %cst_195 [1] : vector<64x5xf32> to vector<64xf32>
    %593 = vector.shape_cast %592 : vector<64xf32> to vector<64x1xf32>
    %594 = math.log %593 : vector<64x1xf32>
    %595 = arith.addf %588, %594 : vector<64x1xf32>
    %596 = tpu.iota {dimensions = array<i32: 0>} : vector<64x1xi32>
    %c7_i32 = arith.constant 7 : i32
    %597 = vector.broadcast %c7_i32 : i32 to vector<64x1xi32>
    %598 = arith.andi %596, %597 : vector<64x1xi32>
    %c8_i32 = arith.constant 8 : i32
    %599 = arith.muli %arg0, %c8_i32 : i32
    %600 = vector.broadcast %599 : i32 to vector<64x1xi32>
    %601 = arith.addi %598, %600 : vector<64x1xi32>
    %c2_i32 = arith.constant 2 : i32
    %602 = vector.broadcast %c2_i32 : i32 to vector<64x1xi32>
    %603 = arith.cmpi slt, %601, %602 : vector<64x1xi32>
    %604 = arith.extui %603 : vector<64x1xi1> to vector<64x1xi32>
    %605 = arith.sitofp %604 : vector<64x1xi32> to vector<64x1xf32>
    %606 = arith.mulf %595, %605 : vector<64x1xf32>
    %cst_196 = arith.constant dense<0.000000e+00> : vector<1xf32>
    %607 = vector.multi_reduction <add>, %606, %cst_196 [0] : vector<64x1xf32> to vector<1xf32>
    %608 = vector.shape_cast %607 : vector<1xf32> to vector<1x1xf32>
    %609 = vector.shape_cast %608 : vector<1x1xf32> to vector<1x1xf32>
    %610 = vector.broadcast %609 : vector<1x1xf32> to vector<8x128xf32>
    %c0_197 = arith.constant 0 : index
    %c0_198 = arith.constant 0 : index
    %611 = vector.load %arg13[%c0_197, %c0_198] : memref<8x128xf32, #tpu.memory_space<vmem>>, vector<8x128xf32>
    tpu.vector_store %arg13[%c0_197, %c0_198], %610 {strides = array<i32>} : memref<8x128xf32, #tpu.memory_space<vmem>>, vector<8x128xf32>,
    return
  }
  func.func @transform_0(%arg0: i32) -> (i32, i32, i32) {
    %c0_i32 = arith.constant 0 : i32
    %c0_i32_0 = arith.constant 0 : i32
    %c0_i32_1 = arith.constant 0 : i32
    return %arg0, %c0_i32, %c0_i32_0 : i32, i32, i32
  }
  func.func @transform_1(%arg0: i32) -> (i32, i32, i32) {
    %c0_i32 = arith.constant 0 : i32
    %c0_i32_0 = arith.constant 0 : i32
    %c0_i32_1 = arith.constant 0 : i32
    return %arg0, %c0_i32, %c0_i32_0 : i32, i32, i32
  }
  func.func @transform_2(%arg0: i32) -> (i32, i32) {
    %c0_i32 = arith.constant 0 : i32
    %c0_i32_0 = arith.constant 0 : i32
    %c0_i32_1 = arith.constant 0 : i32
    return %c0_i32, %c0_i32_0 : i32, i32
  }
  func.func @transform_3(%arg0: i32) -> (i32, i32) {
    %c0_i32 = arith.constant 0 : i32
    %c0_i32_0 = arith.constant 0 : i32
    %c0_i32_1 = arith.constant 0 : i32
    return %c0_i32, %c0_i32_0 : i32, i32
  }
  func.func @transform_4(%arg0: i32) -> (i32, i32) {
    %c0_i32 = arith.constant 0 : i32
    %c0_i32_0 = arith.constant 0 : i32
    %c0_i32_1 = arith.constant 0 : i32
    return %c0_i32, %c0_i32_0 : i32, i32
  }
  func.func @transform_5(%arg0: i32) -> (i32, i32) {
    %c0_i32 = arith.constant 0 : i32
    %c0_i32_0 = arith.constant 0 : i32
    %c0_i32_1 = arith.constant 0 : i32
    return %c0_i32, %c0_i32_0 : i32, i32
  }
  func.func @transform_6(%arg0: i32) -> (i32, i32) {
    %c0_i32 = arith.constant 0 : i32
    %c0_i32_0 = arith.constant 0 : i32
    %c0_i32_1 = arith.constant 0 : i32
    return %c0_i32, %c0_i32_0 : i32, i32
  }
  func.func @transform_7(%arg0: i32) -> (i32, i32) {
    %c0_i32 = arith.constant 0 : i32
    %c0_i32_0 = arith.constant 0 : i32
    %c0_i32_1 = arith.constant 0 : i32
    return %c0_i32, %c0_i32_0 : i32, i32
  }
  func.func @transform_8(%arg0: i32) -> (i32, i32) {
    %c0_i32 = arith.constant 0 : i32
    %c0_i32_0 = arith.constant 0 : i32
    %c0_i32_1 = arith.constant 0 : i32
    return %c0_i32, %c0_i32_0 : i32, i32
  }
  func.func @transform_9(%arg0: i32) -> (i32, i32) {
    %c0_i32 = arith.constant 0 : i32
    %c0_i32_0 = arith.constant 0 : i32
    %c0_i32_1 = arith.constant 0 : i32
    return %c0_i32, %c0_i32_0 : i32, i32
  }
  func.func @transform_10(%arg0: i32) -> (i32, i32) {
    %c0_i32 = arith.constant 0 : i32
    %c0_i32_0 = arith.constant 0 : i32
    %c0_i32_1 = arith.constant 0 : i32
    return %c0_i32, %c0_i32_0 : i32, i32
  }
  func.func @transform_11(%arg0: i32) -> (i32, i32) {
    %c0_i32 = arith.constant 0 : i32
    %c0_i32_0 = arith.constant 0 : i32
    %c0_i32_1 = arith.constant 0 : i32
    return %c0_i32, %c0_i32_0 : i32, i32
  }
  func.func @transform_12(%arg0: i32) -> (i32, i32) {
    %c0_i32 = arith.constant 0 : i32
    %c0_i32_0 = arith.constant 0 : i32
    return %arg0, %c0_i32 : i32, i32
  }
}

</mosaic_0001>

<llo_original>
// kernel: tpu_custom_call.1
$region0: #{tpu_custom_call.1}
  #allocation0 [shape = 'u32[]', space=smem, size = 0x4, offset = 0x4, fixed_abs, tag = 'smem constant byte address 0x4 - core index']
  #allocation1 [shape = 'u32[144,128]{1,0:T(1,128)}', space=vmem, size = 0x12000, scoped, tag = 'internal scratch']
  #allocation2 [shape = 'f32[64,128]{1,0:T(8,128)}', space=vmem, size = 0x8000, scoped, tag = 'scratch operand']
  #allocation3 [shape = 'f32[64,32]{1,0:T(8,128)}', space=vmem, size = 0x8000, scoped, tag = 'scratch operand']
  %s0 = inlined_call_operand.vmem [shape: bf16[1,64,13], index: 0, kind: input, shape index: {}]
  %s1 = inlined_call_operand.vmem [shape: f32[1,64,7], index: 1, kind: input, shape index: {}]
  %s2 = inlined_call_operand.vmem [shape: bf16[13,128], index: 2, kind: input, shape index: {}]
  %s3 = inlined_call_operand.vmem [shape: bf16[32,128], index: 3, kind: input, shape index: {}]
  %s4 = inlined_call_operand.vmem [shape: f32[1,128], index: 4, kind: input, shape index: {}]
  %s5 = inlined_call_operand.vmem [shape: bf16[32,128], index: 5, kind: input, shape index: {}]
  %s6 = inlined_call_operand.vmem [shape: bf16[32,128], index: 6, kind: input, shape index: {}]
  %s7 = inlined_call_operand.vmem [shape: f32[1,128], index: 7, kind: input, shape index: {}]
  %s8 = inlined_call_operand.vmem [shape: bf16[32,384], index: 8, kind: input, shape index: {}]
  %s9 = inlined_call_operand.vmem [shape: f32[1,384], index: 9, kind: input, shape index: {}]
  %s10 = inlined_call_operand.vmem [shape: f32[35,5], index: 10, kind: input, shape index: {}]
  %s11 = inlined_call_operand.vmem [shape: f32[7,35], index: 11, kind: input, shape index: {}]
  %s12 = inlined_call_operand.hbm [shape: f32[8,128], index: 12, kind: output, shape index: {}]
  %s13 = sld [smem:[#allocation0]]
  $region58: #{tpu_custom_call.1} parent=0
    _
  %s15 = ssub.s32 1, %s13
  %s16 = scalar_select 0, %s15, %s13
  $region1: #{tpu_custom_call.1} parent=0
    #allocation4 [shape = 'u8[4096]{0}', space=vmem, size = 0x1000, scoped, tag = 'output window, operand 0, single buffered']
    #allocation5 [shape = 's32[1]{0}', space=sflag, size = 0x4, scoped, tag = 'scoped memory for tpu_custom_call.1']
    %17 = vsyncpa [#allocation5], 0
    // Predicated region
    $region2: #{tpu_custom_call.1} parent=1 // pred_check
      _
    $region3: #{tpu_custom_call.1} parent=1 // pred_check_branch
      %19 = sbr.rel (0) target = $region5
    $region4: #{tpu_custom_call.1} parent=1 // pred_region
      _
    $region5: #{tpu_custom_call.1} parent=1 // pred_fallthru
      _
    // Predicated region
    $region6: #{tpu_custom_call.1} parent=1 // pred_check
      _
    $region7: #{tpu_custom_call.1} parent=1 // pred_check_branch
      %21 = sbr.rel (0) target = $region9
    $region8: #{tpu_custom_call.1} parent=1 // pred_region
      _
    $region9: #{tpu_custom_call.1} parent=1 // pred_fallthru
      _
    // Predicated region
    $region10: #{tpu_custom_call.1} parent=1 // pred_check
      _
    $region11: #{tpu_custom_call.1} parent=1 // pred_check_branch
      %23 = sbr.rel (0) target = $region13
    $region12: #{tpu_custom_call.1} parent=1 // pred_region
      _
    $region13: #{tpu_custom_call.1} parent=1 // pred_fallthru
      _
    // Predicated region
    $region14: #{tpu_custom_call.1} parent=1 // pred_check
      _
    $region15: #{tpu_custom_call.1} parent=1 // pred_check_branch
      %25 = sbr.rel (0) target = $region17
    $region16: #{tpu_custom_call.1} parent=1 // pred_region
      _
    $region17: #{tpu_custom_call.1} parent=1 // pred_fallthru
      _
    // Predicated region
    $region18: #{tpu_custom_call.1} parent=1 // pred_check
      _
    $region19: #{tpu_custom_call.1} parent=1 // pred_check_branch
      %27 = sbr.rel (0) target = $region21
    $region20: #{tpu_custom_call.1} parent=1 // pred_region
      _
    $region21: #{tpu_custom_call.1} parent=1 // pred_fallthru
      _
    // Predicated region
    $region22: #{tpu_custom_call.1} parent=1 // pred_check
      _
    $region23: #{tpu_custom_call.1} parent=1 // pred_check_branch
      %29 = sbr.rel (0) target = $region25
    $region24: #{tpu_custom_call.1} parent=1 // pred_region
      _
    $region25: #{tpu_custom_call.1} parent=1 // pred_fallthru
      _
    // Predicated region
    $region26: #{tpu_custom_call.1} parent=1 // pred_check
      _
    $region27: #{tpu_custom_call.1} parent=1 // pred_check_branch
      %31 = sbr.rel (0) target = $region29
    $region28: #{tpu_custom_call.1} parent=1 // pred_region
      _
    $region29: #{tpu_custom_call.1} parent=1 // pred_fallthru
      _
    // Predicated region
    $region30: #{tpu_custom_call.1} parent=1 // pred_check
      _
    $region31: #{tpu_custom_call.1} parent=1 // pred_check_branch
      %33 = sbr.rel (0) target = $region33
    $region32: #{tpu_custom_call.1} parent=1 // pred_region
      _
    $region33: #{tpu_custom_call.1} parent=1 // pred_fallthru
      _
    // Predicated region
    $region34: #{tpu_custom_call.1} parent=1 // pred_check
      _
    $region35: #{tpu_custom_call.1} parent=1 // pred_check_branch
      %35 = sbr.rel (0) target = $region37
    $region36: #{tpu_custom_call.1} parent=1 // pred_region
      _
    $region37: #{tpu_custom_call.1} parent=1 // pred_fallthru
      _
    // Predicated region
    $region38: #{tpu_custom_call.1} parent=1 // pred_check
      _
    $region39: #{tpu_custom_call.1} parent=1 // pred_check_branch
      %37 = sbr.rel (0) target = $region41
    $region40: #{tpu_custom_call.1} parent=1 // pred_region
      _
    $region41: #{tpu_custom_call.1} parent=1 // pred_fallthru
      _
    // Predicated region
    $region42: #{tpu_custom_call.1} parent=1 // pred_check
      _
    $region43: #{tpu_custom_call.1} parent=1 // pred_check_branch
      %39 = sbr.rel (0) target = $region45
    $region44: #{tpu_custom_call.1} parent=1 // pred_region
      _
    $region45: #{tpu_custom_call.1} parent=1 // pred_fallthru
      _
    // Predicated region
    $region46: #{tpu_custom_call.1} parent=1 // pred_check
      _
    $region47: #{tpu_custom_call.1} parent=1 // pred_check_branch
      %41 = sbr.rel (0) target = $region49
    $region48: #{tpu_custom_call.1} parent=1 // pred_region
      _
    $region49: #{tpu_custom_call.1} parent=1 // pred_fallthru
      _
    %v43 = vld [vmem:[%s0] sm:$0xf]
    %v44 = vld [vmem:[%s0 + $0x4] sm:$0xf]
    %v45 = vld [vmem:[%s0 + $0x8] sm:$0xf]
    %v46 = vld [vmem:[%s0 + $0xc] sm:$0xf]
    %v47 = vld [vmem:[%s0 + $0x10] sm:$0xf]
    %v48 = vld [vmem:[%s0 + $0x14] sm:$0xf]
    %v49 = vld [vmem:[%s0 + $0x18] sm:$0xf]
    %v50 = vld [vmem:[%s0 + $0x1c] sm:$0xf]
    %v51 = vld [vmem:[%s2] sm:$0xf]
    %v52 = vld [vmem:[%s2 + $0x4] sm:$0x7]
    %v53 = vld [vmem:[%s4] sm:$0x1]
    %v55 = vlaneseq
    %v56 = vshrl.u32 %v55, 7
    %v57 = vsub.s32 0, %v56
    %v58 = vrot.slane %v53, %v57
    %v68 = vunpack.c.l.b16 %v43
    %v69 = vunpack.c.l.b16 %v44
    %v70 = vunpack.c.l.b16 %v45
    %v71 = vunpack.c.l.b16 %v46
    %v72 = vunpack.c.l.b16 %v47
    %v73 = vunpack.c.l.b16 %v48
    %v74 = vunpack.c.l.b16 %v49
    %v75 = vunpack.c.l.b16 %v50
    %v76 = vpack.c.b16 %v69, %v68
    %v77 = vpack.c.b16 %v71, %v70
    %v78 = vpack.c.b16 %v73, %v72
    %v79 = vpack.c.b16 %v75, %v74
    %v82 = vunpack.c.l.b16 %v51
    %v83 = vunpack.c.l.b16 %v52
    %v84 = vpack.c.b16 %v83, %v82
    %vm85 = vcmask 105472
    %v87 = vsel %vm85, %v76, 0
    %v90 = vsel %vm85, %v77, 0
    %v93 = vsel %vm85, %v78, 0
    %v96 = vsel %vm85, %v79, 0
    %vm98 = vcmask 1045504
    %vm99 = vcmask 1046528
    %v100 = vsel %vm98, 4294967295, 65535
    %v101 = vsel %vm99, %v100, 0
    %v103 = vand.u32 %v84, %v101
    %105 = vmatprep.subr.bf16.mxu0 0
    %106 = vmatpush1.bf16.msra.mxu0 %v103
    %107 = vmatprep.subr.bf16.mxu0 0
    %108 = vmatpush1.bf16.msra.mxu0 0
    %109 = vmatprep.subr.bf16.mxu0 0
    %110 = vmatpush1.bf16.msra.mxu0 0
    %111 = vmatprep.subr.bf16.mxu0 0
    %112 = vmatpush1.bf16.msra.mxu0 0
    %113 = vmatprep.subr.bf16.mxu0 0
    %114 = vmatpush1.bf16.msra.mxu0 0
    %115 = vmatprep.subr.bf16.mxu0 0
    %116 = vmatpush1.bf16.msra.mxu0 0
    %117 = vmatprep.subr.bf16.mxu0 0
    %118 = vmatpush1.bf16.msra.mxu0 0
    %119 = vmatprep.subr.bf16.mxu0 0
    %120 = vmatpush1.bf16.msra.mxu0 0
    %121 = vmatprep.subr.bf16.mxu0 0
    %122 = vmatpush1.bf16.msra.mxu0 0
    %123 = vmatprep.subr.bf16.mxu0 0
    %124 = vmatpush1.bf16.msra.mxu0 0
    %125 = vmatprep.subr.bf16.mxu0 0
    %126 = vmatpush1.bf16.msra.mxu0 0
    %127 = vmatprep.subr.bf16.mxu0 0
    %128 = vmatpush1.bf16.msra.mxu0 0
    %129 = vmatprep.subr.bf16.mxu0 0
    %130 = vmatpush1.bf16.msra.mxu0 0
    %131 = vmatprep.subr.bf16.mxu0 0
    %132 = vmatpush1.bf16.msra.mxu0 0
    %133 = vmatprep.subr.bf16.mxu0 0
    %134 = vmatpush1.bf16.msra.mxu0 0
    %135 = vmatprep.subr.bf16.mxu0 0
    %136 = vmatpush1.bf16.msra.mxu0 0
    %137 = vmatprep.mubr.bf16.mxu0 0
    %138 = vmatmul.mubr.bf16.gmra.mrb[0].mxu0 %v87
    %v139 = vpop.f32.mrb[0].mxu0
    %v140 = vadd.f32 %v58, %v139
    %v141 = vpop.f32.mrb[0].mxu0
    %v142 = vpop.f32.mrb[0].mxu0
    %v143 = vadd.f32 %v58, %v142
    %v144 = vpop.f32.mrb[0].mxu0
    %145 = vmatprep.mubr.bf16.mxu0 0
    %146 = vmatmul.mubr.bf16.gmra.mrb[0].mxu0 %v90
    %v147 = vpop.f32.mrb[0].mxu0
    %v148 = vadd.f32 %v58, %v147
    %v149 = vpop.f32.mrb[0].mxu0
    %v150 = vpop.f32.mrb[0].mxu0
    %v151 = vadd.f32 %v58, %v150
    %v152 = vpop.f32.mrb[0].mxu0
    %153 = vmatprep.mubr.bf16.mxu0 0
    %154 = vmatmul.mubr.bf16.gmra.mrb[0].mxu0 %v93
    %v155 = vpop.f32.mrb[0].mxu0
    %v156 = vadd.f32 %v58, %v155
    %v157 = vpop.f32.mrb[0].mxu0
    %v158 = vpop.f32.mrb[0].mxu0
    %v159 = vadd.f32 %v58, %v158
    %v160 = vpop.f32.mrb[0].mxu0
    %161 = vmatprep.mubr.bf16.mxu0 0
    %162 = vmatmul.mubr.bf16.gmra.mrb[0].mxu0 %v96
    %v163 = vpop.f32.mrb[0].mxu0
    %v164 = vadd.f32 %v58, %v163
    %v165 = vpop.f32.mrb[0].mxu0
    %v166 = vpop.f32.mrb[0].mxu0
    %v167 = vadd.f32 %v58, %v166
    %v168 = vpop.f32.mrb[0].mxu0
    %169 = vdwg.mxu0
    %170 = vst [vmem:[#allocation2] sm:$0xff] %v140
    %171 = vst [vmem:[#allocation2 + $0x8] sm:$0xff] %v143
    %172 = vst [vmem:[#allocation2 + $0x10] sm:$0xff] %v148
    %173 = vst [vmem:[#allocation2 + $0x18] sm:$0xff] %v151
    %174 = vst [vmem:[#allocation2 + $0x20] sm:$0xff] %v156
    %175 = vst [vmem:[#allocation2 + $0x28] sm:$0xff] %v159
    %176 = vst [vmem:[#allocation2 + $0x30] sm:$0xff] %v164
    %177 = vst [vmem:[#allocation2 + $0x38] sm:$0xff] %v167
    %v178 = vld [vmem:[#allocation2] sm:$0xff]
    %v179 = vld [vmem:[%s3] sm:$0xf]
    %v180 = vld [vmem:[%s3 + $0x4] sm:$0xf]
    %v181 = vld [vmem:[%s3 + $0x8] sm:$0xf]
    %v182 = vld [vmem:[%s3 + $0xc] sm:$0xf]
    %v187 = vunpack.c.l.b16 %v179
    %v188 = vunpack.c.l.b16 %v180
    %v189 = vunpack.c.l.b16 %v181
    %v190 = vunpack.c.l.b16 %v182
    %v191 = vpack.c.b16 %v188, %v187
    %v192 = vpack.c.b16 %v190, %v189
    %vm195 = vcmask 261120
    %v197 = vsel %vm195, 0, 0
    %199 = vmatprep.subr.bf16.mxu0 0
    %200 = vmatpush1.bf16.msra.mxu0 %v191
    %201 = vmatprep.subr.bf16.mxu0 0
    %202 = vmatpush1.bf16.msra.mxu0 %v192
    %203 = vmatprep.subr.bf16.mxu0 0
    %204 = vmatpush1.bf16.msra.mxu0 0
    %205 = vmatprep.subr.bf16.mxu0 0
    %206 = vmatpush1.bf16.msra.mxu0 0
    %207 = vmatprep.subr.bf16.mxu0 0
    %208 = vmatpush1.bf16.msra.mxu0 0
    %209 = vmatprep.subr.bf16.mxu0 0
    %210 = vmatpush1.bf16.msra.mxu0 0
    %211 = vmatprep.subr.bf16.mxu0 0
    %212 = vmatpush1.bf16.msra.mxu0 0
    %213 = vmatprep.subr.bf16.mxu0 0
    %214 = vmatpush1.bf16.msra.mxu0 0
    %215 = vmatprep.subr.bf16.mxu0 0
    %216 = vmatpush1.bf16.msra.mxu0 0
    %217 = vmatprep.subr.bf16.mxu0 0
    %218 = vmatpush1.bf16.msra.mxu0 0
    %219 = vmatprep.subr.bf16.mxu0 0
    %220 = vmatpush1.bf16.msra.mxu0 0
    %221 = vmatprep.subr.bf16.mxu0 0
    %222 = vmatpush1.bf16.msra.mxu0 0
    %223 = vmatprep.subr.bf16.mxu0 0
    %224 = vmatpush1.bf16.msra.mxu0 0
    %225 = vmatprep.subr.bf16.mxu0 0
    %226 = vmatpush1.bf16.msra.mxu0 0
    %227 = vmatprep.subr.bf16.mxu0 0
    %228 = vmatpush1.bf16.msra.mxu0 0
    %229 = vmatprep.subr.bf16.mxu0 0
    %230 = vmatpush1.bf16.msra.mxu0 0
    %231 = vmatprep.mubr.bf16.mxu0 0
    %232 = vmatmul.mubr.bf16.gmra.mrb[0].mxu0 %v197
    %v233 = vpop.f32.mrb[0].mxu0
    %v234 = vadd.f32 0.0, %v233
    %v235 = vpop.f32.mrb[0].mxu0
    %v236 = vpop.f32.mrb[0].mxu0
    %v237 = vpop.f32.mrb[0].mxu0
    %238 = vdwg.mxu0
    %v239 = vadd.f32 %v178, %v234
    %v240 = vxor.u32 %v239, 2147483648
    %v241 = vmul.f32 %v240, 1.442695
    %v242 = vpow.pop %v241
    %v243 = vadd.f32 %v242, 1.0
    %v244 = vrcp.pop %v243
    %v245 = vmul.f32 1.0, %v244
    %v246 = vtanh.pop %v239
    %v247 = vmul.f32 %v245, 0.0
    %249 = vrot.lane.b32.xlu0 %v246, 64
    %v250 = vpop.permute.xlu0 %249
    %v252 = vmul.f32 %v245, %v250
    %254 = vrot.lane.b32.xlu0 %v252, 32
    %v255 = vpop.permute.xlu0 %254
    %v257 = vadd.f32 %v247, %v255
    %v258 = vtanh.pop %v257
    %260 = vrot.lane.b32.xlu0 %v258, 64
    %v261 = vpop.permute.xlu0 %260
    %v263 = vmul.f32 %v245, %v261
    %v264 = vld [vmem:[#allocation2 + $0x8] sm:$0xff]
    %v265 = vpack.c.bf16 %v263, %v263
    %267 = vrot.lane.b32.xlu0 %v265, 32
    %v268 = vpop.permute.xlu0 %267
    %v270 = vsel %vm195, %v268, 0
    %272 = vmatprep.subr.bf16.mxu0 0
    %273 = vmatpush1.bf16.msra.mxu0 %v191
    %274 = vmatprep.subr.bf16.mxu0 0
    %275 = vmatpush1.bf16.msra.mxu0 %v192
    %276 = vmatprep.subr.bf16.mxu0 0
    %277 = vmatpush1.bf16.msra.mxu0 0
    %278 = vmatprep.subr.bf16.mxu0 0
    %279 = vmatpush1.bf16.msra.mxu0 0
    %280 = vmatprep.subr.bf16.mxu0 0
    %281 = vmatpush1.bf16.msra.mxu0 0
    %282 = vmatprep.subr.bf16.mxu0 0
    %283 = vmatpush1.bf16.msra.mxu0 0
    %284 = vmatprep.subr.bf16.mxu0 0
    %285 = vmatpush1.bf16.msra.mxu0 0
    %286 = vmatprep.subr.bf16.mxu0 0
    %287 = vmatpush1.bf16.msra.mxu0 0
    %288 = vmatprep.subr.bf16.mxu0 0
    %289 = vmatpush1.bf16.msra.mxu0 0
    %290 = vmatprep.subr.bf16.mxu0 0
    %291 = vmatpush1.bf16.msra.mxu0 0
    %292 = vmatprep.subr.bf16.mxu0 0
    %293 = vmatpush1.bf16.msra.mxu0 0
    %294 = vmatprep.subr.bf16.mxu0 0
    %295 = vmatpush1.bf16.msra.mxu0 0
    %296 = vmatprep.subr.bf16.mxu0 0
    %297 = vmatpush1.bf16.msra.mxu0 0
    %298 = vmatprep.subr.bf16.mxu0 0
    %299 = vmatpush1.bf16.msra.mxu0 0
    %300 = vmatprep.subr.bf16.mxu0 0
    %301 = vmatpush1.bf16.msra.mxu0 0
    %302 = vmatprep.subr.bf16.mxu0 0
    %303 = vmatpush1.bf16.msra.mxu0 0
    %304 = vmatprep.mubr.bf16.mxu0 0
    %305 = vmatmul.mubr.bf16.gmra.mrb[0].mxu0 %v270
    %v306 = vpop.f32.mrb[0].mxu0
    %v307 = vadd.f32 0.0, %v306
    %v308 = vpop.f32.mrb[0].mxu0
    %v309 = vpop.f32.mrb[0].mxu0
    %v310 = vpop.f32.mrb[0].mxu0
    %311 = vdwg.mxu0
    %v312 = vadd.f32 %v264, %v307
    %v313 = vxor.u32 %v312, 2147483648
    %v314 = vmul.f32 %v313, 1.442695
    %v315 = vpow.pop %v314
    %v316 = vadd.f32 %v315, 1.0
    %v317 = vrcp.pop %v316
    %v318 = vmul.f32 1.0, %v317
    %v319 = vtanh.pop %v312
    %v320 = vmul.f32 %v318, %v257
    %322 = vrot.lane.b32.xlu0 %v319, 64
    %v323 = vpop.permute.xlu0 %322
    %v325 = vmul.f32 %v318, %v323
    %327 = vrot.lane.b32.xlu0 %v325, 32
    %v328 = vpop.permute.xlu0 %327
    %v330 = vadd.f32 %v320, %v328
    %v331 = vtanh.pop %v330
    %333 = vrot.lane.b32.xlu0 %v331, 64
    %v334 = vpop.permute.xlu0 %333
    %v336 = vmul.f32 %v318, %v334
    %v337 = vld [vmem:[%s5] sm:$0xf]
    %v338 = vld [vmem:[%s5 + $0x4] sm:$0xf]
    %v339 = vld [vmem:[%s5 + $0x8] sm:$0xf]
    %v340 = vld [vmem:[%s5 + $0xc] sm:$0xf]
    %v341 = vld [vmem:[%s6] sm:$0xf]
    %v342 = vld [vmem:[%s6 + $0x4] sm:$0xf]
    %v343 = vld [vmem:[%s6 + $0x8] sm:$0xf]
    %v344 = vld [vmem:[%s6 + $0xc] sm:$0xf]
    %v349 = vunpack.c.l.b16 %v341
    %v350 = vunpack.c.l.b16 %v342
    %v351 = vunpack.c.l.b16 %v343
    %v352 = vunpack.c.l.b16 %v344
    %v353 = vpack.c.b16 %v350, %v349
    %v354 = vpack.c.b16 %v352, %v351
    %357 = vmatprep.subr.bf16.mxu0 0
    %358 = vmatpush1.bf16.msra.mxu0 %v353
    %359 = vmatprep.subr.bf16.mxu0 0
    %360 = vmatpush1.bf16.msra.mxu0 %v354
    %361 = vmatprep.subr.bf16.mxu0 0
    %362 = vmatpush1.bf16.msra.mxu0 0
    %363 = vmatprep.subr.bf16.mxu0 0
    %364 = vmatpush1.bf16.msra.mxu0 0
    %365 = vmatprep.subr.bf16.mxu0 0
    %366 = vmatpush1.bf16.msra.mxu0 0
    %367 = vmatprep.subr.bf16.mxu0 0
    %368 = vmatpush1.bf16.msra.mxu0 0
    %369 = vmatprep.subr.bf16.mxu0 0
    %370 = vmatpush1.bf16.msra.mxu0 0
    %371 = vmatprep.subr.bf16.mxu0 0
    %372 = vmatpush1.bf16.msra.mxu0 0
    %373 = vmatprep.subr.bf16.mxu0 0
    %374 = vmatpush1.bf16.msra.mxu0 0
    %375 = vmatprep.subr.bf16.mxu0 0
    %376 = vmatpush1.bf16.msra.mxu0 0
    %377 = vmatprep.subr.bf16.mxu0 0
    %378 = vmatpush1.bf16.msra.mxu0 0
    %379 = vmatprep.subr.bf16.mxu0 0
    %380 = vmatpush1.bf16.msra.mxu0 0
    %381 = vmatprep.subr.bf16.mxu0 0
    %382 = vmatpush1.bf16.msra.mxu0 0
    %383 = vmatprep.subr.bf16.mxu0 0
    %384 = vmatpush1.bf16.msra.mxu0 0
    %385 = vmatprep.subr.bf16.mxu0 0
    %386 = vmatpush1.bf16.msra.mxu0 0
    %387 = vmatprep.subr.bf16.mxu0 0
    %388 = vmatpush1.bf16.msra.mxu0 0
    %389 = vmatprep.mubr.bf16.mxu0 0
    %390 = vmatmul.mubr.bf16.gmra.mrb[0].mxu0 %v197
    %v391 = vpop.f32.mrb[0].mxu0
    %v392 = vadd.f32 0.0, %v391
    %v393 = vpop.f32.mrb[0].mxu0
    %v394 = vpop.f32.mrb[0].mxu0
    %v395 = vpop.f32.mrb[0].mxu0
    %396 = vdwg.mxu0
    %v401 = vunpack.c.l.b16 %v337
    %v402 = vunpack.c.l.b16 %v338
    %v403 = vunpack.c.l.b16 %v339
    %v404 = vunpack.c.l.b16 %v340
    %v405 = vpack.c.b16 %v402, %v401
    %v406 = vpack.c.b16 %v404, %v403
    %409 = vmatprep.subr.bf16.mxu0 0
    %410 = vmatpush1.bf16.msra.mxu0 %v405
    %411 = vmatprep.subr.bf16.mxu0 0
    %412 = vmatpush1.bf16.msra.mxu0 %v406
    %413 = vmatprep.subr.bf16.mxu0 0
    %414 = vmatpush1.bf16.msra.mxu0 0
    %415 = vmatprep.subr.bf16.mxu0 0
    %416 = vmatpush1.bf16.msra.mxu0 0
    %417 = vmatprep.subr.bf16.mxu0 0
    %418 = vmatpush1.bf16.msra.mxu0 0
    %419 = vmatprep.subr.bf16.mxu0 0
    %420 = vmatpush1.bf16.msra.mxu0 0
    %421 = vmatprep.subr.bf16.mxu0 0
    %422 = vmatpush1.bf16.msra.mxu0 0
    %423 = vmatprep.subr.bf16.mxu0 0
    %424 = vmatpush1.bf16.msra.mxu0 0
    %425 = vmatprep.subr.bf16.mxu0 0
    %426 = vmatpush1.bf16.msra.mxu0 0
    %427 = vmatprep.subr.bf16.mxu0 0
    %428 = vmatpush1.bf16.msra.mxu0 0
    %429 = vmatprep.subr.bf16.mxu0 0
    %430 = vmatpush1.bf16.msra.mxu0 0
    %431 = vmatprep.subr.bf16.mxu0 0
    %432 = vmatpush1.bf16.msra.mxu0 0
    %433 = vmatprep.subr.bf16.mxu0 0
    %434 = vmatpush1.bf16.msra.mxu0 0
    %435 = vmatprep.subr.bf16.mxu0 0
    %436 = vmatpush1.bf16.msra.mxu0 0
    %437 = vmatprep.subr.bf16.mxu0 0
    %438 = vmatpush1.bf16.msra.mxu0 0
    %439 = vmatprep.subr.bf16.mxu0 0
    %440 = vmatpush1.bf16.msra.mxu0 0
    %441 = vmatprep.mubr.bf16.mxu0 0
    %442 = vmatmul.mubr.bf16.gmra.mrb[0].mxu0 %v270
    %v443 = vpop.f32.mrb[0].mxu0
    %v444 = vadd.f32 %v392, %v443
    %v445 = vpop.f32.mrb[0].mxu0
    %v446 = vpop.f32.mrb[0].mxu0
    %v447 = vpop.f32.mrb[0].mxu0
    %448 = vdwg.mxu0
    %v449 = vld [vmem:[%s7] sm:$0x1]
    %v451 = vlaneseq
    %v452 = vshrl.u32 %v451, 7
    %v453 = vsub.s32 0, %v452
    %v454 = vrot.slane %v449, %v453
    %v456 = vadd.f32 %v444, %v454
    %v457 = vxor.u32 %v456, 2147483648
    %v458 = vmul.f32 %v457, 1.442695
    %v459 = vpow.pop %v458
    %v460 = vadd.f32 %v459, 1.0
    %v461 = vrcp.pop %v460
    %v462 = vmul.f32 1.0, %v461
    %v463 = vtanh.pop %v456
    %v464 = vmul.f32 %v462, 0.0
    %466 = vrot.lane.b32.xlu0 %v463, 64
    %v467 = vpop.permute.xlu0 %466
    %v469 = vmul.f32 %v462, %v467
    %471 = vrot.lane.b32.xlu0 %v469, 32
    %v472 = vpop.permute.xlu0 %471
    %v474 = vadd.f32 %v464, %v472
    %v475 = vtanh.pop %v474
    %477 = vrot.lane.b32.xlu0 %v475, 64
    %v478 = vpop.permute.xlu0 %477
    %v480 = vmul.f32 %v462, %v478
    %482 = vrot.lane.b32.xlu0 %v480, 32
    %v483 = vpop.permute.xlu0 %482
    %485 = vst.msk [vmem:[#allocation3] sm:$0xff] %vm195, %v483
    %v486 = vld [vmem:[#allocation2 + $0x10] sm:$0xff]
    %v487 = vpack.c.bf16 %v336, %v336
    %v488 = vld [vmem:[%s3] sm:$0xf]
    %v489 = vld [vmem:[%s3 + $0x4] sm:$0xf]
    %v490 = vld [vmem:[%s3 + $0x8] sm:$0xf]
    %v491 = vld [vmem:[%s3 + $0xc] sm:$0xf]
    %493 = vrot.lane.b32.xlu0 %v487, 32
    %v494 = vpop.permute.xlu0 %493
    %v499 = vunpack.c.l.b16 %v488
    %v500 = vunpack.c.l.b16 %v489
    %v501 = vunpack.c.l.b16 %v490
    %v502 = vunpack.c.l.b16 %v491
    %v503 = vpack.c.b16 %v500, %v499
    %v504 = vpack.c.b16 %v502, %v501
    %v508 = vsel %vm195, %v494, 0
    %510 = vmatprep.subr.bf16.mxu0 0
    %511 = vmatpush1.bf16.msra.mxu0 %v503
    %512 = vmatprep.subr.bf16.mxu0 0
    %513 = vmatpush1.bf16.msra.mxu0 %v504
    %514 = vmatprep.subr.bf16.mxu0 0
    %515 = vmatpush1.bf16.msra.mxu0 0
    %516 = vmatprep.subr.bf16.mxu0 0
    %517 = vmatpush1.bf16.msra.mxu0 0
    %518 = vmatprep.subr.bf16.mxu0 0
    %519 = vmatpush1.bf16.msra.mxu0 0
    %520 = vmatprep.subr.bf16.mxu0 0
    %521 = vmatpush1.bf16.msra.mxu0 0
    %522 = vmatprep.subr.bf16.mxu0 0
    %523 = vmatpush1.bf16.msra.mxu0 0
    %524 = vmatprep.subr.bf16.mxu0 0
    %525 = vmatpush1.bf16.msra.mxu0 0
    %526 = vmatprep.subr.bf16.mxu0 0
    %527 = vmatpush1.bf16.msra.mxu0 0
    %528 = vmatprep.subr.bf16.mxu0 0
    %529 = vmatpush1.bf16.msra.mxu0 0
    %530 = vmatprep.subr.bf16.mxu0 0
    %531 = vmatpush1.bf16.msra.mxu0 0
    %532 = vmatprep.subr.bf16.mxu0 0
    %533 = vmatpush1.bf16.msra.mxu0 0
    %534 = vmatprep.subr.bf16.mxu0 0
    %535 = vmatpush1.bf16.msra.mxu0 0
    %536 = vmatprep.subr.bf16.mxu0 0
    %537 = vmatpush1.bf16.msra.mxu0 0
    %538 = vmatprep.subr.bf16.mxu0 0
    %539 = vmatpush1.bf16.msra.mxu0 0
    %540 = vmatprep.subr.bf16.mxu0 0
    %541 = vmatpush1.bf16.msra.mxu0 0
    %542 = vmatprep.mubr.bf16.mxu0 0
    %543 = vmatmul.mubr.bf16.gmra.mrb[0].mxu0 %v508
    %v544 = vpop.f32.mrb[0].mxu0
    %v545 = vadd.f32 0.0, %v544
    %v546 = vpop.f32.mrb[0].mxu0
    %v547 = vpop.f32.mrb[0].mxu0
    %v548 = vpop.f32.mrb[0].mxu0
    %549 = vdwg.mxu0
    %v550 = vadd.f32 %v486, %v545
    %v551 = vxor.u32 %v550, 2147483648
    %v552 = vmul.f32 %v551, 1.442695
    %v553 = vpow.pop %v552
    %v554 = vadd.f32 %v553, 1.0
    %v555 = vrcp.pop %v554
    %v556 = vmul.f32 1.0, %v555
    %v557 = vtanh.pop %v550
    %v558 = vmul.f32 %v556, %v330
    %560 = vrot.lane.b32.xlu0 %v557, 64
    %v561 = vpop.permute.xlu0 %560
    %v563 = vmul.f32 %v556, %v561
    %565 = vrot.lane.b32.xlu0 %v563, 32
    %v566 = vpop.permute.xlu0 %565
    %v568 = vadd.f32 %v558, %v566
    %v569 = vtanh.pop %v568
    %571 = vrot.lane.b32.xlu0 %v569, 64
    %v572 = vpop.permute.xlu0 %571
    %v574 = vmul.f32 %v556, %v572
    %v575 = vld [vmem:[%s5] sm:$0xf]
    %v576 = vld [vmem:[%s5 + $0x4] sm:$0xf]
    %v577 = vld [vmem:[%s5 + $0x8] sm:$0xf]
    %v578 = vld [vmem:[%s5 + $0xc] sm:$0xf]
    %v579 = vpack.c.bf16 %v480, %v480
    %v580 = vld [vmem:[%s6] sm:$0xf]
    %v581 = vld [vmem:[%s6 + $0x4] sm:$0xf]
    %v582 = vld [vmem:[%s6 + $0x8] sm:$0xf]
    %v583 = vld [vmem:[%s6 + $0xc] sm:$0xf]
    %585 = vrot.lane.b32.xlu0 %v579, 32
    %v586 = vpop.permute.xlu0 %585
    %v591 = vunpack.c.l.b16 %v580
    %v592 = vunpack.c.l.b16 %v581
    %v593 = vunpack.c.l.b16 %v582
    %v594 = vunpack.c.l.b16 %v583
    %v595 = vpack.c.b16 %v592, %v591
    %v596 = vpack.c.b16 %v594, %v593
    %v600 = vsel %vm195, %v586, 0
    %602 = vmatprep.subr.bf16.mxu0 0
    %603 = vmatpush1.bf16.msra.mxu0 %v595
    %604 = vmatprep.subr.bf16.mxu0 0
    %605 = vmatpush1.bf16.msra.mxu0 %v596
    %606 = vmatprep.subr.bf16.mxu0 0
    %607 = vmatpush1.bf16.msra.mxu0 0
    %608 = vmatprep.subr.bf16.mxu0 0
    %609 = vmatpush1.bf16.msra.mxu0 0
    %610 = vmatprep.subr.bf16.mxu0 0
    %611 = vmatpush1.bf16.msra.mxu0 0
    %612 = vmatprep.subr.bf16.mxu0 0
    %613 = vmatpush1.bf16.msra.mxu0 0
    %614 = vmatprep.subr.bf16.mxu0 0
    %615 = vmatpush1.bf16.msra.mxu0 0
    %616 = vmatprep.subr.bf16.mxu0 0
    %617 = vmatpush1.bf16.msra.mxu0 0
    %618 = vmatprep.subr.bf16.mxu0 0
    %619 = vmatpush1.bf16.msra.mxu0 0
    %620 = vmatprep.subr.bf16.mxu0 0
    %621 = vmatpush1.bf16.msra.mxu0 0
    %622 = vmatprep.subr.bf16.mxu0 0
    %623 = vmatpush1.bf16.msra.mxu0 0
    %624 = vmatprep.subr.bf16.mxu0 0
    %625 = vmatpush1.bf16.msra.mxu0 0
    %626 = vmatprep.subr.bf16.mxu0 0
    %627 = vmatpush1.bf16.msra.mxu0 0
    %628 = vmatprep.subr.bf16.mxu0 0
    %629 = vmatpush1.bf16.msra.mxu0 0
    %630 = vmatprep.subr.bf16.mxu0 0
    %631 = vmatpush1.bf16.msra.mxu0 0
    %632 = vmatprep.subr.bf16.mxu0 0
    %633 = vmatpush1.bf16.msra.mxu0 0
    %634 = vmatprep.mubr.bf16.mxu0 0
    %635 = vmatmul.mubr.bf16.gmra.mrb[0].mxu0 %v600
    %v636 = vpop.f32.mrb[0].mxu0
    %v637 = vadd.f32 0.0, %v636
    %v638 = vpop.f32.mrb[0].mxu0
    %v639 = vpop.f32.mrb[0].mxu0
    %v640 = vpop.f32.mrb[0].mxu0
    %641 = vdwg.mxu0
    %v646 = vunpack.c.l.b16 %v575
    %v647 = vunpack.c.l.b16 %v576
    %v648 = vunpack.c.l.b16 %v577
    %v649 = vunpack.c.l.b16 %v578
    %v650 = vpack.c.b16 %v647, %v646
    %v651 = vpack.c.b16 %v649, %v648
    %654 = vmatprep.subr.bf16.mxu0 0
    %655 = vmatpush1.bf16.msra.mxu0 %v650
    %656 = vmatprep.subr.bf16.mxu0 0
    %657 = vmatpush1.bf16.msra.mxu0 %v651
    %658 = vmatprep.subr.bf16.mxu0 0
    %659 = vmatpush1.bf16.msra.mxu0 0
    %660 = vmatprep.subr.bf16.mxu0 0
    %661 = vmatpush1.bf16.msra.mxu0 0
    %662 = vmatprep.subr.bf16.mxu0 0
    %663 = vmatpush1.bf16.msra.mxu0 0
    %664 = vmatprep.subr.bf16.mxu0 0
    %665 = vmatpush1.bf16.msra.mxu0 0
    %666 = vmatprep.subr.bf16.mxu0 0
    %667 = vmatpush1.bf16.msra.mxu0 0
    %668 = vmatprep.subr.bf16.mxu0 0
    %669 = vmatpush1.bf16.msra.mxu0 0
    %670 = vmatprep.subr.bf16.mxu0 0
    %671 = vmatpush1.bf16.msra.mxu0 0
    %672 = vmatprep.subr.bf16.mxu0 0
    %673 = vmatpush1.bf16.msra.mxu0 0
    %674 = vmatprep.subr.bf16.mxu0 0
    %675 = vmatpush1.bf16.msra.mxu0 0
    %676 = vmatprep.subr.bf16.mxu0 0
    %677 = vmatpush1.bf16.msra.mxu0 0
    %678 = vmatprep.subr.bf16.mxu0 0
    %679 = vmatpush1.bf16.msra.mxu0 0
    %680 = vmatprep.subr.bf16.mxu0 0
    %681 = vmatpush1.bf16.msra.mxu0 0
    %682 = vmatprep.subr.bf16.mxu0 0
    %683 = vmatpush1.bf16.msra.mxu0 0
    %684 = vmatprep.subr.bf16.mxu0 0
    %685 = vmatpush1.bf16.msra.mxu0 0
    %686 = vmatprep.mubr.bf16.mxu0 0
    %687 = vmatmul.mubr.bf16.gmra.mrb[0].mxu0 %v508
    %v688 = vpop.f32.mrb[0].mxu0
    %v689 = vadd.f32 %v637, %v688
    %v690 = vpop.f32.mrb[0].mxu0
    %v691 = vpop.f32.mrb[0].mxu0
    %v692 = vpop.f32.mrb[0].mxu0
    %693 = vdwg.mxu0
    %v694 = vld [vmem:[%s7] sm:$0x1]
    %v696 = vlaneseq
    %v697 = vshrl.u32 %v696, 7
    %v698 = vsub.s32 0, %v697
    %v699 = vrot.slane %v694, %v698
    %v701 = vadd.f32 %v689, %v699
    %v702 = vxor.u32 %v701, 2147483648
    %v703 = vmul.f32 %v702, 1.442695
    %v704 = vpow.pop %v703
    %v705 = vadd.f32 %v704, 1.0
    %v706 = vrcp.pop %v705
    %v707 = vmul.f32 1.0, %v706
    %v708 = vtanh.pop %v701
    %v709 = vmul.f32 %v707, %v474
    %711 = vrot.lane.b32.xlu0 %v708, 64
    %v712 = vpop.permute.xlu0 %711
    %v714 = vmul.f32 %v707, %v712
    %716 = vrot.lane.b32.xlu0 %v714, 32
    %v717 = vpop.permute.xlu0 %716
    %v719 = vadd.f32 %v709, %v717
    %v720 = vtanh.pop %v719
    %722 = vrot.lane.b32.xlu0 %v720, 64
    %v723 = vpop.permute.xlu0 %722
    %v725 = vmul.f32 %v707, %v723
    %727 = vrot.lane.b32.xlu0 %v725, 32
    %v728 = vpop.permute.xlu0 %727
    %730 = vst.msk [vmem:[#allocation3 + $0x8] sm:$0xff] %vm195, %v728
    %v731 = vld [vmem:[#allocation2 + $0x18] sm:$0xff]
    %v732 = vpack.c.bf16 %v574, %v574
    %v733 = vld [vmem:[%s3] sm:$0xf]
    %v734 = vld [vmem:[%s3 + $0x4] sm:$0xf]
    %v735 = vld [vmem:[%s3 + $0x8] sm:$0xf]
    %v736 = vld [vmem:[%s3 + $0xc] sm:$0xf]
    %738 = vrot.lane.b32.xlu0 %v732, 32
    %v739 = vpop.permute.xlu0 %738
    %v744 = vunpack.c.l.b16 %v733
    %v745 = vunpack.c.l.b16 %v734
    %v746 = vunpack.c.l.b16 %v735
    %v747 = vunpack.c.l.b16 %v736
    %v748 = vpack.c.b16 %v745, %v744
    %v749 = vpack.c.b16 %v747, %v746
    %v753 = vsel %vm195, %v739, 0
    %755 = vmatprep.subr.bf16.mxu0 0
    %756 = vmatpush1.bf16.msra.mxu0 %v748
    %757 = vmatprep.subr.bf16.mxu0 0
    %758 = vmatpush1.bf16.msra.mxu0 %v749
    %759 = vmatprep.subr.bf16.mxu0 0
    %760 = vmatpush1.bf16.msra.mxu0 0
    %761 = vmatprep.subr.bf16.mxu0 0
    %762 = vmatpush1.bf16.msra.mxu0 0
    %763 = vmatprep.subr.bf16.mxu0 0
    %764 = vmatpush1.bf16.msra.mxu0 0
    %765 = vmatprep.subr.bf16.mxu0 0
    %766 = vmatpush1.bf16.msra.mxu0 0
    %767 = vmatprep.subr.bf16.mxu0 0
    %768 = vmatpush1.bf16.msra.mxu0 0
    %769 = vmatprep.subr.bf16.mxu0 0
    %770 = vmatpush1.bf16.msra.mxu0 0
    %771 = vmatprep.subr.bf16.mxu0 0
    %772 = vmatpush1.bf16.msra.mxu0 0
    %773 = vmatprep.subr.bf16.mxu0 0
    %774 = vmatpush1.bf16.msra.mxu0 0
    %775 = vmatprep.subr.bf16.mxu0 0
    %776 = vmatpush1.bf16.msra.mxu0 0
    %777 = vmatprep.subr.bf16.mxu0 0
    %778 = vmatpush1.bf16.msra.mxu0 0
    %779 = vmatprep.subr.bf16.mxu0 0
    %780 = vmatpush1.bf16.msra.mxu0 0
    %781 = vmatprep.subr.bf16.mxu0 0
    %782 = vmatpush1.bf16.msra.mxu0 0
    %783 = vmatprep.subr.bf16.mxu0 0
    %784 = vmatpush1.bf16.msra.mxu0 0
    %785 = vmatprep.subr.bf16.mxu0 0
    %786 = vmatpush1.bf16.msra.mxu0 0
    %787 = vmatprep.mubr.bf16.mxu0 0
    %788 = vmatmul.mubr.bf16.gmra.mrb[0].mxu0 %v753
    %v789 = vpop.f32.mrb[0].mxu0
    %v790 = vadd.f32 0.0, %v789
    %v791 = vpop.f32.mrb[0].mxu0
    %v792 = vpop.f32.mrb[0].mxu0
    %v793 = vpop.f32.mrb[0].mxu0
    %794 = vdwg.mxu0
    %v795 = vadd.f32 %v731, %v790
    %v796 = vxor.u32 %v795, 2147483648
    %v797 = vmul.f32 %v796, 1.442695
    %v798 = vpow.pop %v797
    %v799 = vadd.f32 %v798, 1.0
    %v800 = vrcp.pop %v799
    %v801 = vmul.f32 1.0, %v800
    %v802 = vtanh.pop %v795
    %v803 = vmul.f32 %v801, %v568
    %805 = vrot.lane.b32.xlu0 %v802, 64
    %v806 = vpop.permute.xlu0 %805
    %v808 = vmul.f32 %v801, %v806
    %810 = vrot.lane.b32.xlu0 %v808, 32
    %v811 = vpop.permute.xlu0 %810
    %v813 = vadd.f32 %v803, %v811
    %v814 = vtanh.pop %v813
    %816 = vrot.lane.b32.xlu0 %v814, 64
    %v817 = vpop.permute.xlu0 %816
    %v819 = vmul.f32 %v801, %v817
    %v820 = vld [vmem:[%s5] sm:$0xf]
    %v821 = vld [vmem:[%s5 + $0x4] sm:$0xf]
    %v822 = vld [vmem:[%s5 + $0x8] sm:$0xf]
    %v823 = vld [vmem:[%s5 + $0xc] sm:$0xf]
    %v824 = vpack.c.bf16 %v725, %v725
    %v825 = vld [vmem:[%s6] sm:$0xf]
    %v826 = vld [vmem:[%s6 + $0x4] sm:$0xf]
    %v827 = vld [vmem:[%s6 + $0x8] sm:$0xf]
    %v828 = vld [vmem:[%s6 + $0xc] sm:$0xf]
    %830 = vrot.lane.b32.xlu0 %v824, 32
    %v831 = vpop.permute.xlu0 %830
    %v836 = vunpack.c.l.b16 %v825
    %v837 = vunpack.c.l.b16 %v826
    %v838 = vunpack.c.l.b16 %v827
    %v839 = vunpack.c.l.b16 %v828
    %v840 = vpack.c.b16 %v837, %v836
    %v841 = vpack.c.b16 %v839, %v838
    %v845 = vsel %vm195, %v831, 0
    %847 = vmatprep.subr.bf16.mxu0 0
    %848 = vmatpush1.bf16.msra.mxu0 %v840
    %849 = vmatprep.subr.bf16.mxu0 0
    %850 = vmatpush1.bf16.msra.mxu0 %v841
    %851 = vmatprep.subr.bf16.mxu0 0
    %852 = vmatpush1.bf16.msra.mxu0 0
    %853 = vmatprep.subr.bf16.mxu0 0
    %854 = vmatpush1.bf16.msra.mxu0 0
    %855 = vmatprep.subr.bf16.mxu0 0
    %856 = vmatpush1.bf16.msra.mxu0 0
    %857 = vmatprep.subr.bf16.mxu0 0
    %858 = vmatpush1.bf16.msra.mxu0 0
    %859 = vmatprep.subr.bf16.mxu0 0
    %860 = vmatpush1.bf16.msra.mxu0 0
    %861 = vmatprep.subr.bf16.mxu0 0
    %862 = vmatpush1.bf16.msra.mxu0 0
    %863 = vmatprep.subr.bf16.mxu0 0
    %864 = vmatpush1.bf16.msra.mxu0 0
    %865 = vmatprep.subr.bf16.mxu0 0
    %866 = vmatpush1.bf16.msra.mxu0 0
    %867 = vmatprep.subr.bf16.mxu0 0
    %868 = vmatpush1.bf16.msra.mxu0 0
    %869 = vmatprep.subr.bf16.mxu0 0
    %870 = vmatpush1.bf16.msra.mxu0 0
    %871 = vmatprep.subr.bf16.mxu0 0
    %872 = vmatpush1.bf16.msra.mxu0 0
    %873 = vmatprep.subr.bf16.mxu0 0
    %874 = vmatpush1.bf16.msra.mxu0 0
    %875 = vmatprep.subr.bf16.mxu0 0
    %876 = vmatpush1.bf16.msra.mxu0 0
    %877 = vmatprep.subr.bf16.mxu0 0
    %878 = vmatpush1.bf16.msra.mxu0 0
    %879 = vmatprep.mubr.bf16.mxu0 0
    %880 = vmatmul.mubr.bf16.gmra.mrb[0].mxu0 %v845
    %v881 = vpop.f32.mrb[0].mxu0
    %v882 = vadd.f32 0.0, %v881
    %v883 = vpop.f32.mrb[0].mxu0
    %v884 = vpop.f32.mrb[0].mxu0
    %v885 = vpop.f32.mrb[0].mxu0
    %886 = vdwg.mxu0
    %v891 = vunpack.c.l.b16 %v820
    %v892 = vunpack.c.l.b16 %v821
    %v893 = vunpack.c.l.b16 %v822
    %v894 = vunpack.c.l.b16 %v823
    %v895 = vpack.c.b16 %v892, %v891
    %v896 = vpack.c.b16 %v894, %v893
    %899 = vmatprep.subr.bf16.mxu0 0
    %900 = vmatpush1.bf16.msra.mxu0 %v895
    %901 = vmatprep.subr.bf16.mxu0 0
    %902 = vmatpush1.bf16.msra.mxu0 %v896
    %903 = vmatprep.subr.bf16.mxu0 0
    %904 = vmatpush1.bf16.msra.mxu0 0
    %905 = vmatprep.subr.bf16.mxu0 0
    %906 = vmatpush1.bf16.msra.mxu0 0
    %907 = vmatprep.subr.bf16.mxu0 0
    %908 = vmatpush1.bf16.msra.mxu0 0
    %909 = vmatprep.subr.bf16.mxu0 0
    %910 = vmatpush1.bf16.msra.mxu0 0
    %911 = vmatprep.subr.bf16.mxu0 0
    %912 = vmatpush1.bf16.msra.mxu0 0
    %913 = vmatprep.subr.bf16.mxu0 0
    %914 = vmatpush1.bf16.msra.mxu0 0
    %915 = vmatprep.subr.bf16.mxu0 0
    %916 = vmatpush1.bf16.msra.mxu0 0
    %917 = vmatprep.subr.bf16.mxu0 0
    %918 = vmatpush1.bf16.msra.mxu0 0
    %919 = vmatprep.subr.bf16.mxu0 0
    %920 = vmatpush1.bf16.msra.mxu0 0
    %921 = vmatprep.subr.bf16.mxu0 0
    %922 = vmatpush1.bf16.msra.mxu0 0
    %923 = vmatprep.subr.bf16.mxu0 0
    %924 = vmatpush1.bf16.msra.mxu0 0
    %925 = vmatprep.subr.bf16.mxu0 0
    %926 = vmatpush1.bf16.msra.mxu0 0
    %927 = vmatprep.subr.bf16.mxu0 0
    %928 = vmatpush1.bf16.msra.mxu0 0
    %929 = vmatprep.subr.bf16.mxu0 0
    %930 = vmatpush1.bf16.msra.mxu0 0
    %931 = vmatprep.mubr.bf16.mxu0 0
    %932 = vmatmul.mubr.bf16.gmra.mrb[0].mxu0 %v753
    %v933 = vpop.f32.mrb[0].mxu0
    %v934 = vadd.f32 %v882, %v933
    %v935 = vpop.f32.mrb[0].mxu0
    %v936 = vpop.f32.mrb[0].mxu0
    %v937 = vpop.f32.mrb[0].mxu0
    %938 = vdwg.mxu0
    %v939 = vld [vmem:[%s7] sm:$0x1]
    %v941 = vlaneseq
    %v942 = vshrl.u32 %v941, 7
    %v943 = vsub.s32 0, %v942
    %v944 = vrot.slane %v939, %v943
    %v946 = vadd.f32 %v934, %v944
    %v947 = vxor.u32 %v946, 2147483648
    %v948 = vmul.f32 %v947, 1.442695
    %v949 = vpow.pop %v948
    %v950 = vadd.f32 %v949, 1.0
    %v951 = vrcp.pop %v950
    %v952 = vmul.f32 1.0, %v951
    %v953 = vtanh.pop %v946
    %v954 = vmul.f32 %v952, %v719
    %956 = vrot.lane.b32.xlu0 %v953, 64
    %v957 = vpop.permute.xlu0 %956
    %v959 = vmul.f32 %v952, %v957
    %961 = vrot.lane.b32.xlu0 %v959, 32
    %v962 = vpop.permute.xlu0 %961
    %v964 = vadd.f32 %v954, %v962
    %v965 = vtanh.pop %v964
    %967 = vrot.lane.b32.xlu0 %v965, 64
    %v968 = vpop.permute.xlu0 %967
    %v970 = vmul.f32 %v952, %v968
    %972 = vrot.lane.b32.xlu0 %v970, 32
    %v973 = vpop.permute.xlu0 %972
    %975 = vst.msk [vmem:[#allocation3 + $0x10] sm:$0xff] %vm195, %v973
    %v976 = vld [vmem:[#allocation2 + $0x20] sm:$0xff]
    %v977 = vpack.c.bf16 %v819, %v819
    %v978 = vld [vmem:[%s3] sm:$0xf]
    %v979 = vld [vmem:[%s3 + $0x4] sm:$0xf]
    %v980 = vld [vmem:[%s3 + $0x8] sm:$0xf]
    %v981 = vld [vmem:[%s3 + $0xc] sm:$0xf]
    %983 = vrot.lane.b32.xlu0 %v977, 32
    %v984 = vpop.permute.xlu0 %983
    %v989 = vunpack.c.l.b16 %v978
    %v990 = vunpack.c.l.b16 %v979
    %v991 = vunpack.c.l.b16 %v980
    %v992 = vunpack.c.l.b16 %v981
    %v993 = vpack.c.b16 %v990, %v989
    %v994 = vpack.c.b16 %v992, %v991
    %v998 = vsel %vm195, %v984, 0
    %1000 = vmatprep.subr.bf16.mxu0 0
    %1001 = vmatpush1.bf16.msra.mxu0 %v993
    %1002 = vmatprep.subr.bf16.mxu0 0
    %1003 = vmatpush1.bf16.msra.mxu0 %v994
    %1004 = vmatprep.subr.bf16.mxu0 0
    %1005 = vmatpush1.bf16.msra.mxu0 0
    %1006 = vmatprep.subr.bf16.mxu0 0
    %1007 = vmatpush1.bf16.msra.mxu0 0
    %1008 = vmatprep.subr.bf16.mxu0 0
    %1009 = vmatpush1.bf16.msra.mxu0 0
    %1010 = vmatprep.subr.bf16.mxu0 0
    %1011 = vmatpush1.bf16.msra.mxu0 0
    %1012 = vmatprep.subr.bf16.mxu0 0
    %1013 = vmatpush1.bf16.msra.mxu0 0
    %1014 = vmatprep.subr.bf16.mxu0 0
    %1015 = vmatpush1.bf16.msra.mxu0 0
    %1016 = vmatprep.subr.bf16.mxu0 0
    %1017 = vmatpush1.bf16.msra.mxu0 0
    %1018 = vmatprep.subr.bf16.mxu0 0
    %1019 = vmatpush1.bf16.msra.mxu0 0
    %1020 = vmatprep.subr.bf16.mxu0 0
    %1021 = vmatpush1.bf16.msra.mxu0 0
    %1022 = vmatprep.subr.bf16.mxu0 0
    %1023 = vmatpush1.bf16.msra.mxu0 0
    %1024 = vmatprep.subr.bf16.mxu0 0
    %1025 = vmatpush1.bf16.msra.mxu0 0
    %1026 = vmatprep.subr.bf16.mxu0 0
    %1027 = vmatpush1.bf16.msra.mxu0 0
    %1028 = vmatprep.subr.bf16.mxu0 0
    %1029 = vmatpush1.bf16.msra.mxu0 0
    %1030 = vmatprep.subr.bf16.mxu0 0
    %1031 = vmatpush1.bf16.msra.mxu0 0
    %1032 = vmatprep.mubr.bf16.mxu0 0
    %1033 = vmatmul.mubr.bf16.gmra.mrb[0].mxu0 %v998
    %v1034 = vpop.f32.mrb[0].mxu0
    %v1035 = vadd.f32 0.0, %v1034
    %v1036 = vpop.f32.mrb[0].mxu0
    %v1037 = vpop.f32.mrb[0].mxu0
    %v1038 = vpop.f32.mrb[0].mxu0
    %1039 = vdwg.mxu0
    %v1040 = vadd.f32 %v976, %v1035
    %v1041 = vxor.u32 %v1040, 2147483648
    %v1042 = vmul.f32 %v1041, 1.442695
    %v1043 = vpow.pop %v1042
    %v1044 = vadd.f32 %v1043, 1.0
    %v1045 = vrcp.pop %v1044
    %v1046 = vmul.f32 1.0, %v1045
    %v1047 = vtanh.pop %v1040
    %v1048 = vmul.f32 %v1046, %v813
    %1050 = vrot.lane.b32.xlu0 %v1047, 64
    %v1051 = vpop.permute.xlu0 %1050
    %v1053 = vmul.f32 %v1046, %v1051
    %1055 = vrot.lane.b32.xlu0 %v1053, 32
    %v1056 = vpop.permute.xlu0 %1055
    %v1058 = vadd.f32 %v1048, %v1056
    %v1059 = vtanh.pop %v1058
    %1061 = vrot.lane.b32.xlu0 %v1059, 64
    %v1062 = vpop.permute.xlu0 %1061
    %v1064 = vmul.f32 %v1046, %v1062
    %v1065 = vld [vmem:[%s5] sm:$0xf]
    %v1066 = vld [vmem:[%s5 + $0x4] sm:$0xf]
    %v1067 = vld [vmem:[%s5 + $0x8] sm:$0xf]
    %v1068 = vld [vmem:[%s5 + $0xc] sm:$0xf]
    %v1069 = vpack.c.bf16 %v970, %v970
    %v1070 = vld [vmem:[%s6] sm:$0xf]
    %v1071 = vld [vmem:[%s6 + $0x4] sm:$0xf]
    %v1072 = vld [vmem:[%s6 + $0x8] sm:$0xf]
    %v1073 = vld [vmem:[%s6 + $0xc] sm:$0xf]
    %1075 = vrot.lane.b32.xlu0 %v1069, 32
    %v1076 = vpop.permute.xlu0 %1075
    %v1081 = vunpack.c.l.b16 %v1070
    %v1082 = vunpack.c.l.b16 %v1071
    %v1083 = vunpack.c.l.b16 %v1072
    %v1084 = vunpack.c.l.b16 %v1073
    %v1085 = vpack.c.b16 %v1082, %v1081
    %v1086 = vpack.c.b16 %v1084, %v1083
    %v1090 = vsel %vm195, %v1076, 0
    %1092 = vmatprep.subr.bf16.mxu0 0
    %1093 = vmatpush1.bf16.msra.mxu0 %v1085
    %1094 = vmatprep.subr.bf16.mxu0 0
    %1095 = vmatpush1.bf16.msra.mxu0 %v1086
    %1096 = vmatprep.subr.bf16.mxu0 0
    %1097 = vmatpush1.bf16.msra.mxu0 0
    %1098 = vmatprep.subr.bf16.mxu0 0
    %1099 = vmatpush1.bf16.msra.mxu0 0
    %1100 = vmatprep.subr.bf16.mxu0 0
    %1101 = vmatpush1.bf16.msra.mxu0 0
    %1102 = vmatprep.subr.bf16.mxu0 0
    %1103 = vmatpush1.bf16.msra.mxu0 0
    %1104 = vmatprep.subr.bf16.mxu0 0
    %1105 = vmatpush1.bf16.msra.mxu0 0
    %1106 = vmatprep.subr.bf16.mxu0 0
    %1107 = vmatpush1.bf16.msra.mxu0 0
    %1108 = vmatprep.subr.bf16.mxu0 0
    %1109 = vmatpush1.bf16.msra.mxu0 0
    %1110 = vmatprep.subr.bf16.mxu0 0
    %1111 = vmatpush1.bf16.msra.mxu0 0
    %1112 = vmatprep.subr.bf16.mxu0 0
    %1113 = vmatpush1.bf16.msra.mxu0 0
    %1114 = vmatprep.subr.bf16.mxu0 0
    %1115 = vmatpush1.bf16.msra.mxu0 0
    %1116 = vmatprep.subr.bf16.mxu0 0
    %1117 = vmatpush1.bf16.msra.mxu0 0
    %1118 = vmatprep.subr.bf16.mxu0 0
    %1119 = vmatpush1.bf16.msra.mxu0 0
    %1120 = vmatprep.subr.bf16.mxu0 0
    %1121 = vmatpush1.bf16.msra.mxu0 0
    %1122 = vmatprep.subr.bf16.mxu0 0
    %1123 = vmatpush1.bf16.msra.mxu0 0
    %1124 = vmatprep.mubr.bf16.mxu0 0
    %1125 = vmatmul.mubr.bf16.gmra.mrb[0].mxu0 %v1090
    %v1126 = vpop.f32.mrb[0].mxu0
    %v1127 = vadd.f32 0.0, %v1126
    %v1128 = vpop.f32.mrb[0].mxu0
    %v1129 = vpop.f32.mrb[0].mxu0
    %v1130 = vpop.f32.mrb[0].mxu0
    %1131 = vdwg.mxu0
    %v1136 = vunpack.c.l.b16 %v1065
    %v1137 = vunpack.c.l.b16 %v1066
    %v1138 = vunpack.c.l.b16 %v1067
    %v1139 = vunpack.c.l.b16 %v1068
    %v1140 = vpack.c.b16 %v1137, %v1136
    %v1141 = vpack.c.b16 %v1139, %v1138
    %1144 = vmatprep.subr.bf16.mxu0 0
    %1145 = vmatpush1.bf16.msra.mxu0 %v1140
    %1146 = vmatprep.subr.bf16.mxu0 0
    %1147 = vmatpush1.bf16.msra.mxu0 %v1141
    %1148 = vmatprep.subr.bf16.mxu0 0
    %1149 = vmatpush1.bf16.msra.mxu0 0
    %1150 = vmatprep.subr.bf16.mxu0 0
    %1151 = vmatpush1.bf16.msra.mxu0 0
    %1152 = vmatprep.subr.bf16.mxu0 0
    %1153 = vmatpush1.bf16.msra.mxu0 0
    %1154 = vmatprep.subr.bf16.mxu0 0
    %1155 = vmatpush1.bf16.msra.mxu0 0
    %1156 = vmatprep.subr.bf16.mxu0 0
    %1157 = vmatpush1.bf16.msra.mxu0 0
    %1158 = vmatprep.subr.bf16.mxu0 0
    %1159 = vmatpush1.bf16.msra.mxu0 0
    %1160 = vmatprep.subr.bf16.mxu0 0
    %1161 = vmatpush1.bf16.msra.mxu0 0
    %1162 = vmatprep.subr.bf16.mxu0 0
    %1163 = vmatpush1.bf16.msra.mxu0 0
    %1164 = vmatprep.subr.bf16.mxu0 0
    %1165 = vmatpush1.bf16.msra.mxu0 0
    %1166 = vmatprep.subr.bf16.mxu0 0
    %1167 = vmatpush1.bf16.msra.mxu0 0
    %1168 = vmatprep.subr.bf16.mxu0 0
    %1169 = vmatpush1.bf16.msra.mxu0 0
    %1170 = vmatprep.subr.bf16.mxu0 0
    %1171 = vmatpush1.bf16.msra.mxu0 0
    %1172 = vmatprep.subr.bf16.mxu0 0
    %1173 = vmatpush1.bf16.msra.mxu0 0
    %1174 = vmatprep.subr.bf16.mxu0 0
    %1175 = vmatpush1.bf16.msra.mxu0 0
    %1176 = vmatprep.mubr.bf16.mxu0 0
    %1177 = vmatmul.mubr.bf16.gmra.mrb[0].mxu0 %v998
    %v1178 = vpop.f32.mrb[0].mxu0
    %v1179 = vadd.f32 %v1127, %v1178
    %v1180 = vpop.f32.mrb[0].mxu0
    %v1181 = vpop.f32.mrb[0].mxu0
    %v1182 = vpop.f32.mrb[0].mxu0
    %1183 = vdwg.mxu0
    %v1184 = vld [vmem:[%s7] sm:$0x1]
    %v1186 = vlaneseq
    %v1187 = vshrl.u32 %v1186, 7
    %v1188 = vsub.s32 0, %v1187
    %v1189 = vrot.slane %v1184, %v1188
    %v1191 = vadd.f32 %v1179, %v1189
    %v1192 = vxor.u32 %v1191, 2147483648
    %v1193 = vmul.f32 %v1192, 1.442695
    %v1194 = vpow.pop %v1193
    %v1195 = vadd.f32 %v1194, 1.0
    %v1196 = vrcp.pop %v1195
    %v1197 = vmul.f32 1.0, %v1196
    %v1198 = vtanh.pop %v1191
    %v1199 = vmul.f32 %v1197, %v964
    %1201 = vrot.lane.b32.xlu0 %v1198, 64
    %v1202 = vpop.permute.xlu0 %1201
    %v1204 = vmul.f32 %v1197, %v1202
    %1206 = vrot.lane.b32.xlu0 %v1204, 32
    %v1207 = vpop.permute.xlu0 %1206
    %v1209 = vadd.f32 %v1199, %v1207
    %v1210 = vtanh.pop %v1209
    %1212 = vrot.lane.b32.xlu0 %v1210, 64
    %v1213 = vpop.permute.xlu0 %1212
    %v1215 = vmul.f32 %v1197, %v1213
    %1217 = vrot.lane.b32.xlu0 %v1215, 32
    %v1218 = vpop.permute.xlu0 %1217
    %1220 = vst.msk [vmem:[#allocation3 + $0x18] sm:$0xff] %vm195, %v1218
    %v1221 = vld [vmem:[#allocation2 + $0x28] sm:$0xff]
    %v1222 = vpack.c.bf16 %v1064, %v1064
    %v1223 = vld [vmem:[%s3] sm:$0xf]
    %v1224 = vld [vmem:[%s3 + $0x4] sm:$0xf]
    %v1225 = vld [vmem:[%s3 + $0x8] sm:$0xf]
    %v1226 = vld [vmem:[%s3 + $0xc] sm:$0xf]
    %1228 = vrot.lane.b32.xlu0 %v1222, 32
    %v1229 = vpop.permute.xlu0 %1228
    %v1234 = vunpack.c.l.b16 %v1223
    %v1235 = vunpack.c.l.b16 %v1224
    %v1236 = vunpack.c.l.b16 %v1225
    %v1237 = vunpack.c.l.b16 %v1226
    %v1238 = vpack.c.b16 %v1235, %v1234
    %v1239 = vpack.c.b16 %v1237, %v1236
    %v1243 = vsel %vm195, %v1229, 0
    %1245 = vmatprep.subr.bf16.mxu0 0
    %1246 = vmatpush1.bf16.msra.mxu0 %v1238
    %1247 = vmatprep.subr.bf16.mxu0 0
    %1248 = vmatpush1.bf16.msra.mxu0 %v1239
    %1249 = vmatprep.subr.bf16.mxu0 0
    %1250 = vmatpush1.bf16.msra.mxu0 0
    %1251 = vmatprep.subr.bf16.mxu0 0
    %1252 = vmatpush1.bf16.msra.mxu0 0
    %1253 = vmatprep.subr.bf16.mxu0 0
    %1254 = vmatpush1.bf16.msra.mxu0 0
    %1255 = vmatprep.subr.bf16.mxu0 0
    %1256 = vmatpush1.bf16.msra.mxu0 0
    %1257 = vmatprep.subr.bf16.mxu0 0
    %1258 = vmatpush1.bf16.msra.mxu0 0
    %1259 = vmatprep.subr.bf16.mxu0 0
    %1260 = vmatpush1.bf16.msra.mxu0 0
    %1261 = vmatprep.subr.bf16.mxu0 0
    %1262 = vmatpush1.bf16.msra.mxu0 0
    %1263 = vmatprep.subr.bf16.mxu0 0
    %1264 = vmatpush1.bf16.msra.mxu0 0
    %1265 = vmatprep.subr.bf16.mxu0 0
    %1266 = vmatpush1.bf16.msra.mxu0 0
    %1267 = vmatprep.subr.bf16.mxu0 0
    %1268 = vmatpush1.bf16.msra.mxu0 0
    %1269 = vmatprep.subr.bf16.mxu0 0
    %1270 = vmatpush1.bf16.msra.mxu0 0
    %1271 = vmatprep.subr.bf16.mxu0 0
    %1272 = vmatpush1.bf16.msra.mxu0 0
    %1273 = vmatprep.subr.bf16.mxu0 0
    %1274 = vmatpush1.bf16.msra.mxu0 0
    %1275 = vmatprep.subr.bf16.mxu0 0
    %1276 = vmatpush1.bf16.msra.mxu0 0
    %1277 = vmatprep.mubr.bf16.mxu0 0
    %1278 = vmatmul.mubr.bf16.gmra.mrb[0].mxu0 %v1243
    %v1279 = vpop.f32.mrb[0].mxu0
    %v1280 = vadd.f32 0.0, %v1279
    %v1281 = vpop.f32.mrb[0].mxu0
    %v1282 = vpop.f32.mrb[0].mxu0
    %v1283 = vpop.f32.mrb[0].mxu0
    %1284 = vdwg.mxu0
    %v1285 = vadd.f32 %v1221, %v1280
    %v1286 = vxor.u32 %v1285, 2147483648
    %v1287 = vmul.f32 %v1286, 1.442695
    %v1288 = vpow.pop %v1287
    %v1289 = vadd.f32 %v1288, 1.0
    %v1290 = vrcp.pop %v1289
    %v1291 = vmul.f32 1.0, %v1290
    %v1292 = vtanh.pop %v1285
    %v1293 = vmul.f32 %v1291, %v1058
    %1295 = vrot.lane.b32.xlu0 %v1292, 64
    %v1296 = vpop.permute.xlu0 %1295
    %v1298 = vmul.f32 %v1291, %v1296
    %1300 = vrot.lane.b32.xlu0 %v1298, 32
    %v1301 = vpop.permute.xlu0 %1300
    %v1303 = vadd.f32 %v1293, %v1301
    %v1304 = vtanh.pop %v1303
    %1306 = vrot.lane.b32.xlu0 %v1304, 64
    %v1307 = vpop.permute.xlu0 %1306
    %v1309 = vmul.f32 %v1291, %v1307
    %v1310 = vld [vmem:[%s5] sm:$0xf]
    %v1311 = vld [vmem:[%s5 + $0x4] sm:$0xf]
    %v1312 = vld [vmem:[%s5 + $0x8] sm:$0xf]
    %v1313 = vld [vmem:[%s5 + $0xc] sm:$0xf]
    %v1314 = vpack.c.bf16 %v1215, %v1215
    %v1315 = vld [vmem:[%s6] sm:$0xf]
    %v1316 = vld [vmem:[%s6 + $0x4] sm:$0xf]
    %v1317 = vld [vmem:[%s6 + $0x8] sm:$0xf]
    %v1318 = vld [vmem:[%s6 + $0xc] sm:$0xf]
    %1320 = vrot.lane.b32.xlu0 %v1314, 32
    %v1321 = vpop.permute.xlu0 %1320
    %v1326 = vunpack.c.l.b16 %v1315
    %v1327 = vunpack.c.l.b16 %v1316
    %v1328 = vunpack.c.l.b16 %v1317
    %v1329 = vunpack.c.l.b16 %v1318
    %v1330 = vpack.c.b16 %v1327, %v1326
    %v1331 = vpack.c.b16 %v1329, %v1328
    %v1335 = vsel %vm195, %v1321, 0
    %1337 = vmatprep.subr.bf16.mxu0 0
    %1338 = vmatpush1.bf16.msra.mxu0 %v1330
    %1339 = vmatprep.subr.bf16.mxu0 0
    %1340 = vmatpush1.bf16.msra.mxu0 %v1331
    %1341 = vmatprep.subr.bf16.mxu0 0
    %1342 = vmatpush1.bf16.msra.mxu0 0
    %1343 = vmatprep.subr.bf16.mxu0 0
    %1344 = vmatpush1.bf16.msra.mxu0 0
    %1345 = vmatprep.subr.bf16.mxu0 0
    %1346 = vmatpush1.bf16.msra.mxu0 0
    %1347 = vmatprep.subr.bf16.mxu0 0
    %1348 = vmatpush1.bf16.msra.mxu0 0
    %1349 = vmatprep.subr.bf16.mxu0 0
    %1350 = vmatpush1.bf16.msra.mxu0 0
    %1351 = vmatprep.subr.bf16.mxu0 0
    %1352 = vmatpush1.bf16.msra.mxu0 0
    %1353 = vmatprep.subr.bf16.mxu0 0
    %1354 = vmatpush1.bf16.msra.mxu0 0
    %1355 = vmatprep.subr.bf16.mxu0 0
    %1356 = vmatpush1.bf16.msra.mxu0 0
    %1357 = vmatprep.subr.bf16.mxu0 0
    %1358 = vmatpush1.bf16.msra.mxu0 0
    %1359 = vmatprep.subr.bf16.mxu0 0
    %1360 = vmatpush1.bf16.msra.mxu0 0
    %1361 = vmatprep.subr.bf16.mxu0 0
    %1362 = vmatpush1.bf16.msra.mxu0 0
    %1363 = vmatprep.subr.bf16.mxu0 0
    %1364 = vmatpush1.bf16.msra.mxu0 0
    %1365 = vmatprep.subr.bf16.mxu0 0
    %1366 = vmatpush1.bf16.msra.mxu0 0
    %1367 = vmatprep.subr.bf16.mxu0 0
    %1368 = vmatpush1.bf16.msra.mxu0 0
    %1369 = vmatprep.mubr.bf16.mxu0 0
    %1370 = vmatmul.mubr.bf16.gmra.mrb[0].mxu0 %v1335
    %v1371 = vpop.f32.mrb[0].mxu0
    %v1372 = vadd.f32 0.0, %v1371
    %v1373 = vpop.f32.mrb[0].mxu0
    %v1374 = vpop.f32.mrb[0].mxu0
    %v1375 = vpop.f32.mrb[0].mxu0
    %1376 = vdwg.mxu0
    %v1381 = vunpack.c.l.b16 %v1310
    %v1382 = vunpack.c.l.b16 %v1311
    %v1383 = vunpack.c.l.b16 %v1312
    %v1384 = vunpack.c.l.b16 %v1313
    %v1385 = vpack.c.b16 %v1382, %v1381
    %v1386 = vpack.c.b16 %v1384, %v1383
    %1389 = vmatprep.subr.bf16.mxu0 0
    %1390 = vmatpush1.bf16.msra.mxu0 %v1385
    %1391 = vmatprep.subr.bf16.mxu0 0
    %1392 = vmatpush1.bf16.msra.mxu0 %v1386
    %1393 = vmatprep.subr.bf16.mxu0 0
    %1394 = vmatpush1.bf16.msra.mxu0 0
    %1395 = vmatprep.subr.bf16.mxu0 0
    %1396 = vmatpush1.bf16.msra.mxu0 0
    %1397 = vmatprep.subr.bf16.mxu0 0
    %1398 = vmatpush1.bf16.msra.mxu0 0
    %1399 = vmatprep.subr.bf16.mxu0 0
    %1400 = vmatpush1.bf16.msra.mxu0 0
    %1401 = vmatprep.subr.bf16.mxu0 0
    %1402 = vmatpush1.bf16.msra.mxu0 0
    %1403 = vmatprep.subr.bf16.mxu0 0
    %1404 = vmatpush1.bf16.msra.mxu0 0
    %1405 = vmatprep.subr.bf16.mxu0 0
    %1406 = vmatpush1.bf16.msra.mxu0 0
    %1407 = vmatprep.subr.bf16.mxu0 0
    %1408 = vmatpush1.bf16.msra.mxu0 0
    %1409 = vmatprep.subr.bf16.mxu0 0
    %1410 = vmatpush1.bf16.msra.mxu0 0
    %1411 = vmatprep.subr.bf16.mxu0 0
    %1412 = vmatpush1.bf16.msra.mxu0 0
    %1413 = vmatprep.subr.bf16.mxu0 0
    %1414 = vmatpush1.bf16.msra.mxu0 0
    %1415 = vmatprep.subr.bf16.mxu0 0
    %1416 = vmatpush1.bf16.msra.mxu0 0
    %1417 = vmatprep.subr.bf16.mxu0 0
    %1418 = vmatpush1.bf16.msra.mxu0 0
    %1419 = vmatprep.subr.bf16.mxu0 0
    %1420 = vmatpush1.bf16.msra.mxu0 0
    %1421 = vmatprep.mubr.bf16.mxu0 0
    %1422 = vmatmul.mubr.bf16.gmra.mrb[0].mxu0 %v1243
    %v1423 = vpop.f32.mrb[0].mxu0
    %v1424 = vadd.f32 %v1372, %v1423
    %v1425 = vpop.f32.mrb[0].mxu0
    %v1426 = vpop.f32.mrb[0].mxu0
    %v1427 = vpop.f32.mrb[0].mxu0
    %1428 = vdwg.mxu0
    %v1429 = vld [vmem:[%s7] sm:$0x1]
    %v1431 = vlaneseq
    %v1432 = vshrl.u32 %v1431, 7
    %v1433 = vsub.s32 0, %v1432
    %v1434 = vrot.slane %v1429, %v1433
    %v1436 = vadd.f32 %v1424, %v1434
    %v1437 = vxor.u32 %v1436, 2147483648
    %v1438 = vmul.f32 %v1437, 1.442695
    %v1439 = vpow.pop %v1438
    %v1440 = vadd.f32 %v1439, 1.0
    %v1441 = vrcp.pop %v1440
    %v1442 = vmul.f32 1.0, %v1441
    %v1443 = vtanh.pop %v1436
    %v1444 = vmul.f32 %v1442, %v1209
    %1446 = vrot.lane.b32.xlu0 %v1443, 64
    %v1447 = vpop.permute.xlu0 %1446
    %v1449 = vmul.f32 %v1442, %v1447
    %1451 = vrot.lane.b32.xlu0 %v1449, 32
    %v1452 = vpop.permute.xlu0 %1451
    %v1454 = vadd.f32 %v1444, %v1452
    %v1455 = vtanh.pop %v1454
    %1457 = vrot.lane.b32.xlu0 %v1455, 64
    %v1458 = vpop.permute.xlu0 %1457
    %v1460 = vmul.f32 %v1442, %v1458
    %1462 = vrot.lane.b32.xlu0 %v1460, 32
    %v1463 = vpop.permute.xlu0 %1462
    %1465 = vst.msk [vmem:[#allocation3 + $0x20] sm:$0xff] %vm195, %v1463
    %v1466 = vld [vmem:[#allocation2 + $0x30] sm:$0xff]
    %v1467 = vpack.c.bf16 %v1309, %v1309
    %v1468 = vld [vmem:[%s3] sm:$0xf]
    %v1469 = vld [vmem:[%s3 + $0x4] sm:$0xf]
    %v1470 = vld [vmem:[%s3 + $0x8] sm:$0xf]
    %v1471 = vld [vmem:[%s3 + $0xc] sm:$0xf]
    %1473 = vrot.lane.b32.xlu0 %v1467, 32
    %v1474 = vpop.permute.xlu0 %1473
    %v1479 = vunpack.c.l.b16 %v1468
    %v1480 = vunpack.c.l.b16 %v1469
    %v1481 = vunpack.c.l.b16 %v1470
    %v1482 = vunpack.c.l.b16 %v1471
    %v1483 = vpack.c.b16 %v1480, %v1479
    %v1484 = vpack.c.b16 %v1482, %v1481
    %v1488 = vsel %vm195, %v1474, 0
    %1490 = vmatprep.subr.bf16.mxu0 0
    %1491 = vmatpush1.bf16.msra.mxu0 %v1483
    %1492 = vmatprep.subr.bf16.mxu0 0
    %1493 = vmatpush1.bf16.msra.mxu0 %v1484
    %1494 = vmatprep.subr.bf16.mxu0 0
    %1495 = vmatpush1.bf16.msra.mxu0 0
    %1496 = vmatprep.subr.bf16.mxu0 0
    %1497 = vmatpush1.bf16.msra.mxu0 0
    %1498 = vmatprep.subr.bf16.mxu0 0
    %1499 = vmatpush1.bf16.msra.mxu0 0
    %1500 = vmatprep.subr.bf16.mxu0 0
    %1501 = vmatpush1.bf16.msra.mxu0 0
    %1502 = vmatprep.subr.bf16.mxu0 0
    %1503 = vmatpush1.bf16.msra.mxu0 0
    %1504 = vmatprep.subr.bf16.mxu0 0
    %1505 = vmatpush1.bf16.msra.mxu0 0
    %1506 = vmatprep.subr.bf16.mxu0 0
    %1507 = vmatpush1.bf16.msra.mxu0 0
    %1508 = vmatprep.subr.bf16.mxu0 0
    %1509 = vmatpush1.bf16.msra.mxu0 0
    %1510 = vmatprep.subr.bf16.mxu0 0
    %1511 = vmatpush1.bf16.msra.mxu0 0
    %1512 = vmatprep.subr.bf16.mxu0 0
    %1513 = vmatpush1.bf16.msra.mxu0 0
    %1514 = vmatprep.subr.bf16.mxu0 0
    %1515 = vmatpush1.bf16.msra.mxu0 0
    %1516 = vmatprep.subr.bf16.mxu0 0
    %1517 = vmatpush1.bf16.msra.mxu0 0
    %1518 = vmatprep.subr.bf16.mxu0 0
    %1519 = vmatpush1.bf16.msra.mxu0 0
    %1520 = vmatprep.subr.bf16.mxu0 0
    %1521 = vmatpush1.bf16.msra.mxu0 0
    %1522 = vmatprep.mubr.bf16.mxu0 0
    %1523 = vmatmul.mubr.bf16.gmra.mrb[0].mxu0 %v1488
    %v1524 = vpop.f32.mrb[0].mxu0
    %v1525 = vadd.f32 0.0, %v1524
    %v1526 = vpop.f32.mrb[0].mxu0
    %v1527 = vpop.f32.mrb[0].mxu0
    %v1528 = vpop.f32.mrb[0].mxu0
    %1529 = vdwg.mxu0
    %v1530 = vadd.f32 %v1466, %v1525
    %v1531 = vxor.u32 %v1530, 2147483648
    %v1532 = vmul.f32 %v1531, 1.442695
    %v1533 = vpow.pop %v1532
    %v1534 = vadd.f32 %v1533, 1.0
    %v1535 = vrcp.pop %v1534
    %v1536 = vmul.f32 1.0, %v1535
    %v1537 = vtanh.pop %v1530
    %v1538 = vmul.f32 %v1536, %v1303
    %1540 = vrot.lane.b32.xlu0 %v1537, 64
    %v1541 = vpop.permute.xlu0 %1540
    %v1543 = vmul.f32 %v1536, %v1541
    %1545 = vrot.lane.b32.xlu0 %v1543, 32
    %v1546 = vpop.permute.xlu0 %1545
    %v1548 = vadd.f32 %v1538, %v1546
    %v1549 = vtanh.pop %v1548
    %1551 = vrot.lane.b32.xlu0 %v1549, 64
    %v1552 = vpop.permute.xlu0 %1551
    %v1554 = vmul.f32 %v1536, %v1552
    %v1555 = vld [vmem:[%s5] sm:$0xf]
    %v1556 = vld [vmem:[%s5 + $0x4] sm:$0xf]
    %v1557 = vld [vmem:[%s5 + $0x8] sm:$0xf]
    %v1558 = vld [vmem:[%s5 + $0xc] sm:$0xf]
    %v1559 = vpack.c.bf16 %v1460, %v1460
    %v1560 = vld [vmem:[%s6] sm:$0xf]
    %v1561 = vld [vmem:[%s6 + $0x4] sm:$0xf]
    %v1562 = vld [vmem:[%s6 + $0x8] sm:$0xf]
    %v1563 = vld [vmem:[%s6 + $0xc] sm:$0xf]
    %1565 = vrot.lane.b32.xlu0 %v1559, 32
    %v1566 = vpop.permute.xlu0 %1565
    %v1571 = vunpack.c.l.b16 %v1560
    %v1572 = vunpack.c.l.b16 %v1561
    %v1573 = vunpack.c.l.b16 %v1562
    %v1574 = vunpack.c.l.b16 %v1563
    %v1575 = vpack.c.b16 %v1572, %v1571
    %v1576 = vpack.c.b16 %v1574, %v1573
    %v1580 = vsel %vm195, %v1566, 0
    %1582 = vmatprep.subr.bf16.mxu0 0
    %1583 = vmatpush1.bf16.msra.mxu0 %v1575
    %1584 = vmatprep.subr.bf16.mxu0 0
    %1585 = vmatpush1.bf16.msra.mxu0 %v1576
    %1586 = vmatprep.subr.bf16.mxu0 0
    %1587 = vmatpush1.bf16.msra.mxu0 0
    %1588 = vmatprep.subr.bf16.mxu0 0
    %1589 = vmatpush1.bf16.msra.mxu0 0
    %1590 = vmatprep.subr.bf16.mxu0 0
    %1591 = vmatpush1.bf16.msra.mxu0 0
    %1592 = vmatprep.subr.bf16.mxu0 0
    %1593 = vmatpush1.bf16.msra.mxu0 0
    %1594 = vmatprep.subr.bf16.mxu0 0
    %1595 = vmatpush1.bf16.msra.mxu0 0
    %1596 = vmatprep.subr.bf16.mxu0 0
    %1597 = vmatpush1.bf16.msra.mxu0 0
    %1598 = vmatprep.subr.bf16.mxu0 0
    %1599 = vmatpush1.bf16.msra.mxu0 0
    %1600 = vmatprep.subr.bf16.mxu0 0
    %1601 = vmatpush1.bf16.msra.mxu0 0
    %1602 = vmatprep.subr.bf16.mxu0 0
    %1603 = vmatpush1.bf16.msra.mxu0 0
    %1604 = vmatprep.subr.bf16.mxu0 0
    %1605 = vmatpush1.bf16.msra.mxu0 0
    %1606 = vmatprep.subr.bf16.mxu0 0
    %1607 = vmatpush1.bf16.msra.mxu0 0
    %1608 = vmatprep.subr.bf16.mxu0 0
    %1609 = vmatpush1.bf16.msra.mxu0 0
    %1610 = vmatprep.subr.bf16.mxu0 0
    %1611 = vmatpush1.bf16.msra.mxu0 0
    %1612 = vmatprep.subr.bf16.mxu0 0
    %1613 = vmatpush1.bf16.msra.mxu0 0
    %1614 = vmatprep.mubr.bf16.mxu0 0
    %1615 = vmatmul.mubr.bf16.gmra.mrb[0].mxu0 %v1580
    %v1616 = vpop.f32.mrb[0].mxu0
    %v1617 = vadd.f32 0.0, %v1616
    %v1618 = vpop.f32.mrb[0].mxu0
    %v1619 = vpop.f32.mrb[0].mxu0
    %v1620 = vpop.f32.mrb[0].mxu0
    %1621 = vdwg.mxu0
    %v1626 = vunpack.c.l.b16 %v1555
    %v1627 = vunpack.c.l.b16 %v1556
    %v1628 = vunpack.c.l.b16 %v1557
    %v1629 = vunpack.c.l.b16 %v1558
    %v1630 = vpack.c.b16 %v1627, %v1626
    %v1631 = vpack.c.b16 %v1629, %v1628
    %1634 = vmatprep.subr.bf16.mxu0 0
    %1635 = vmatpush1.bf16.msra.mxu0 %v1630
    %1636 = vmatprep.subr.bf16.mxu0 0
    %1637 = vmatpush1.bf16.msra.mxu0 %v1631
    %1638 = vmatprep.subr.bf16.mxu0 0
    %1639 = vmatpush1.bf16.msra.mxu0 0
    %1640 = vmatprep.subr.bf16.mxu0 0
    %1641 = vmatpush1.bf16.msra.mxu0 0
    %1642 = vmatprep.subr.bf16.mxu0 0
    %1643 = vmatpush1.bf16.msra.mxu0 0
    %1644 = vmatprep.subr.bf16.mxu0 0
    %1645 = vmatpush1.bf16.msra.mxu0 0
    %1646 = vmatprep.subr.bf16.mxu0 0
    %1647 = vmatpush1.bf16.msra.mxu0 0
    %1648 = vmatprep.subr.bf16.mxu0 0
    %1649 = vmatpush1.bf16.msra.mxu0 0
    %1650 = vmatprep.subr.bf16.mxu0 0
    %1651 = vmatpush1.bf16.msra.mxu0 0
    %1652 = vmatprep.subr.bf16.mxu0 0
    %1653 = vmatpush1.bf16.msra.mxu0 0
    %1654 = vmatprep.subr.bf16.mxu0 0
    %1655 = vmatpush1.bf16.msra.mxu0 0
    %1656 = vmatprep.subr.bf16.mxu0 0
    %1657 = vmatpush1.bf16.msra.mxu0 0
    %1658 = vmatprep.subr.bf16.mxu0 0
    %1659 = vmatpush1.bf16.msra.mxu0 0
    %1660 = vmatprep.subr.bf16.mxu0 0
    %1661 = vmatpush1.bf16.msra.mxu0 0
    %1662 = vmatprep.subr.bf16.mxu0 0
    %1663 = vmatpush1.bf16.msra.mxu0 0
    %1664 = vmatprep.subr.bf16.mxu0 0
    %1665 = vmatpush1.bf16.msra.mxu0 0
    %1666 = vmatprep.mubr.bf16.mxu0 0
    %1667 = vmatmul.mubr.bf16.gmra.mrb[0].mxu0 %v1488
    %v1668 = vpop.f32.mrb[0].mxu0
    %v1669 = vadd.f32 %v1617, %v1668
    %v1670 = vpop.f32.mrb[0].mxu0
    %v1671 = vpop.f32.mrb[0].mxu0
    %v1672 = vpop.f32.mrb[0].mxu0
    %1673 = vdwg.mxu0
    %v1674 = vld [vmem:[%s7] sm:$0x1]
    %v1676 = vlaneseq
    %v1677 = vshrl.u32 %v1676, 7
    %v1678 = vsub.s32 0, %v1677
    %v1679 = vrot.slane %v1674, %v1678
    %v1681 = vadd.f32 %v1669, %v1679
    %v1682 = vxor.u32 %v1681, 2147483648
    %v1683 = vmul.f32 %v1682, 1.442695
    %v1684 = vpow.pop %v1683
    %v1685 = vadd.f32 %v1684, 1.0
    %v1686 = vrcp.pop %v1685
    %v1687 = vmul.f32 1.0, %v1686
    %v1688 = vtanh.pop %v1681
    %v1689 = vmul.f32 %v1687, %v1454
    %1691 = vrot.lane.b32.xlu0 %v1688, 64
    %v1692 = vpop.permute.xlu0 %1691
    %v1694 = vmul.f32 %v1687, %v1692
    %1696 = vrot.lane.b32.xlu0 %v1694, 32
    %v1697 = vpop.permute.xlu0 %1696
    %v1699 = vadd.f32 %v1689, %v1697
    %v1700 = vtanh.pop %v1699
    %1702 = vrot.lane.b32.xlu0 %v1700, 64
    %v1703 = vpop.permute.xlu0 %1702
    %v1705 = vmul.f32 %v1687, %v1703
    %1707 = vrot.lane.b32.xlu0 %v1705, 32
    %v1708 = vpop.permute.xlu0 %1707
    %1710 = vst.msk [vmem:[#allocation3 + $0x28] sm:$0xff] %vm195, %v1708
    %v1711 = vld [vmem:[#allocation2 + $0x38] sm:$0xff]
    %v1712 = vpack.c.bf16 %v1554, %v1554
    %v1713 = vld [vmem:[%s3] sm:$0xf]
    %v1714 = vld [vmem:[%s3 + $0x4] sm:$0xf]
    %v1715 = vld [vmem:[%s3 + $0x8] sm:$0xf]
    %v1716 = vld [vmem:[%s3 + $0xc] sm:$0xf]
    %1718 = vrot.lane.b32.xlu0 %v1712, 32
    %v1719 = vpop.permute.xlu0 %1718
    %v1724 = vunpack.c.l.b16 %v1713
    %v1725 = vunpack.c.l.b16 %v1714
    %v1726 = vunpack.c.l.b16 %v1715
    %v1727 = vunpack.c.l.b16 %v1716
    %v1728 = vpack.c.b16 %v1725, %v1724
    %v1729 = vpack.c.b16 %v1727, %v1726
    %v1733 = vsel %vm195, %v1719, 0
    %1735 = vmatprep.subr.bf16.mxu0 0
    %1736 = vmatpush1.bf16.msra.mxu0 %v1728
    %1737 = vmatprep.subr.bf16.mxu0 0
    %1738 = vmatpush1.bf16.msra.mxu0 %v1729
    %1739 = vmatprep.subr.bf16.mxu0 0
    %1740 = vmatpush1.bf16.msra.mxu0 0
    %1741 = vmatprep.subr.bf16.mxu0 0
    %1742 = vmatpush1.bf16.msra.mxu0 0
    %1743 = vmatprep.subr.bf16.mxu0 0
    %1744 = vmatpush1.bf16.msra.mxu0 0
    %1745 = vmatprep.subr.bf16.mxu0 0
    %1746 = vmatpush1.bf16.msra.mxu0 0
    %1747 = vmatprep.subr.bf16.mxu0 0
    %1748 = vmatpush1.bf16.msra.mxu0 0
    %1749 = vmatprep.subr.bf16.mxu0 0
    %1750 = vmatpush1.bf16.msra.mxu0 0
    %1751 = vmatprep.subr.bf16.mxu0 0
    %1752 = vmatpush1.bf16.msra.mxu0 0
    %1753 = vmatprep.subr.bf16.mxu0 0
    %1754 = vmatpush1.bf16.msra.mxu0 0
    %1755 = vmatprep.subr.bf16.mxu0 0
    %1756 = vmatpush1.bf16.msra.mxu0 0
    %1757 = vmatprep.subr.bf16.mxu0 0
    %1758 = vmatpush1.bf16.msra.mxu0 0
    %1759 = vmatprep.subr.bf16.mxu0 0
    %1760 = vmatpush1.bf16.msra.mxu0 0
    %1761 = vmatprep.subr.bf16.mxu0 0
    %1762 = vmatpush1.bf16.msra.mxu0 0
    %1763 = vmatprep.subr.bf16.mxu0 0
    %1764 = vmatpush1.bf16.msra.mxu0 0
    %1765 = vmatprep.subr.bf16.mxu0 0
    %1766 = vmatpush1.bf16.msra.mxu0 0
    %1767 = vmatprep.mubr.bf16.mxu0 0
    %1768 = vmatmul.mubr.bf16.gmra.mrb[0].mxu0 %v1733
    %v1769 = vpop.f32.mrb[0].mxu0
    %v1770 = vadd.f32 0.0, %v1769
    %v1771 = vpop.f32.mrb[0].mxu0
    %v1772 = vpop.f32.mrb[0].mxu0
    %v1773 = vpop.f32.mrb[0].mxu0
    %1774 = vdwg.mxu0
    %v1775 = vadd.f32 %v1711, %v1770
    %v1776 = vxor.u32 %v1775, 2147483648
    %v1777 = vmul.f32 %v1776, 1.442695
    %v1778 = vpow.pop %v1777
    %v1779 = vadd.f32 %v1778, 1.0
    %v1780 = vrcp.pop %v1779
    %v1781 = vmul.f32 1.0, %v1780
    %v1782 = vtanh.pop %v1775
    %v1783 = vmul.f32 %v1781, %v1548
    %1785 = vrot.lane.b32.xlu0 %v1782, 64
    %v1786 = vpop.permute.xlu0 %1785
    %v1788 = vmul.f32 %v1781, %v1786
    %1790 = vrot.lane.b32.xlu0 %v1788, 32
    %v1791 = vpop.permute.xlu0 %1790
    %v1793 = vadd.f32 %v1783, %v1791
    %v1794 = vtanh.pop %v1793
    %1796 = vrot.lane.b32.xlu0 %v1794, 64
    %v1797 = vpop.permute.xlu0 %1796
    %v1799 = vmul.f32 %v1781, %v1797
    %v1800 = vld [vmem:[%s5] sm:$0xf]
    %v1801 = vld [vmem:[%s5 + $0x4] sm:$0xf]
    %v1802 = vld [vmem:[%s5 + $0x8] sm:$0xf]
    %v1803 = vld [vmem:[%s5 + $0xc] sm:$0xf]
    %v1804 = vpack.c.bf16 %v1705, %v1705
    %v1805 = vld [vmem:[%s6] sm:$0xf]
    %v1806 = vld [vmem:[%s6 + $0x4] sm:$0xf]
    %v1807 = vld [vmem:[%s6 + $0x8] sm:$0xf]
    %v1808 = vld [vmem:[%s6 + $0xc] sm:$0xf]
    %1810 = vrot.lane.b32.xlu0 %v1804, 32
    %v1811 = vpop.permute.xlu0 %1810
    %v1816 = vunpack.c.l.b16 %v1805
    %v1817 = vunpack.c.l.b16 %v1806
    %v1818 = vunpack.c.l.b16 %v1807
    %v1819 = vunpack.c.l.b16 %v1808
    %v1820 = vpack.c.b16 %v1817, %v1816
    %v1821 = vpack.c.b16 %v1819, %v1818
    %v1825 = vsel %vm195, %v1811, 0
    %1827 = vmatprep.subr.bf16.mxu0 0
    %1828 = vmatpush1.bf16.msra.mxu0 %v1820
    %1829 = vmatprep.subr.bf16.mxu0 0
    %1830 = vmatpush1.bf16.msra.mxu0 %v1821
    %1831 = vmatprep.subr.bf16.mxu0 0
    %1832 = vmatpush1.bf16.msra.mxu0 0
    %1833 = vmatprep.subr.bf16.mxu0 0
    %1834 = vmatpush1.bf16.msra.mxu0 0
    %1835 = vmatprep.subr.bf16.mxu0 0
    %1836 = vmatpush1.bf16.msra.mxu0 0
    %1837 = vmatprep.subr.bf16.mxu0 0
    %1838 = vmatpush1.bf16.msra.mxu0 0
    %1839 = vmatprep.subr.bf16.mxu0 0
    %1840 = vmatpush1.bf16.msra.mxu0 0
    %1841 = vmatprep.subr.bf16.mxu0 0
    %1842 = vmatpush1.bf16.msra.mxu0 0
    %1843 = vmatprep.subr.bf16.mxu0 0
    %1844 = vmatpush1.bf16.msra.mxu0 0
    %1845 = vmatprep.subr.bf16.mxu0 0
    %1846 = vmatpush1.bf16.msra.mxu0 0
    %1847 = vmatprep.subr.bf16.mxu0 0
    %1848 = vmatpush1.bf16.msra.mxu0 0
    %1849 = vmatprep.subr.bf16.mxu0 0
    %1850 = vmatpush1.bf16.msra.mxu0 0
    %1851 = vmatprep.subr.bf16.mxu0 0
    %1852 = vmatpush1.bf16.msra.mxu0 0
    %1853 = vmatprep.subr.bf16.mxu0 0
    %1854 = vmatpush1.bf16.msra.mxu0 0
    %1855 = vmatprep.subr.bf16.mxu0 0
    %1856 = vmatpush1.bf16.msra.mxu0 0
    %1857 = vmatprep.subr.bf16.mxu0 0
    %1858 = vmatpush1.bf16.msra.mxu0 0
    %1859 = vmatprep.mubr.bf16.mxu0 0
    %1860 = vmatmul.mubr.bf16.gmra.mrb[0].mxu0 %v1825
    %v1861 = vpop.f32.mrb[0].mxu0
    %v1862 = vadd.f32 0.0, %v1861
    %v1863 = vpop.f32.mrb[0].mxu0
    %v1864 = vpop.f32.mrb[0].mxu0
    %v1865 = vpop.f32.mrb[0].mxu0
    %1866 = vdwg.mxu0
    %v1871 = vunpack.c.l.b16 %v1800
    %v1872 = vunpack.c.l.b16 %v1801
    %v1873 = vunpack.c.l.b16 %v1802
    %v1874 = vunpack.c.l.b16 %v1803
    %v1875 = vpack.c.b16 %v1872, %v1871
    %v1876 = vpack.c.b16 %v1874, %v1873
    %1879 = vmatprep.subr.bf16.mxu0 0
    %1880 = vmatpush1.bf16.msra.mxu0 %v1875
    %1881 = vmatprep.subr.bf16.mxu0 0
    %1882 = vmatpush1.bf16.msra.mxu0 %v1876
    %1883 = vmatprep.subr.bf16.mxu0 0
    %1884 = vmatpush1.bf16.msra.mxu0 0
    %1885 = vmatprep.subr.bf16.mxu0 0
    %1886 = vmatpush1.bf16.msra.mxu0 0
    %1887 = vmatprep.subr.bf16.mxu0 0
    %1888 = vmatpush1.bf16.msra.mxu0 0
    %1889 = vmatprep.subr.bf16.mxu0 0
    %1890 = vmatpush1.bf16.msra.mxu0 0
    %1891 = vmatprep.subr.bf16.mxu0 0
    %1892 = vmatpush1.bf16.msra.mxu0 0
    %1893 = vmatprep.subr.bf16.mxu0 0
    %1894 = vmatpush1.bf16.msra.mxu0 0
    %1895 = vmatprep.subr.bf16.mxu0 0
    %1896 = vmatpush1.bf16.msra.mxu0 0
    %1897 = vmatprep.subr.bf16.mxu0 0
    %1898 = vmatpush1.bf16.msra.mxu0 0
    %1899 = vmatprep.subr.bf16.mxu0 0
    %1900 = vmatpush1.bf16.msra.mxu0 0
    %1901 = vmatprep.subr.bf16.mxu0 0
    %1902 = vmatpush1.bf16.msra.mxu0 0
    %1903 = vmatprep.subr.bf16.mxu0 0
    %1904 = vmatpush1.bf16.msra.mxu0 0
    %1905 = vmatprep.subr.bf16.mxu0 0
    %1906 = vmatpush1.bf16.msra.mxu0 0
    %1907 = vmatprep.subr.bf16.mxu0 0
    %1908 = vmatpush1.bf16.msra.mxu0 0
    %1909 = vmatprep.subr.bf16.mxu0 0
    %1910 = vmatpush1.bf16.msra.mxu0 0
    %1911 = vmatprep.mubr.bf16.mxu0 0
    %1912 = vmatmul.mubr.bf16.gmra.mrb[0].mxu0 %v1733
    %v1913 = vpop.f32.mrb[0].mxu0
    %v1914 = vadd.f32 %v1862, %v1913
    %v1915 = vpop.f32.mrb[0].mxu0
    %v1916 = vpop.f32.mrb[0].mxu0
    %v1917 = vpop.f32.mrb[0].mxu0
    %1918 = vdwg.mxu0
    %v1919 = vld [vmem:[%s7] sm:$0x1]
    %v1921 = vlaneseq
    %v1922 = vshrl.u32 %v1921, 7
    %v1923 = vsub.s32 0, %v1922
    %v1924 = vrot.slane %v1919, %v1923
    %v1926 = vadd.f32 %v1914, %v1924
    %v1927 = vxor.u32 %v1926, 2147483648
    %v1928 = vmul.f32 %v1927, 1.442695
    %v1929 = vpow.pop %v1928
    %v1930 = vadd.f32 %v1929, 1.0
    %v1931 = vrcp.pop %v1930
    %v1932 = vmul.f32 1.0, %v1931
    %v1933 = vtanh.pop %v1926
    %v1934 = vmul.f32 %v1932, %v1699
    %1936 = vrot.lane.b32.xlu0 %v1933, 64
    %v1937 = vpop.permute.xlu0 %1936
    %v1939 = vmul.f32 %v1932, %v1937
    %1941 = vrot.lane.b32.xlu0 %v1939, 32
    %v1942 = vpop.permute.xlu0 %1941
    %v1944 = vadd.f32 %v1934, %v1942
    %v1945 = vtanh.pop %v1944
    %1947 = vrot.lane.b32.xlu0 %v1945, 64
    %v1948 = vpop.permute.xlu0 %1947
    %v1950 = vmul.f32 %v1932, %v1948
    %1952 = vrot.lane.b32.xlu0 %v1950, 32
    %v1953 = vpop.permute.xlu0 %1952
    %1955 = vst.msk [vmem:[#allocation3 + $0x30] sm:$0xff] %vm195, %v1953
    %v1956 = vpack.c.bf16 %v1799, %v1799
    %v1957 = vld [vmem:[%s5] sm:$0xf]
    %v1958 = vld [vmem:[%s5 + $0x4] sm:$0xf]
    %v1959 = vld [vmem:[%s5 + $0x8] sm:$0xf]
    %v1960 = vld [vmem:[%s5 + $0xc] sm:$0xf]
    %v1961 = vpack.c.bf16 %v1950, %v1950
    %v1962 = vld [vmem:[%s6] sm:$0xf]
    %v1963 = vld [vmem:[%s6 + $0x4] sm:$0xf]
    %v1964 = vld [vmem:[%s6 + $0x8] sm:$0xf]
    %v1965 = vld [vmem:[%s6 + $0xc] sm:$0xf]
    %1967 = vrot.lane.b32.xlu0 %v1961, 32
    %v1968 = vpop.permute.xlu0 %1967
    %v1973 = vunpack.c.l.b16 %v1962
    %v1974 = vunpack.c.l.b16 %v1963
    %v1975 = vunpack.c.l.b16 %v1964
    %v1976 = vunpack.c.l.b16 %v1965
    %v1977 = vpack.c.b16 %v1974, %v1973
    %v1978 = vpack.c.b16 %v1976, %v1975
    %v1982 = vsel %vm195, %v1968, 0
    %1984 = vmatprep.subr.bf16.mxu0 0
    %1985 = vmatpush1.bf16.msra.mxu0 %v1977
    %1986 = vmatprep.subr.bf16.mxu0 0
    %1987 = vmatpush1.bf16.msra.mxu0 %v1978
    %1988 = vmatprep.subr.bf16.mxu0 0
    %1989 = vmatpush1.bf16.msra.mxu0 0
    %1990 = vmatprep.subr.bf16.mxu0 0
    %1991 = vmatpush1.bf16.msra.mxu0 0
    %1992 = vmatprep.subr.bf16.mxu0 0
    %1993 = vmatpush1.bf16.msra.mxu0 0
    %1994 = vmatprep.subr.bf16.mxu0 0
    %1995 = vmatpush1.bf16.msra.mxu0 0
    %1996 = vmatprep.subr.bf16.mxu0 0
    %1997 = vmatpush1.bf16.msra.mxu0 0
    %1998 = vmatprep.subr.bf16.mxu0 0
    %1999 = vmatpush1.bf16.msra.mxu0 0
    %2000 = vmatprep.subr.bf16.mxu0 0
    %2001 = vmatpush1.bf16.msra.mxu0 0
    %2002 = vmatprep.subr.bf16.mxu0 0
    %2003 = vmatpush1.bf16.msra.mxu0 0
    %2004 = vmatprep.subr.bf16.mxu0 0
    %2005 = vmatpush1.bf16.msra.mxu0 0
    %2006 = vmatprep.subr.bf16.mxu0 0
    %2007 = vmatpush1.bf16.msra.mxu0 0
    %2008 = vmatprep.subr.bf16.mxu0 0
    %2009 = vmatpush1.bf16.msra.mxu0 0
    %2010 = vmatprep.subr.bf16.mxu0 0
    %2011 = vmatpush1.bf16.msra.mxu0 0
    %2012 = vmatprep.subr.bf16.mxu0 0
    %2013 = vmatpush1.bf16.msra.mxu0 0
    %2014 = vmatprep.subr.bf16.mxu0 0
    %2015 = vmatpush1.bf16.msra.mxu0 0
    %2016 = vmatprep.mubr.bf16.mxu0 0
    %2017 = vmatmul.mubr.bf16.gmra.mrb[0].mxu0 %v1982
    %v2018 = vpop.f32.mrb[0].mxu0
    %v2019 = vadd.f32 0.0, %v2018
    %v2020 = vpop.f32.mrb[0].mxu0
    %v2021 = vpop.f32.mrb[0].mxu0
    %v2022 = vpop.f32.mrb[0].mxu0
    %2023 = vdwg.mxu0
    %2025 = vrot.lane.b32.xlu0 %v1956, 32
    %v2026 = vpop.permute.xlu0 %2025
    %v2031 = vunpack.c.l.b16 %v1957
    %v2032 = vunpack.c.l.b16 %v1958
    %v2033 = vunpack.c.l.b16 %v1959
    %v2034 = vunpack.c.l.b16 %v1960
    %v2035 = vpack.c.b16 %v2032, %v2031
    %v2036 = vpack.c.b16 %v2034, %v2033
    %v2040 = vsel %vm195, %v2026, 0
    %2042 = vmatprep.subr.bf16.mxu0 0
    %2043 = vmatpush1.bf16.msra.mxu0 %v2035
    %2044 = vmatprep.subr.bf16.mxu0 0
    %2045 = vmatpush1.bf16.msra.mxu0 %v2036
    %2046 = vmatprep.subr.bf16.mxu0 0
    %2047 = vmatpush1.bf16.msra.mxu0 0
    %2048 = vmatprep.subr.bf16.mxu0 0
    %2049 = vmatpush1.bf16.msra.mxu0 0
    %2050 = vmatprep.subr.bf16.mxu0 0
    %2051 = vmatpush1.bf16.msra.mxu0 0
    %2052 = vmatprep.subr.bf16.mxu0 0
    %2053 = vmatpush1.bf16.msra.mxu0 0
    %2054 = vmatprep.subr.bf16.mxu0 0
    %2055 = vmatpush1.bf16.msra.mxu0 0
    %2056 = vmatprep.subr.bf16.mxu0 0
    %2057 = vmatpush1.bf16.msra.mxu0 0
    %2058 = vmatprep.subr.bf16.mxu0 0
    %2059 = vmatpush1.bf16.msra.mxu0 0
    %2060 = vmatprep.subr.bf16.mxu0 0
    %2061 = vmatpush1.bf16.msra.mxu0 0
    %2062 = vmatprep.subr.bf16.mxu0 0
    %2063 = vmatpush1.bf16.msra.mxu0 0
    %2064 = vmatprep.subr.bf16.mxu0 0
    %2065 = vmatpush1.bf16.msra.mxu0 0
    %2066 = vmatprep.subr.bf16.mxu0 0
    %2067 = vmatpush1.bf16.msra.mxu0 0
    %2068 = vmatprep.subr.bf16.mxu0 0
    %2069 = vmatpush1.bf16.msra.mxu0 0
    %2070 = vmatprep.subr.bf16.mxu0 0
    %2071 = vmatpush1.bf16.msra.mxu0 0
    %2072 = vmatprep.subr.bf16.mxu0 0
    %2073 = vmatpush1.bf16.msra.mxu0 0
    %2074 = vmatprep.mubr.bf16.mxu0 0
    %2075 = vmatmul.mubr.bf16.gmra.mrb[0].mxu0 %v2040
    %v2076 = vpop.f32.mrb[0].mxu0
    %v2077 = vadd.f32 %v2019, %v2076
    %v2078 = vpop.f32.mrb[0].mxu0
    %v2079 = vpop.f32.mrb[0].mxu0
    %v2080 = vpop.f32.mrb[0].mxu0
    %2081 = vdwg.mxu0
    %v2082 = vld [vmem:[%s7] sm:$0x1]
    %v2084 = vlaneseq
    %v2085 = vshrl.u32 %v2084, 7
    %v2086 = vsub.s32 0, %v2085
    %v2087 = vrot.slane %v2082, %v2086
    %v2089 = vadd.f32 %v2077, %v2087
    %v2090 = vxor.u32 %v2089, 2147483648
    %v2091 = vmul.f32 %v2090, 1.442695
    %v2092 = vpow.pop %v2091
    %v2093 = vadd.f32 %v2092, 1.0
    %v2094 = vrcp.pop %v2093
    %v2095 = vmul.f32 1.0, %v2094
    %v2096 = vtanh.pop %v2089
    %v2097 = vmul.f32 %v2095, %v1944
    %2099 = vrot.lane.b32.xlu0 %v2096, 64
    %v2100 = vpop.permute.xlu0 %2099
    %v2102 = vmul.f32 %v2095, %v2100
    %2104 = vrot.lane.b32.xlu0 %v2102, 32
    %v2105 = vpop.permute.xlu0 %2104
    %v2107 = vadd.f32 %v2097, %v2105
    %v2108 = vtanh.pop %v2107
    %2110 = vrot.lane.b32.xlu0 %v2108, 64
    %v2111 = vpop.permute.xlu0 %2110
    %v2113 = vmul.f32 %v2095, %v2111
    %2115 = vrot.lane.b32.xlu0 %v2113, 32
    %v2116 = vpop.permute.xlu0 %2115
    %2118 = vst.msk [vmem:[#allocation3 + $0x38] sm:$0xff] %vm195, %v2116
    %v2119 = vld [vmem:[#allocation3] sm:$0xff]
    %v2120 = vld [vmem:[#allocation3 + $0x8] sm:$0xff]
    %v2121 = vld [vmem:[#allocation3 + $0x10] sm:$0xff]
    %v2122 = vld [vmem:[#allocation3 + $0x18] sm:$0xff]
    %v2123 = vld [vmem:[#allocation3 + $0x20] sm:$0xff]
    %v2124 = vld [vmem:[#allocation3 + $0x28] sm:$0xff]
    %v2125 = vld [vmem:[#allocation3 + $0x30] sm:$0xff]
    %v2126 = vld [vmem:[#allocation3 + $0x38] sm:$0xff]
    %v2127 = vpack.c.bf16 %v2120, %v2119
    %v2128 = vpack.c.bf16 %v2122, %v2121
    %v2129 = vpack.c.bf16 %v2124, %v2123
    %v2130 = vpack.c.bf16 %v2126, %v2125
    %v2131 = vld [vmem:[%s8] sm:$0xff]
    %v2132 = vld [vmem:[%s8 + $0x8] sm:$0xf]
    %v2133 = vld [vmem:[%s8 + $0xc] sm:$0xff]
    %v2134 = vld [vmem:[%s8 + $0x14] sm:$0xf]
    %v2135 = vld [vmem:[%s8 + $0x18] sm:$0xff]
    %v2136 = vld [vmem:[%s8 + $0x20] sm:$0xf]
    %v2137 = vld [vmem:[%s8 + $0x24] sm:$0xff]
    %v2138 = vld [vmem:[%s8 + $0x2c] sm:$0xf]
    %v2139 = vld [vmem:[%s9] sm:$0x7]
    %v2141 = vlaneseq
    %v2142 = vshrl.u32 %v2141, 7
    %v2143 = vsub.s32 0, %v2142
    %v2144 = vrot.slane %v2139, %v2143
    %v2145 = vlaneseq
    %v2146 = vshrl.u32 %v2145, 7
    %v2147 = vsub.s32 1, %v2146
    %v2148 = vrot.slane %v2139, %v2147
    %v2149 = vlaneseq
    %v2150 = vshrl.u32 %v2149, 7
    %v2151 = vsub.s32 2, %v2150
    %v2152 = vrot.slane %v2139, %v2151
    %v2164 = vunpack.c.l.b16 %v2131
    %v2165 = vunpack.c.h.b16 %v2131
    %v2166 = vunpack.c.l.b16 %v2132
    %v2167 = vunpack.c.l.b16 %v2133
    %v2168 = vunpack.c.h.b16 %v2133
    %v2169 = vunpack.c.l.b16 %v2134
    %v2170 = vunpack.c.l.b16 %v2135
    %v2171 = vunpack.c.h.b16 %v2135
    %v2172 = vunpack.c.l.b16 %v2136
    %v2173 = vunpack.c.l.b16 %v2137
    %v2174 = vunpack.c.h.b16 %v2137
    %v2175 = vunpack.c.l.b16 %v2138
    %v2176 = vpack.c.b16 %v2167, %v2164
    %v2177 = vpack.c.b16 %v2168, %v2165
    %v2178 = vpack.c.b16 %v2169, %v2166
    %v2179 = vpack.c.b16 %v2173, %v2170
    %v2180 = vpack.c.b16 %v2174, %v2171
    %v2181 = vpack.c.b16 %v2175, %v2172
    %v2189 = vsel %vm195, %v2127, 0
    %v2192 = vsel %vm195, %v2128, 0
    %v2195 = vsel %vm195, %v2129, 0
    %v2198 = vsel %vm195, %v2130, 0
    %2200 = vmatprep.subr.bf16.mxu0 %v2177
    %2201 = vmatpush1.bf16.msra.mxu0 %v2176
    %2202 = vmatprep.subr.bf16.mxu0 %v2180
    %2203 = vmatpush1.bf16.msra.mxu0 %v2179
    %2204 = vmatprep.subr.bf16.mxu0 0
    %2205 = vmatpush1.bf16.msra.mxu0 0
    %2206 = vmatprep.subr.bf16.mxu0 0
    %2207 = vmatpush1.bf16.msra.mxu0 0
    %2208 = vmatprep.subr.bf16.mxu0 0
    %2209 = vmatpush1.bf16.msra.mxu0 0
    %2210 = vmatprep.subr.bf16.mxu0 0
    %2211 = vmatpush1.bf16.msra.mxu0 0
    %2212 = vmatprep.subr.bf16.mxu0 0
    %2213 = vmatpush1.bf16.msra.mxu0 0
    %2214 = vmatprep.subr.bf16.mxu0 0
    %2215 = vmatpush1.bf16.msra.mxu0 0
    %2216 = vmatprep.subr.bf16.mxu0 0
    %2217 = vmatpush1.bf16.msra.mxu0 0
    %2218 = vmatprep.subr.bf16.mxu0 0
    %2219 = vmatpush1.bf16.msra.mxu0 0
    %2220 = vmatprep.subr.bf16.mxu0 0
    %2221 = vmatpush1.bf16.msra.mxu0 0
    %2222 = vmatprep.subr.bf16.mxu0 0
    %2223 = vmatpush1.bf16.msra.mxu0 0
    %2224 = vmatprep.subr.bf16.mxu0 0
    %2225 = vmatpush1.bf16.msra.mxu0 0
    %2226 = vmatprep.subr.bf16.mxu0 0
    %2227 = vmatpush1.bf16.msra.mxu0 0
    %2228 = vmatprep.subr.bf16.mxu0 0
    %2229 = vmatpush1.bf16.msra.mxu0 0
    %2230 = vmatprep.subr.bf16.mxu0 0
    %2231 = vmatpush1.bf16.msra.mxu0 0
    %2232 = vmatprep.mubr.bf16.mxu0 0
    %2233 = vmatmul.mubr.bf16.gmra.mrb[0].mxu0 %v2189
    %v2234 = vpop.f32.mrb[0].mxu0
    %v2235 = vadd.f32 %v2144, %v2234
    %v2236 = vpop.f32.mrb[0].mxu0
    %v2237 = vadd.f32 %v2148, %v2236
    %v2238 = vpop.f32.mrb[0].mxu0
    %v2239 = vadd.f32 %v2144, %v2238
    %v2240 = vpop.f32.mrb[0].mxu0
    %v2241 = vadd.f32 %v2148, %v2240
    %2242 = vmatprep.mubr.bf16.mxu0 0
    %2243 = vmatmul.mubr.bf16.gmra.mrb[0].mxu0 %v2192
    %v2244 = vpop.f32.mrb[0].mxu0
    %v2245 = vadd.f32 %v2144, %v2244
    %v2246 = vpop.f32.mrb[0].mxu0
    %v2247 = vadd.f32 %v2148, %v2246
    %v2248 = vpop.f32.mrb[0].mxu0
    %v2249 = vadd.f32 %v2144, %v2248
    %v2250 = vpop.f32.mrb[0].mxu0
    %v2251 = vadd.f32 %v2148, %v2250
    %2252 = vmatprep.mubr.bf16.mxu0 0
    %2253 = vmatmul.mubr.bf16.gmra.mrb[0].mxu0 %v2195
    %v2254 = vpop.f32.mrb[0].mxu0
    %v2255 = vadd.f32 %v2144, %v2254
    %v2256 = vpop.f32.mrb[0].mxu0
    %v2257 = vadd.f32 %v2148, %v2256
    %v2258 = vpop.f32.mrb[0].mxu0
    %v2259 = vadd.f32 %v2144, %v2258
    %v2260 = vpop.f32.mrb[0].mxu0
    %v2261 = vadd.f32 %v2148, %v2260
    %2262 = vmatprep.mubr.bf16.mxu0 0
    %2263 = vmatmul.mubr.bf16.gmra.mrb[0].mxu0 %v2198
    %v2264 = vpop.f32.mrb[0].mxu0
    %v2265 = vadd.f32 %v2144, %v2264
    %v2266 = vpop.f32.mrb[0].mxu0
    %v2267 = vadd.f32 %v2148, %v2266
    %v2268 = vpop.f32.mrb[0].mxu0
    %v2269 = vadd.f32 %v2144, %v2268
    %v2270 = vpop.f32.mrb[0].mxu0
    %v2271 = vadd.f32 %v2148, %v2270
    %2272 = vdwg.mxu0
    %2273 = vmatprep.subr.bf16.mxu0 0
    %2274 = vmatpush1.bf16.msra.mxu0 %v2178
    %2275 = vmatprep.subr.bf16.mxu0 0
    %2276 = vmatpush1.bf16.msra.mxu0 %v2181
    %2277 = vmatprep.subr.bf16.mxu0 0
    %2278 = vmatpush1.bf16.msra.mxu0 0
    %2279 = vmatprep.subr.bf16.mxu0 0
    %2280 = vmatpush1.bf16.msra.mxu0 0
    %2281 = vmatprep.subr.bf16.mxu0 0
    %2282 = vmatpush1.bf16.msra.mxu0 0
    %2283 = vmatprep.subr.bf16.mxu0 0
    %2284 = vmatpush1.bf16.msra.mxu0 0
    %2285 = vmatprep.subr.bf16.mxu0 0
    %2286 = vmatpush1.bf16.msra.mxu0 0
    %2287 = vmatprep.subr.bf16.mxu0 0
    %2288 = vmatpush1.bf16.msra.mxu0 0
    %2289 = vmatprep.subr.bf16.mxu0 0
    %2290 = vmatpush1.bf16.msra.mxu0 0
    %2291 = vmatprep.subr.bf16.mxu0 0
    %2292 = vmatpush1.bf16.msra.mxu0 0
    %2293 = vmatprep.subr.bf16.mxu0 0
    %2294 = vmatpush1.bf16.msra.mxu0 0
    %2295 = vmatprep.subr.bf16.mxu0 0
    %2296 = vmatpush1.bf16.msra.mxu0 0
    %2297 = vmatprep.subr.bf16.mxu0 0
    %2298 = vmatpush1.bf16.msra.mxu0 0
    %2299 = vmatprep.subr.bf16.mxu0 0
    %2300 = vmatpush1.bf16.msra.mxu0 0
    %2301 = vmatprep.subr.bf16.mxu0 0
    %2302 = vmatpush1.bf16.msra.mxu0 0
    %2303 = vmatprep.subr.bf16.mxu0 0
    %2304 = vmatpush1.bf16.msra.mxu0 0
    %2305 = vmatprep.mubr.bf16.mxu0 0
    %2306 = vmatmul.mubr.bf16.gmra.mrb[0].mxu0 %v2189
    %v2307 = vpop.f32.mrb[0].mxu0
    %v2308 = vadd.f32 %v2152, %v2307
    %v2309 = vpop.f32.mrb[0].mxu0
    %v2310 = vpop.f32.mrb[0].mxu0
    %v2311 = vadd.f32 %v2152, %v2310
    %v2312 = vpop.f32.mrb[0].mxu0
    %2313 = vmatprep.mubr.bf16.mxu0 0
    %2314 = vmatmul.mubr.bf16.gmra.mrb[0].mxu0 %v2192
    %v2315 = vpop.f32.mrb[0].mxu0
    %v2316 = vadd.f32 %v2152, %v2315
    %v2317 = vpop.f32.mrb[0].mxu0
    %v2318 = vpop.f32.mrb[0].mxu0
    %v2319 = vadd.f32 %v2152, %v2318
    %v2320 = vpop.f32.mrb[0].mxu0
    %2321 = vmatprep.mubr.bf16.mxu0 0
    %2322 = vmatmul.mubr.bf16.gmra.mrb[0].mxu0 %v2195
    %v2323 = vpop.f32.mrb[0].mxu0
    %v2324 = vadd.f32 %v2152, %v2323
    %v2325 = vpop.f32.mrb[0].mxu0
    %v2326 = vpop.f32.mrb[0].mxu0
    %v2327 = vadd.f32 %v2152, %v2326
    %v2328 = vpop.f32.mrb[0].mxu0
    %2329 = vmatprep.mubr.bf16.mxu0 0
    %2330 = vmatmul.mubr.bf16.gmra.mrb[0].mxu0 %v2198
    %v2331 = vpop.f32.mrb[0].mxu0
    %v2332 = vadd.f32 %v2152, %v2331
    %v2333 = vpop.f32.mrb[0].mxu0
    %v2334 = vpop.f32.mrb[0].mxu0
    %v2335 = vadd.f32 %v2152, %v2334
    %v2336 = vpop.f32.mrb[0].mxu0
    %2337 = vdwg.mxu0
    %v2338 = vtanh.pop %v2235
    %v2339 = vtanh.pop %v2239
    %v2340 = vtanh.pop %v2245
    %v2341 = vtanh.pop %v2249
    %v2342 = vtanh.pop %v2255
    %v2343 = vtanh.pop %v2259
    %v2344 = vtanh.pop %v2265
    %v2345 = vtanh.pop %v2269
    %v2346 = vmax.f32 %v2237, 0.0
    %v2347 = vmax.f32 %v2241, 0.0
    %v2348 = vmax.f32 %v2247, 0.0
    %v2349 = vmax.f32 %v2251, 0.0
    %v2350 = vmax.f32 %v2257, 0.0
    %v2351 = vmax.f32 %v2261, 0.0
    %v2352 = vmax.f32 %v2267, 0.0
    %v2353 = vmax.f32 %v2271, 0.0
    %v2354 = vand.u32 2147483647, %v2237
    %v2355 = vand.u32 2147483647, %v2241
    %v2356 = vand.u32 2147483647, %v2247
    %v2357 = vand.u32 2147483647, %v2251
    %v2358 = vand.u32 2147483647, %v2257
    %v2359 = vand.u32 2147483647, %v2261
    %v2360 = vand.u32 2147483647, %v2267
    %v2361 = vand.u32 2147483647, %v2271
    %v2362 = vsub.f32 0.0, %v2354
    %v2363 = vsub.f32 0.0, %v2355
    %v2364 = vsub.f32 0.0, %v2356
    %v2365 = vsub.f32 0.0, %v2357
    %v2366 = vsub.f32 0.0, %v2358
    %v2367 = vsub.f32 0.0, %v2359
    %v2368 = vsub.f32 0.0, %v2360
    %v2369 = vsub.f32 0.0, %v2361
    %v2370 = vmul.f32 %v2362, 1.442695
    %v2371 = vpow.pop %v2370
    %v2372 = vmul.f32 %v2363, 1.442695
    %v2373 = vpow.pop %v2372
    %v2374 = vmul.f32 %v2364, 1.442695
    %v2375 = vpow.pop %v2374
    %v2376 = vmul.f32 %v2365, 1.442695
    %v2377 = vpow.pop %v2376
    %v2378 = vmul.f32 %v2366, 1.442695
    %v2379 = vpow.pop %v2378
    %v2380 = vmul.f32 %v2367, 1.442695
    %v2381 = vpow.pop %v2380
    %v2382 = vmul.f32 %v2368, 1.442695
    %v2383 = vpow.pop %v2382
    %v2384 = vmul.f32 %v2369, 1.442695
    %v2385 = vpow.pop %v2384
    %v2386 = vadd.f32 %v2371, 1.0
    %v2387 = vadd.f32 %v2373, 1.0
    %v2388 = vadd.f32 %v2375, 1.0
    %v2389 = vadd.f32 %v2377, 1.0
    %v2390 = vadd.f32 %v2379, 1.0
    %v2391 = vadd.f32 %v2381, 1.0
    %v2392 = vadd.f32 %v2383, 1.0
    %v2393 = vadd.f32 %v2385, 1.0
    %v2394 = vlog2.pop %v2386
    %v2395 = vmul.f32 %v2394, 0.6931472
    %v2396 = vlog2.pop %v2387
    %v2397 = vmul.f32 %v2396, 0.6931472
    %v2398 = vlog2.pop %v2388
    %v2399 = vmul.f32 %v2398, 0.6931472
    %v2400 = vlog2.pop %v2389
    %v2401 = vmul.f32 %v2400, 0.6931472
    %v2402 = vlog2.pop %v2390
    %v2403 = vmul.f32 %v2402, 0.6931472
    %v2404 = vlog2.pop %v2391
    %v2405 = vmul.f32 %v2404, 0.6931472
    %v2406 = vlog2.pop %v2392
    %v2407 = vmul.f32 %v2406, 0.6931472
    %v2408 = vlog2.pop %v2393
    %v2409 = vmul.f32 %v2408, 0.6931472
    %v2410 = vadd.f32 %v2346, %v2395
    %v2411 = vadd.f32 %v2347, %v2397
    %v2412 = vadd.f32 %v2348, %v2399
    %v2413 = vadd.f32 %v2349, %v2401
    %v2414 = vadd.f32 %v2350, %v2403
    %v2415 = vadd.f32 %v2351, %v2405
    %v2416 = vadd.f32 %v2352, %v2407
    %v2417 = vadd.f32 %v2353, %v2409
    %v2418 = vadd.f32 %v2410, 0.0001
    %v2419 = vadd.f32 %v2411, 0.0001
    %v2420 = vadd.f32 %v2412, 0.0001
    %v2421 = vadd.f32 %v2413, 0.0001
    %v2422 = vadd.f32 %v2414, 0.0001
    %v2423 = vadd.f32 %v2415, 0.0001
    %v2424 = vadd.f32 %v2416, 0.0001
    %v2425 = vadd.f32 %v2417, 0.0001
    %vm2426 = vcmask 39936
    %v2427 = vsel %vm2426, %v2308, -inf
    %2428 = vmax.xlane.f32.xlu0 %v2427
    %v2429 = vpop.xlane.xlu0 %2428
    %v2430 = vsel %vm2426, %v2311, -inf
    %2431 = vmax.xlane.f32.xlu0 %v2430
    %v2432 = vpop.xlane.xlu0 %2431
    %v2433 = vsel %vm2426, %v2316, -inf
    %2434 = vmax.xlane.f32.xlu0 %v2433
    %v2435 = vpop.xlane.xlu0 %2434
    %v2436 = vsel %vm2426, %v2319, -inf
    %2437 = vmax.xlane.f32.xlu0 %v2436
    %v2438 = vpop.xlane.xlu0 %2437
    %v2439 = vsel %vm2426, %v2324, -inf
    %2440 = vmax.xlane.f32.xlu0 %v2439
    %v2441 = vpop.xlane.xlu0 %2440
    %v2442 = vsel %vm2426, %v2327, -inf
    %2443 = vmax.xlane.f32.xlu0 %v2442
    %v2444 = vpop.xlane.xlu0 %2443
    %v2445 = vsel %vm2426, %v2332, -inf
    %2446 = vmax.xlane.f32.xlu0 %v2445
    %v2447 = vpop.xlane.xlu0 %2446
    %v2448 = vsel %vm2426, %v2335, -inf
    %2449 = vmax.xlane.f32.xlu0 %v2448
    %v2450 = vpop.xlane.xlu0 %2449
    %v2451 = vsub.f32 %v2308, %v2429
    %v2452 = vsub.f32 %v2311, %v2432
    %v2453 = vsub.f32 %v2316, %v2435
    %v2454 = vsub.f32 %v2319, %v2438
    %v2455 = vsub.f32 %v2324, %v2441
    %v2456 = vsub.f32 %v2327, %v2444
    %v2457 = vsub.f32 %v2332, %v2447
    %v2458 = vsub.f32 %v2335, %v2450
    %v2459 = vmul.f32 %v2451, 1.442695
    %v2460 = vpow.pop %v2459
    %v2461 = vmul.f32 %v2452, 1.442695
    %v2462 = vpow.pop %v2461
    %v2463 = vmul.f32 %v2453, 1.442695
    %v2464 = vpow.pop %v2463
    %v2465 = vmul.f32 %v2454, 1.442695
    %v2466 = vpow.pop %v2465
    %v2467 = vmul.f32 %v2455, 1.442695
    %v2468 = vpow.pop %v2467
    %v2469 = vmul.f32 %v2456, 1.442695
    %v2470 = vpow.pop %v2469
    %v2471 = vmul.f32 %v2457, 1.442695
    %v2472 = vpow.pop %v2471
    %v2473 = vmul.f32 %v2458, 1.442695
    %v2474 = vpow.pop %v2473
    %v2475 = vsel %vm2426, %v2460, 0.0
    %2476 = vadd.xlane.f32.xlu0 %v2475
    %v2477 = vpop.xlane.xlu0 %2476
    %v2478 = vsel %vm2426, %v2462, 0.0
    %2479 = vadd.xlane.f32.xlu0 %v2478
    %v2480 = vpop.xlane.xlu0 %2479
    %v2481 = vsel %vm2426, %v2464, 0.0
    %2482 = vadd.xlane.f32.xlu0 %v2481
    %v2483 = vpop.xlane.xlu0 %2482
    %v2484 = vsel %vm2426, %v2466, 0.0
    %2485 = vadd.xlane.f32.xlu0 %v2484
    %v2486 = vpop.xlane.xlu0 %2485
    %v2487 = vsel %vm2426, %v2468, 0.0
    %2488 = vadd.xlane.f32.xlu0 %v2487
    %v2489 = vpop.xlane.xlu0 %2488
    %v2490 = vsel %vm2426, %v2470, 0.0
    %2491 = vadd.xlane.f32.xlu0 %v2490
    %v2492 = vpop.xlane.xlu0 %2491
    %v2493 = vsel %vm2426, %v2472, 0.0
    %2494 = vadd.xlane.f32.xlu0 %v2493
    %v2495 = vpop.xlane.xlu0 %2494
    %v2496 = vsel %vm2426, %v2474, 0.0
    %2497 = vadd.xlane.f32.xlu0 %v2496
    %v2498 = vpop.xlane.xlu0 %2497
    %v2499 = vlog2.pop %v2477
    %v2500 = vmul.f32 %v2499, 0.6931472
    %v2501 = vlog2.pop %v2480
    %v2502 = vmul.f32 %v2501, 0.6931472
    %v2503 = vlog2.pop %v2483
    %v2504 = vmul.f32 %v2503, 0.6931472
    %v2505 = vlog2.pop %v2486
    %v2506 = vmul.f32 %v2505, 0.6931472
    %v2507 = vlog2.pop %v2489
    %v2508 = vmul.f32 %v2507, 0.6931472
    %v2509 = vlog2.pop %v2492
    %v2510 = vmul.f32 %v2509, 0.6931472
    %v2511 = vlog2.pop %v2495
    %v2512 = vmul.f32 %v2511, 0.6931472
    %v2513 = vlog2.pop %v2498
    %v2514 = vmul.f32 %v2513, 0.6931472
    %v2515 = vadd.f32 %v2429, %v2500
    %v2516 = vadd.f32 %v2432, %v2502
    %v2517 = vadd.f32 %v2435, %v2504
    %v2518 = vadd.f32 %v2438, %v2506
    %v2519 = vadd.f32 %v2441, %v2508
    %v2520 = vadd.f32 %v2444, %v2510
    %v2521 = vadd.f32 %v2447, %v2512
    %v2522 = vadd.f32 %v2450, %v2514
    %v2523 = vsub.f32 %v2308, %v2515
    %v2524 = vsub.f32 %v2311, %v2516
    %v2525 = vsub.f32 %v2316, %v2517
    %v2526 = vsub.f32 %v2319, %v2518
    %v2527 = vsub.f32 %v2324, %v2519
    %v2528 = vsub.f32 %v2327, %v2520
    %v2529 = vsub.f32 %v2332, %v2521
    %v2530 = vsub.f32 %v2335, %v2522
    %v2531 = vld [vmem:[%s1] sm:$0xff]
    %v2532 = vld [vmem:[%s1 + $0x8] sm:$0xff]
    %v2533 = vld [vmem:[%s1 + $0x10] sm:$0xff]
    %v2534 = vld [vmem:[%s1 + $0x18] sm:$0xff]
    %v2535 = vld [vmem:[%s1 + $0x20] sm:$0xff]
    %v2536 = vld [vmem:[%s1 + $0x28] sm:$0xff]
    %v2537 = vld [vmem:[%s1 + $0x30] sm:$0xff]
    %v2538 = vld [vmem:[%s1 + $0x38] sm:$0xff]
    %v2539 = vld [vmem:[%s11] sm:$0x7f]
    %vm2540 = vcmask 56320
    %v2542 = vsel %vm2540, %v2531, 0
    %v2545 = vsel %vm2540, %v2532, 0
    %v2548 = vsel %vm2540, %v2533, 0
    %v2551 = vsel %vm2540, %v2534, 0
    %v2554 = vsel %vm2540, %v2535, 0
    %v2557 = vsel %vm2540, %v2536, 0
    %v2560 = vsel %vm2540, %v2537, 0
    %v2563 = vsel %vm2540, %v2538, 0
    %v2566 = vsel %vm99, %v2539, 0
    %2568 = vmatprep.subr.mxu0 0.0
    %2569 = vmatpush1.msra.mxu0 %v2566
    %2570 = vmatprep.subr.mxu0 0.0
    %2571 = vmatpush1.msra.mxu0 0.0
    %2572 = vmatprep.subr.mxu0 0.0
    %2573 = vmatpush1.msra.mxu0 0.0
    %2574 = vmatprep.subr.mxu0 0.0
    %2575 = vmatpush1.msra.mxu0 0.0
    %2576 = vmatprep.subr.mxu0 0.0
    %2577 = vmatpush1.msra.mxu0 0.0
    %2578 = vmatprep.subr.mxu0 0.0
    %2579 = vmatpush1.msra.mxu0 0.0
    %2580 = vmatprep.subr.mxu0 0.0
    %2581 = vmatpush1.msra.mxu0 0.0
    %2582 = vmatprep.subr.mxu0 0.0
    %2583 = vmatpush1.msra.mxu0 0.0
    %2584 = vmatprep.subr.mxu0 0.0
    %2585 = vmatpush1.msra.mxu0 0.0
    %2586 = vmatprep.subr.mxu0 0.0
    %2587 = vmatpush1.msra.mxu0 0.0
    %2588 = vmatprep.subr.mxu0 0.0
    %2589 = vmatpush1.msra.mxu0 0.0
    %2590 = vmatprep.subr.mxu0 0.0
    %2591 = vmatpush1.msra.mxu0 0.0
    %2592 = vmatprep.subr.mxu0 0.0
    %2593 = vmatpush1.msra.mxu0 0.0
    %2594 = vmatprep.subr.mxu0 0.0
    %2595 = vmatpush1.msra.mxu0 0.0
    %2596 = vmatprep.subr.mxu0 0.0
    %2597 = vmatpush1.msra.mxu0 0.0
    %2598 = vmatprep.subr.mxu0 0.0
    %2599 = vmatpush1.msra.mxu0 0.0
    %2600 = vmatprep.subr.mxu0 0.0
    %2601 = vmatpush1.msra.mxu0 0.0
    %2602 = vmatprep.subr.mxu0 0.0
    %2603 = vmatpush1.msra.mxu0 0.0
    %2604 = vmatprep.subr.mxu0 0.0
    %2605 = vmatpush1.msra.mxu0 0.0
    %2606 = vmatprep.subr.mxu0 0.0
    %2607 = vmatpush1.msra.mxu0 0.0
    %2608 = vmatprep.subr.mxu0 0.0
    %2609 = vmatpush1.msra.mxu0 0.0
    %2610 = vmatprep.subr.mxu0 0.0
    %2611 = vmatpush1.msra.mxu0 0.0
    %2612 = vmatprep.subr.mxu0 0.0
    %2613 = vmatpush1.msra.mxu0 0.0
    %2614 = vmatprep.subr.mxu0 0.0
    %2615 = vmatpush1.msra.mxu0 0.0
    %2616 = vmatprep.subr.mxu0 0.0
    %2617 = vmatpush1.msra.mxu0 0.0
    %2618 = vmatprep.subr.mxu0 0.0
    %2619 = vmatpush1.msra.mxu0 0.0
    %2620 = vmatprep.subr.mxu0 0.0
    %2621 = vmatpush1.msra.mxu0 0.0
    %2622 = vmatprep.subr.mxu0 0.0
    %2623 = vmatpush1.msra.mxu0 0.0
    %2624 = vmatprep.subr.mxu0 0.0
    %2625 = vmatpush1.msra.mxu0 0.0
    %2626 = vmatprep.subr.mxu0 0.0
    %2627 = vmatpush1.msra.mxu0 0.0
    %2628 = vmatprep.subr.mxu0 0.0
    %2629 = vmatpush1.msra.mxu0 0.0
    %2630 = vmatprep.subr.mxu0 0.0
    %2631 = vmatpush1.msra.mxu0 0.0
    %2632 = vmatprep.mubr.f32.mxu0 0.0
    %2633 = vmatmul.mubr.f32.gmra.mrb[0].mxu0 %v2542
    %v2634 = vpop.f32.mrb[0].mxu0
    %v2635 = vadd.f32 0.0, %v2634
    %v2636 = vpop.f32.mrb[0].mxu0
    %2637 = vmatprep.mubr.f32.mxu0 0.0
    %2638 = vmatmul.mubr.f32.gmra.mrb[0].mxu0 %v2545
    %v2639 = vpop.f32.mrb[0].mxu0
    %v2640 = vadd.f32 0.0, %v2639
    %v2641 = vpop.f32.mrb[0].mxu0
    %2642 = vmatprep.mubr.f32.mxu0 0.0
    %2643 = vmatmul.mubr.f32.gmra.mrb[0].mxu0 %v2548
    %v2644 = vpop.f32.mrb[0].mxu0
    %v2645 = vadd.f32 0.0, %v2644
    %v2646 = vpop.f32.mrb[0].mxu0
    %2647 = vmatprep.mubr.f32.mxu0 0.0
    %2648 = vmatmul.mubr.f32.gmra.mrb[0].mxu0 %v2551
    %v2649 = vpop.f32.mrb[0].mxu0
    %v2650 = vadd.f32 0.0, %v2649
    %v2651 = vpop.f32.mrb[0].mxu0
    %2652 = vmatprep.mubr.f32.mxu0 0.0
    %2653 = vmatmul.mubr.f32.gmra.mrb[0].mxu0 %v2554
    %v2654 = vpop.f32.mrb[0].mxu0
    %v2655 = vadd.f32 0.0, %v2654
    %v2656 = vpop.f32.mrb[0].mxu0
    %2657 = vmatprep.mubr.f32.mxu0 0.0
    %2658 = vmatmul.mubr.f32.gmra.mrb[0].mxu0 %v2557
    %v2659 = vpop.f32.mrb[0].mxu0
    %v2660 = vadd.f32 0.0, %v2659
    %v2661 = vpop.f32.mrb[0].mxu0
    %2662 = vmatprep.mubr.f32.mxu0 0.0
    %2663 = vmatmul.mubr.f32.gmra.mrb[0].mxu0 %v2560
    %v2664 = vpop.f32.mrb[0].mxu0
    %v2665 = vadd.f32 0.0, %v2664
    %v2666 = vpop.f32.mrb[0].mxu0
    %2667 = vmatprep.mubr.f32.mxu0 0.0
    %2668 = vmatmul.mubr.f32.gmra.mrb[0].mxu0 %v2563
    %v2669 = vpop.f32.mrb[0].mxu0
    %v2670 = vadd.f32 0.0, %v2669
    %v2671 = vpop.f32.mrb[0].mxu0
    %2672 = vdwg.mxu0
    %v2673 = vsub.f32 %v2635, %v2338
    %v2674 = vsub.f32 %v2640, %v2339
    %v2675 = vsub.f32 %v2645, %v2340
    %v2676 = vsub.f32 %v2650, %v2341
    %v2677 = vsub.f32 %v2655, %v2342
    %v2678 = vsub.f32 %v2660, %v2343
    %v2679 = vsub.f32 %v2665, %v2344
    %v2680 = vsub.f32 %v2670, %v2345
    %v2681 = vrcp.pop %v2418
    %v2682 = vmul.f32 %v2673, %v2681
    %v2683 = vrcp.pop %v2419
    %v2684 = vmul.f32 %v2674, %v2683
    %v2685 = vrcp.pop %v2420
    %v2686 = vmul.f32 %v2675, %v2685
    %v2687 = vrcp.pop %v2421
    %v2688 = vmul.f32 %v2676, %v2687
    %v2689 = vrcp.pop %v2422
    %v2690 = vmul.f32 %v2677, %v2689
    %v2691 = vrcp.pop %v2423
    %v2692 = vmul.f32 %v2678, %v2691
    %v2693 = vrcp.pop %v2424
    %v2694 = vmul.f32 %v2679, %v2693
    %v2695 = vrcp.pop %v2425
    %v2696 = vmul.f32 %v2680, %v2695
    %v2697 = vmul.f32 %v2682, -0.5
    %v2698 = vmul.f32 %v2684, -0.5
    %v2699 = vmul.f32 %v2686, -0.5
    %v2700 = vmul.f32 %v2688, -0.5
    %v2701 = vmul.f32 %v2690, -0.5
    %v2702 = vmul.f32 %v2692, -0.5
    %v2703 = vmul.f32 %v2694, -0.5
    %v2704 = vmul.f32 %v2696, -0.5
    %v2705 = vmul.f32 %v2697, %v2682
    %v2706 = vmul.f32 %v2698, %v2684
    %v2707 = vmul.f32 %v2699, %v2686
    %v2708 = vmul.f32 %v2700, %v2688
    %v2709 = vmul.f32 %v2701, %v2690
    %v2710 = vmul.f32 %v2702, %v2692
    %v2711 = vmul.f32 %v2703, %v2694
    %v2712 = vmul.f32 %v2704, %v2696
    %v2713 = vlog2.pop %v2418
    %v2714 = vmul.f32 %v2713, 0.6931472
    %v2715 = vlog2.pop %v2419
    %v2716 = vmul.f32 %v2715, 0.6931472
    %v2717 = vlog2.pop %v2420
    %v2718 = vmul.f32 %v2717, 0.6931472
    %v2719 = vlog2.pop %v2421
    %v2720 = vmul.f32 %v2719, 0.6931472
    %v2721 = vlog2.pop %v2422
    %v2722 = vmul.f32 %v2721, 0.6931472
    %v2723 = vlog2.pop %v2423
    %v2724 = vmul.f32 %v2723, 0.6931472
    %v2725 = vlog2.pop %v2424
    %v2726 = vmul.f32 %v2725, 0.6931472
    %v2727 = vlog2.pop %v2425
    %v2728 = vmul.f32 %v2727, 0.6931472
    %v2729 = vsub.f32 %v2705, %v2714
    %v2730 = vsub.f32 %v2706, %v2716
    %v2731 = vsub.f32 %v2707, %v2718
    %v2732 = vsub.f32 %v2708, %v2720
    %v2733 = vsub.f32 %v2709, %v2722
    %v2734 = vsub.f32 %v2710, %v2724
    %v2735 = vsub.f32 %v2711, %v2726
    %v2736 = vsub.f32 %v2712, %v2728
    %v2737 = vld [vmem:[%s10] sm:$0xff]
    %v2738 = vld [vmem:[%s10 + $0x8] sm:$0xff]
    %v2739 = vld [vmem:[%s10 + $0x10] sm:$0xff]
    %v2740 = vld [vmem:[%s10 + $0x18] sm:$0xff]
    %v2741 = vld [vmem:[%s10 + $0x20] sm:$0x7]
    %vm2742 = vcmask 285696
    %v2744 = vsel %vm2742, %v2729, 0
    %v2747 = vsel %vm2742, %v2730, 0
    %v2750 = vsel %vm2742, %v2731, 0
    %v2753 = vsel %vm2742, %v2732, 0
    %v2756 = vsel %vm2742, %v2733, 0
    %v2759 = vsel %vm2742, %v2734, 0
    %v2762 = vsel %vm2742, %v2735, 0
    %v2765 = vsel %vm2742, %v2736, 0
    %vm2767 = vcmask 1042432
    %v2769 = vsel %vm2767, %v2741, 0
    %2771 = vmatprep.subr.mxu0 0.0
    %2772 = vmatpush1.msra.mxu0 %v2737
    %2773 = vmatprep.subr.mxu0 0.0
    %2774 = vmatpush1.msra.mxu0 %v2738
    %2775 = vmatprep.subr.mxu0 0.0
    %2776 = vmatpush1.msra.mxu0 %v2739
    %2777 = vmatprep.subr.mxu0 0.0
    %2778 = vmatpush1.msra.mxu0 %v2740
    %2779 = vmatprep.subr.mxu0 0.0
    %2780 = vmatpush1.msra.mxu0 %v2769
    %2781 = vmatprep.subr.mxu0 0.0
    %2782 = vmatpush1.msra.mxu0 0.0
    %2783 = vmatprep.subr.mxu0 0.0
    %2784 = vmatpush1.msra.mxu0 0.0
    %2785 = vmatprep.subr.mxu0 0.0
    %2786 = vmatpush1.msra.mxu0 0.0
    %2787 = vmatprep.subr.mxu0 0.0
    %2788 = vmatpush1.msra.mxu0 0.0
    %2789 = vmatprep.subr.mxu0 0.0
    %2790 = vmatpush1.msra.mxu0 0.0
    %2791 = vmatprep.subr.mxu0 0.0
    %2792 = vmatpush1.msra.mxu0 0.0
    %2793 = vmatprep.subr.mxu0 0.0
    %2794 = vmatpush1.msra.mxu0 0.0
    %2795 = vmatprep.subr.mxu0 0.0
    %2796 = vmatpush1.msra.mxu0 0.0
    %2797 = vmatprep.subr.mxu0 0.0
    %2798 = vmatpush1.msra.mxu0 0.0
    %2799 = vmatprep.subr.mxu0 0.0
    %2800 = vmatpush1.msra.mxu0 0.0
    %2801 = vmatprep.subr.mxu0 0.0
    %2802 = vmatpush1.msra.mxu0 0.0
    %2803 = vmatprep.subr.mxu0 0.0
    %2804 = vmatpush1.msra.mxu0 0.0
    %2805 = vmatprep.subr.mxu0 0.0
    %2806 = vmatpush1.msra.mxu0 0.0
    %2807 = vmatprep.subr.mxu0 0.0
    %2808 = vmatpush1.msra.mxu0 0.0
    %2809 = vmatprep.subr.mxu0 0.0
    %2810 = vmatpush1.msra.mxu0 0.0
    %2811 = vmatprep.subr.mxu0 0.0
    %2812 = vmatpush1.msra.mxu0 0.0
    %2813 = vmatprep.subr.mxu0 0.0
    %2814 = vmatpush1.msra.mxu0 0.0
    %2815 = vmatprep.subr.mxu0 0.0
    %2816 = vmatpush1.msra.mxu0 0.0
    %2817 = vmatprep.subr.mxu0 0.0
    %2818 = vmatpush1.msra.mxu0 0.0
    %2819 = vmatprep.subr.mxu0 0.0
    %2820 = vmatpush1.msra.mxu0 0.0
    %2821 = vmatprep.subr.mxu0 0.0
    %2822 = vmatpush1.msra.mxu0 0.0
    %2823 = vmatprep.subr.mxu0 0.0
    %2824 = vmatpush1.msra.mxu0 0.0
    %2825 = vmatprep.subr.mxu0 0.0
    %2826 = vmatpush1.msra.mxu0 0.0
    %2827 = vmatprep.subr.mxu0 0.0
    %2828 = vmatpush1.msra.mxu0 0.0
    %2829 = vmatprep.subr.mxu0 0.0
    %2830 = vmatpush1.msra.mxu0 0.0
    %2831 = vmatprep.subr.mxu0 0.0
    %2832 = vmatpush1.msra.mxu0 0.0
    %2833 = vmatprep.subr.mxu0 0.0
    %2834 = vmatpush1.msra.mxu0 0.0
    %2835 = vmatprep.mubr.f32.mxu0 0.0
    %2836 = vmatmul.mubr.f32.gmra.mrb[0].mxu0 %v2744
    %v2837 = vpop.f32.mrb[0].mxu0
    %v2838 = vadd.f32 0.0, %v2837
    %v2839 = vpop.f32.mrb[0].mxu0
    %2840 = vmatprep.mubr.f32.mxu0 0.0
    %2841 = vmatmul.mubr.f32.gmra.mrb[0].mxu0 %v2747
    %v2842 = vpop.f32.mrb[0].mxu0
    %v2843 = vadd.f32 0.0, %v2842
    %v2844 = vpop.f32.mrb[0].mxu0
    %2845 = vmatprep.mubr.f32.mxu0 0.0
    %2846 = vmatmul.mubr.f32.gmra.mrb[0].mxu0 %v2750
    %v2847 = vpop.f32.mrb[0].mxu0
    %v2848 = vadd.f32 0.0, %v2847
    %v2849 = vpop.f32.mrb[0].mxu0
    %2850 = vmatprep.mubr.f32.mxu0 0.0
    %2851 = vmatmul.mubr.f32.gmra.mrb[0].mxu0 %v2753
    %v2852 = vpop.f32.mrb[0].mxu0
    %v2853 = vadd.f32 0.0, %v2852
    %v2854 = vpop.f32.mrb[0].mxu0
    %2855 = vmatprep.mubr.f32.mxu0 0.0
    %2856 = vmatmul.mubr.f32.gmra.mrb[0].mxu0 %v2756
    %v2857 = vpop.f32.mrb[0].mxu0
    %v2858 = vadd.f32 0.0, %v2857
    %v2859 = vpop.f32.mrb[0].mxu0
    %2860 = vmatprep.mubr.f32.mxu0 0.0
    %2861 = vmatmul.mubr.f32.gmra.mrb[0].mxu0 %v2759
    %v2862 = vpop.f32.mrb[0].mxu0
    %v2863 = vadd.f32 0.0, %v2862
    %v2864 = vpop.f32.mrb[0].mxu0
    %2865 = vmatprep.mubr.f32.mxu0 0.0
    %2866 = vmatmul.mubr.f32.gmra.mrb[0].mxu0 %v2762
    %v2867 = vpop.f32.mrb[0].mxu0
    %v2868 = vadd.f32 0.0, %v2867
    %v2869 = vpop.f32.mrb[0].mxu0
    %2870 = vmatprep.mubr.f32.mxu0 0.0
    %2871 = vmatmul.mubr.f32.gmra.mrb[0].mxu0 %v2765
    %v2872 = vpop.f32.mrb[0].mxu0
    %v2873 = vadd.f32 0.0, %v2872
    %v2874 = vpop.f32.mrb[0].mxu0
    %2875 = vdwg.mxu0
    %v2876 = vsub.f32 %v2838, 6.4325695
    %v2877 = vsub.f32 %v2843, 6.4325695
    %v2878 = vsub.f32 %v2848, 6.4325695
    %v2879 = vsub.f32 %v2853, 6.4325695
    %v2880 = vsub.f32 %v2858, 6.4325695
    %v2881 = vsub.f32 %v2863, 6.4325695
    %v2882 = vsub.f32 %v2868, 6.4325695
    %v2883 = vsub.f32 %v2873, 6.4325695
    %v2884 = vadd.f32 %v2876, %v2523
    %v2885 = vadd.f32 %v2877, %v2524
    %v2886 = vadd.f32 %v2878, %v2525
    %v2887 = vadd.f32 %v2879, %v2526
    %v2888 = vadd.f32 %v2880, %v2527
    %v2889 = vadd.f32 %v2881, %v2528
    %v2890 = vadd.f32 %v2882, %v2529
    %v2891 = vadd.f32 %v2883, %v2530
    %v2892 = vsel %vm2426, %v2884, -inf
    %2893 = vmax.xlane.f32.xlu0 %v2892
    %v2894 = vpop.xlane.xlu0 %2893
    %v2895 = vsel %vm2426, %v2885, -inf
    %2896 = vmax.xlane.f32.xlu0 %v2895
    %v2897 = vpop.xlane.xlu0 %2896
    %v2898 = vsel %vm2426, %v2886, -inf
    %2899 = vmax.xlane.f32.xlu0 %v2898
    %v2900 = vpop.xlane.xlu0 %2899
    %v2901 = vsel %vm2426, %v2887, -inf
    %2902 = vmax.xlane.f32.xlu0 %v2901
    %v2903 = vpop.xlane.xlu0 %2902
    %v2904 = vsel %vm2426, %v2888, -inf
    %2905 = vmax.xlane.f32.xlu0 %v2904
    %v2906 = vpop.xlane.xlu0 %2905
    %v2907 = vsel %vm2426, %v2889, -inf
    %2908 = vmax.xlane.f32.xlu0 %v2907
    %v2909 = vpop.xlane.xlu0 %2908
    %v2910 = vsel %vm2426, %v2890, -inf
    %2911 = vmax.xlane.f32.xlu0 %v2910
    %v2912 = vpop.xlane.xlu0 %2911
    %v2913 = vsel %vm2426, %v2891, -inf
    %2914 = vmax.xlane.f32.xlu0 %v2913
    %v2915 = vpop.xlane.xlu0 %2914
    %v2916 = vsub.f32 %v2884, %v2894
    %v2917 = vsub.f32 %v2885, %v2897
    %v2918 = vsub.f32 %v2886, %v2900
    %v2919 = vsub.f32 %v2887, %v2903
    %v2920 = vsub.f32 %v2888, %v2906
    %v2921 = vsub.f32 %v2889, %v2909
    %v2922 = vsub.f32 %v2890, %v2912
    %v2923 = vsub.f32 %v2891, %v2915
    %v2924 = vmul.f32 %v2916, 1.442695
    %v2925 = vpow.pop %v2924
    %v2926 = vmul.f32 %v2917, 1.442695
    %v2927 = vpow.pop %v2926
    %v2928 = vmul.f32 %v2918, 1.442695
    %v2929 = vpow.pop %v2928
    %v2930 = vmul.f32 %v2919, 1.442695
    %v2931 = vpow.pop %v2930
    %v2932 = vmul.f32 %v2920, 1.442695
    %v2933 = vpow.pop %v2932
    %v2934 = vmul.f32 %v2921, 1.442695
    %v2935 = vpow.pop %v2934
    %v2936 = vmul.f32 %v2922, 1.442695
    %v2937 = vpow.pop %v2936
    %v2938 = vmul.f32 %v2923, 1.442695
    %v2939 = vpow.pop %v2938
    %v2940 = vsel %vm2426, %v2925, 0.0
    %2941 = vadd.xlane.f32.xlu0 %v2940
    %v2942 = vpop.xlane.xlu0 %2941
    %v2943 = vsel %vm2426, %v2927, 0.0
    %2944 = vadd.xlane.f32.xlu0 %v2943
    %v2945 = vpop.xlane.xlu0 %2944
    %v2946 = vsel %vm2426, %v2929, 0.0
    %2947 = vadd.xlane.f32.xlu0 %v2946
    %v2948 = vpop.xlane.xlu0 %2947
    %v2949 = vsel %vm2426, %v2931, 0.0
    %2950 = vadd.xlane.f32.xlu0 %v2949
    %v2951 = vpop.xlane.xlu0 %2950
    %v2952 = vsel %vm2426, %v2933, 0.0
    %2953 = vadd.xlane.f32.xlu0 %v2952
    %v2954 = vpop.xlane.xlu0 %2953
    %v2955 = vsel %vm2426, %v2935, 0.0
    %2956 = vadd.xlane.f32.xlu0 %v2955
    %v2957 = vpop.xlane.xlu0 %2956
    %v2958 = vsel %vm2426, %v2937, 0.0
    %2959 = vadd.xlane.f32.xlu0 %v2958
    %v2960 = vpop.xlane.xlu0 %2959
    %v2961 = vsel %vm2426, %v2939, 0.0
    %2962 = vadd.xlane.f32.xlu0 %v2961
    %v2963 = vpop.xlane.xlu0 %2962
    %v2964 = vlog2.pop %v2942
    %v2965 = vmul.f32 %v2964, 0.6931472
    %v2966 = vlog2.pop %v2945
    %v2967 = vmul.f32 %v2966, 0.6931472
    %v2968 = vlog2.pop %v2948
    %v2969 = vmul.f32 %v2968, 0.6931472
    %v2970 = vlog2.pop %v2951
    %v2971 = vmul.f32 %v2970, 0.6931472
    %v2972 = vlog2.pop %v2954
    %v2973 = vmul.f32 %v2972, 0.6931472
    %v2974 = vlog2.pop %v2957
    %v2975 = vmul.f32 %v2974, 0.6931472
    %v2976 = vlog2.pop %v2960
    %v2977 = vmul.f32 %v2976, 0.6931472
    %v2978 = vlog2.pop %v2963
    %v2979 = vmul.f32 %v2978, 0.6931472
    %v2980 = vadd.f32 %v2894, %v2965
    %v2981 = vadd.f32 %v2897, %v2967
    %v2982 = vadd.f32 %v2900, %v2969
    %v2983 = vadd.f32 %v2903, %v2971
    %v2984 = vadd.f32 %v2906, %v2973
    %v2985 = vadd.f32 %v2909, %v2975
    %v2986 = vadd.f32 %v2912, %v2977
    %v2987 = vadd.f32 %v2915, %v2979
    %v2988 = vlaneseq
    %v2989 = vshrl.u32 %v2988, 7
    %v2990 = vadd.s32 %v2989, 8
    %v2991 = vadd.s32 %v2989, 16
    %v2992 = vadd.s32 %v2989, 24
    %v2993 = vadd.s32 %v2989, 32
    %v2994 = vadd.s32 %v2989, 40
    %v2995 = vadd.s32 %v2989, 48
    %v2996 = vadd.s32 %v2989, 56
    %v2997 = vand.u32 %v2989, 7
    %v2998 = vand.u32 %v2990, 7
    %v2999 = vand.u32 %v2991, 7
    %v3000 = vand.u32 %v2992, 7
    %v3001 = vand.u32 %v2993, 7
    %v3002 = vand.u32 %v2994, 7
    %v3003 = vand.u32 %v2995, 7
    %v3004 = vand.u32 %v2996, 7
    %s3005 = smul.u32 0, 8
    %v3006 = vstv %s3005
    %v3007 = vadd.s32 %v2997, %v3006
    %v3008 = vadd.s32 %v2998, %v3006
    %v3009 = vadd.s32 %v2999, %v3006
    %v3010 = vadd.s32 %v3000, %v3006
    %v3011 = vadd.s32 %v3001, %v3006
    %v3012 = vadd.s32 %v3002, %v3006
    %v3013 = vadd.s32 %v3003, %v3006
    %v3014 = vadd.s32 %v3004, %v3006
    %vm3015 = vcmp.lt.s32.totalorder %v3007, 2
    %vm3016 = vcmp.lt.s32.totalorder %v3008, 2
    %vm3017 = vcmp.lt.s32.totalorder %v3009, 2
    %vm3018 = vcmp.lt.s32.totalorder %v3010, 2
    %vm3019 = vcmp.lt.s32.totalorder %v3011, 2
    %vm3020 = vcmp.lt.s32.totalorder %v3012, 2
    %vm3021 = vcmp.lt.s32.totalorder %v3013, 2
    %vm3022 = vcmp.lt.s32.totalorder %v3014, 2
    %v3023 = vsel %vm3015, 1, 0
    %v3024 = vsel %vm3016, 1, 0
    %v3025 = vsel %vm3017, 1, 0
    %v3026 = vsel %vm3018, 1, 0
    %v3027 = vsel %vm3019, 1, 0
    %v3028 = vsel %vm3020, 1, 0
    %v3029 = vsel %vm3021, 1, 0
    %v3030 = vsel %vm3022, 1, 0
    %v3031 = vcvt.s32.f32 %v3023
    %v3032 = vcvt.s32.f32 %v3024
    %v3033 = vcvt.s32.f32 %v3025
    %v3034 = vcvt.s32.f32 %v3026
    %v3035 = vcvt.s32.f32 %v3027
    %v3036 = vcvt.s32.f32 %v3028
    %v3037 = vcvt.s32.f32 %v3029
    %v3038 = vcvt.s32.f32 %v3030
    %v3039 = vmul.f32 %v2980, %v3031
    %v3040 = vmul.f32 %v2981, %v3032
    %v3041 = vmul.f32 %v2982, %v3033
    %v3042 = vmul.f32 %v2983, %v3034
    %v3043 = vmul.f32 %v2984, %v3035
    %v3044 = vmul.f32 %v2985, %v3036
    %v3045 = vmul.f32 %v2986, %v3037
    %v3046 = vmul.f32 %v2987, %v3038
    %v3047 = vadd.f32 %v3039, %v3040
    %v3048 = vadd.f32 %v3047, %v3041
    %v3049 = vadd.f32 %v3048, %v3042
    %v3050 = vadd.f32 %v3049, %v3043
    %v3051 = vadd.f32 %v3050, %v3044
    %v3052 = vadd.f32 %v3051, %v3045
    %v3053 = vadd.f32 %v3052, %v3046
    %v3054 = vrot.slane %v3053, 4
    %v3055 = vadd.f32 %v3053, %v3054
    %v3056 = vrot.slane %v3055, 2
    %v3057 = vadd.f32 %v3055, %v3056
    %v3058 = vrot.slane %v3057, 1
    %v3059 = vadd.f32 %v3057, %v3058
    %3060 = vst [vmem:[#allocation4] sm:$0xff] %v3059
    // Predicated region
    $region50: #{tpu_custom_call.1} parent=1 // pred_check
      _
    $region51: #{tpu_custom_call.1} parent=1 // pred_check_branch
      %3062 = sbr.rel (0) target = $region53
    $region52: #{tpu_custom_call.1} parent=1 // pred_region
      %s3064 = ssub.s32 128, 128
      %3065 = vsyncadd [#allocation5], %s3064
      %s3067 = sshll.u32 [#allocation4], 4
      %s3068 = int_to_ptr.vmem [resolvable:$true] %s3067
      %3070 = dma.vmem_to_hbm [thread:$0]  %s3068, 128, %s12, [#allocation5]
    $region53: #{tpu_custom_call.1} parent=1 // pred_fallthru
      _
    // Predicated region
    $region54: #{tpu_custom_call.1} parent=1 // pred_check
      _
    $region55: #{tpu_custom_call.1} parent=1 // pred_check_branch
      %3072 = sbr.rel (0) target = $region57
    $region56: #{tpu_custom_call.1} parent=1 // pred_region
      %3073 = dma.done [#allocation5], 128
    $region57: #{tpu_custom_call.1} parent=1 // pred_fallthru
      _
    %3074 = vsyncpa [#allocation5], 1

</llo_original>
